<compile_context>
chip_gen: v7x
topology: tpu7x:2x2x1
jax: 0.10.0
libtpu: 0.0.40
codegen_flags: <defaults>
</compile_context>

<pallas_src>
from functools import partial

import jax
import jax.numpy as jnp
from jax.experimental import pallas as pl
from jax.experimental.pallas import tpu as pltpu


def _round_up(x, m):
    return (x + m - 1) // m * m


def _posterior_kernel(x_ref, mask_ref, w1, b1, w2, b2, w3, b3, w4, b4, wf, bfin,
                      out_ref, patch_ref, *, W, NL, Cin_p, hidden):
    # Static lane shifts for the 9 conv taps on the flattened padded image.
    # Output (padded) index p needs input index p + off, off = (dy-1)*(W+2)+(dx-1);
    # with jnp.roll semantics rolled[p] = x[p - shift], so shift = -off (mod NL).
    shifts = [(-((dy - 1) * (W + 2) + (dx - 1))) % NL
              for dy in range(3) for dx in range(3)]

    def conv(act, c, w_ref, b_ref):
        # act: (c, NL) f32. Build the (9*c, NL) bf16 im2col patch with lane
        # rolls (XLU) and do a single MXU matmul with f32 accumulation.
        for t, s in enumerate(shifts):
            shifted = act if s == 0 else pltpu.roll(act, shift=s, axis=1)
            patch_ref[t * c:(t + 1) * c, :] = shifted.astype(patch_ref.dtype)
        return jnp.dot(w_ref[...], patch_ref[0:9 * c, :],
                       preferred_element_type=jnp.float32) + b_ref[...]

    mask = mask_ref[...]          # (1, NL): 1.0 on interior pixels, 0 elsewhere
    x0 = x_ref[0]                 # (Cin_p, NL) f32, zero-padded border/tail

    # conv1 + tanh (mask keeps the padded border at exactly zero)
    h = mask * jnp.tanh(conv(x0, Cin_p, w1, b1))
    # conv2..4 + tanh + residual
    h = mask * jnp.tanh(conv(h, hidden, w2, b2)) + h
    h = mask * jnp.tanh(conv(h, hidden, w3, b3)) + h
    h = mask * jnp.tanh(conv(h, hidden, w4, b4)) + h
    # conv_final -> 2 channels (mean, logvar), lane-dense (2, NL) store
    out_ref[0] = conv(h, hidden, wf, bfin)


def _pack_w(w_hwio, ci_pad):
    """(3,3,Ci,Co) HWIO -> (Co, 9*ci_pad) bf16, tap-major/channel-minor rows."""
    kh, kw, ci, co = w_hwio.shape
    if ci_pad > ci:
        w_hwio = jnp.pad(w_hwio, ((0, 0), (0, 0), (0, ci_pad - ci), (0, 0)))
    return jnp.transpose(w_hwio.reshape(kh * kw * ci_pad, co)).astype(jnp.bfloat16)


def _const_spec(shape):
    return pl.BlockSpec(shape, lambda b: (0,) * len(shape))


def posterior_network_forward(x_nchw, params):
    """x_nchw: (B, Cin, H, W) float32. Returns (mean, logvar), each (B, 1, H, W)."""
    B, Cin, H, W = x_nchw.shape
    hidden = params["w2"].shape[-1]

    Npad = (H + 2) * (W + 2)
    NL = _round_up(Npad, 128)          # lane-dense flattened padded image
    Cin_p = _round_up(Cin, 16)         # 16-aligned rows for bf16 patch stores
    Cmax = max(Cin_p, hidden)

    # Input: NCHW -> zero-pad spatial -> flatten padded spatial onto lanes;
    # pad channels to Cin_p and lanes to NL with zeros (stays channel-major).
    xf = x_nchw.astype(jnp.float32)
    x_pad = jnp.pad(xf, ((0, 0), (0, 0), (1, 1), (1, 1)))       # (B,Cin,H+2,W+2)
    x_in = jnp.pad(x_pad.reshape(B, Cin, Npad),
                   ((0, 0), (0, Cin_p - Cin), (0, NL - Npad)))   # (B,Cin_p,NL)

    # Interior mask over the flattened padded image.
    rr = jnp.arange(H + 2)
    cc = jnp.arange(W + 2)
    inter = (((rr >= 1) & (rr <= H))[:, None] &
             ((cc >= 1) & (cc <= W))[None, :]).astype(jnp.float32)
    mask = jnp.pad(inter.reshape(1, Npad), ((0, 0), (0, NL - Npad)))  # (1, NL)

    # Pack weights for the single-matmul-per-layer im2col form.
    w1t = _pack_w(params["w1"], Cin_p)
    w2t = _pack_w(params["w2"], hidden)
    w3t = _pack_w(params["w3"], hidden)
    w4t = _pack_w(params["w4"], hidden)
    wft = _pack_w(params["wf"], hidden)
    b1 = params["b1"].reshape(-1, 1).astype(jnp.float32)
    b2 = params["b2"].reshape(-1, 1).astype(jnp.float32)
    b3 = params["b3"].reshape(-1, 1).astype(jnp.float32)
    b4 = params["b4"].reshape(-1, 1).astype(jnp.float32)
    bfin = params["bf"].reshape(-1, 1).astype(jnp.float32)

    consts = [mask, w1t, b1, w2t, b2, w3t, b3, w4t, b4, wft, bfin]

    # VMEM footprint at this size: im2col scratch 9*Cmax*NL*2B (~216 KiB) plus
    # small input/weight blocks -- far under every generation's scoped limit.
    # TODO(synk): for large H*W / hidden (v7x: 64 MiB VMEM), tile H with a
    # 1-row halo instead of holding the whole padded image per grid step.
    out = pl.pallas_call(
        partial(_posterior_kernel, W=W, NL=NL, Cin_p=Cin_p, hidden=hidden),
        out_shape=jax.ShapeDtypeStruct((B, 2, NL), jnp.float32),
        grid=(B,),
        in_specs=[pl.BlockSpec((1, Cin_p, NL), lambda b: (b, 0, 0))]
                 + [_const_spec(a.shape) for a in consts],
        out_specs=pl.BlockSpec((1, 2, NL), lambda b: (b, 0, 0)),
        scratch_shapes=[pltpu.VMEM((9 * Cmax, NL), jnp.bfloat16)],
        compiler_params=pltpu.CompilerParams(dimension_semantics=("parallel",)),
    )(x_in, *consts)

    # Extract interior pixels; channel-major result slices directly into
    # (mean, logvar) NCHW with no transpose.
    y = out[:, :, :Npad].reshape(B, 2, H + 2, W + 2)[:, :, 1:H + 1, 1:W + 1]
    return y[:, 0:1], y[:, 1:2]


def make_params(input_dim, hidden_dim, key):
    """Deterministic synthetic parameters (same shapes as the nn.Module)."""
    ks = jax.random.split(key, 10)

    def conv_w(k, ci, co):
        # HWIO layout, modest scale for numerical stability
        scale = 1.0 / jnp.sqrt(9.0 * ci)
        return (scale * jax.random.normal(k, (3, 3, ci, co))).astype(jnp.float32)

    def bias(k, co):
        return (0.1 * jax.random.normal(k, (1, co))).astype(jnp.float32)

    return {
        "w1": conv_w(ks[0], input_dim, hidden_dim), "b1": bias(ks[1], hidden_dim),
        "w2": conv_w(ks[2], hidden_dim, hidden_dim), "b2": bias(ks[3], hidden_dim),
        "w3": conv_w(ks[4], hidden_dim, hidden_dim), "b3": bias(ks[5], hidden_dim),
        "w4": conv_w(ks[6], hidden_dim, hidden_dim), "b4": bias(ks[7], hidden_dim),
        "wf": conv_w(ks[8], hidden_dim, 2),           "bf": bias(ks[9], 2),
    }


def _ref_forward(x_nchw, params):
    """Pure-JAX reference (mirrors the PyTorch module)."""
    def conv(x, w, b):
        y = jax.lax.conv_general_dilated(
            x, w, window_strides=(1, 1), padding="SAME",
            dimension_numbers=("NCHW", "HWIO", "NCHW"))
        return y + b.reshape(1, -1, 1, 1)

    h = jnp.tanh(conv(x_nchw, params["w1"], params["b1"]))
    h = jnp.tanh(conv(h, params["w2"], params["b2"])) + h
    h = jnp.tanh(conv(h, params["w3"], params["b3"])) + h
    h = jnp.tanh(conv(h, params["w4"], params["b4"])) + h
    y = conv(h, params["wf"], params["bf"])
    return y[:, 0:1], y[:, 1:2]


if __name__ == "__main__":
    B, Cin, H, W = 2, 4, 16, 16
    hidden = 32

    key = jax.random.PRNGKey(0)
    kx, kp = jax.random.split(key)
    x = jax.random.normal(kx, (B, Cin, H, W), dtype=jnp.float32)
    params = make_params(Cin, hidden, kp)

    mean, logvar = posterior_network_forward(x, params)
    mean = jax.block_until_ready(mean)
    logvar = jax.block_until_ready(logvar)

    assert mean.shape == (B, 1, H, W) and logvar.shape == (B, 1, H, W)

    ref_mean, ref_logvar = _ref_forward(x, params)
    assert jnp.allclose(mean, ref_mean, atol=2e-2, rtol=2e-2)
    assert jnp.allclose(logvar, ref_logvar, atol=2e-2, rtol=2e-2)

    print("KERNEL_OK")
</pallas_src>

<mosaic_0001>
module attributes {stable_mosaic.version = 11 : i64} {
  func.func @_posterior_kernel(%arg0: i32, %arg1: memref<1x16x384xf32, #tpu.memory_space<vmem>>, %arg2: memref<1x384xf32, #tpu.memory_space<vmem>>, %arg3: memref<32x144xbf16, #tpu.memory_space<vmem>>, %arg4: memref<32x1xf32, #tpu.memory_space<vmem>>, %arg5: memref<32x288xbf16, #tpu.memory_space<vmem>>, %arg6: memref<32x1xf32, #tpu.memory_space<vmem>>, %arg7: memref<32x288xbf16, #tpu.memory_space<vmem>>, %arg8: memref<32x1xf32, #tpu.memory_space<vmem>>, %arg9: memref<32x288xbf16, #tpu.memory_space<vmem>>, %arg10: memref<32x1xf32, #tpu.memory_space<vmem>>, %arg11: memref<2x288xbf16, #tpu.memory_space<vmem>>, %arg12: memref<2x1xf32, #tpu.memory_space<vmem>>, %arg13: memref<1x2x384xf32, #tpu.memory_space<vmem>>, %arg14: memref<288x384xbf16, #tpu.memory_space<vmem>>) attributes {dimension_semantics = [#tpu.dimension_semantics<parallel>], iteration_bounds = array<i64: 2>, scalar_prefetch = 0 : i64, scratch_operands = 1 : i64, tpu.core_type = #tpu.core_type<tc>, window_params = [{transform_indices = @transform_0, window_bounds = array<i64: 1, 16, 384>}, {pipeline_mode = #tpu.pipeline_mode<synchronous>, transform_indices = @transform_1, window_bounds = array<i64: 1, 384>}, {pipeline_mode = #tpu.pipeline_mode<synchronous>, transform_indices = @transform_2, window_bounds = array<i64: 32, 144>}, {pipeline_mode = #tpu.pipeline_mode<synchronous>, transform_indices = @transform_3, window_bounds = array<i64: 32, 1>}, {pipeline_mode = #tpu.pipeline_mode<synchronous>, transform_indices = @transform_4, window_bounds = array<i64: 32, 288>}, {pipeline_mode = #tpu.pipeline_mode<synchronous>, transform_indices = @transform_5, window_bounds = array<i64: 32, 1>}, {pipeline_mode = #tpu.pipeline_mode<synchronous>, transform_indices = @transform_6, window_bounds = array<i64: 32, 288>}, {pipeline_mode = #tpu.pipeline_mode<synchronous>, transform_indices = @transform_7, window_bounds = array<i64: 32, 1>}, {pipeline_mode = #tpu.pipeline_mode<synchronous>, transform_indices = @transform_8, window_bounds = array<i64: 32, 288>}, {pipeline_mode = #tpu.pipeline_mode<synchronous>, transform_indices = @transform_9, window_bounds = array<i64: 32, 1>}, {pipeline_mode = #tpu.pipeline_mode<synchronous>, transform_indices = @transform_10, window_bounds = array<i64: 2, 288>}, {pipeline_mode = #tpu.pipeline_mode<synchronous>, transform_indices = @transform_11, window_bounds = array<i64: 2, 1>}, {transform_indices = @transform_12, window_bounds = array<i64: 1, 2, 384>}]} {
    %c0 = arith.constant 0 : index
    %c0_0 = arith.constant 0 : index
    %0 = vector.load %arg2[%c0, %c0_0] : memref<1x384xf32, #tpu.memory_space<vmem>>, vector<1x384xf32>
    %c0_1 = arith.constant 0 : index
    %c0_2 = arith.constant 0 : index
    %c0_3 = arith.constant 0 : index
    %1 = vector.load %arg1[%c0_1, %c0_2, %c0_3] : memref<1x16x384xf32, #tpu.memory_space<vmem>>, vector<1x16x384xf32>
    %2 = vector.shape_cast %1 : vector<1x16x384xf32> to vector<16x384xf32>
    %c19_i32 = arith.constant 19 : i32
    %3 = tpu.dynamic_rotate %2 by %c19_i32 dim 1 : vector<16x384xf32>, i32 -> vector<16x384xf32>
    %4 = arith.truncf %3 : vector<16x384xf32> to vector<16x384xbf16>
    %c0_4 = arith.constant 0 : index
    %c0_5 = arith.constant 0 : index
    %5 = vector.load %arg14[%c0_4, %c0_5] : memref<288x384xbf16, #tpu.memory_space<vmem>>, vector<16x384xbf16>
    tpu.vector_store %arg14[%c0_4, %c0_5], %4 {strides = array<i32>} : memref<288x384xbf16, #tpu.memory_space<vmem>>, vector<16x384xbf16>,
    %c18_i32 = arith.constant 18 : i32
    %6 = tpu.dynamic_rotate %2 by %c18_i32 dim 1 : vector<16x384xf32>, i32 -> vector<16x384xf32>
    %7 = arith.truncf %6 : vector<16x384xf32> to vector<16x384xbf16>
    %c16 = arith.constant 16 : index
    %c0_6 = arith.constant 0 : index
    %8 = vector.load %arg14[%c16, %c0_6] : memref<288x384xbf16, #tpu.memory_space<vmem>>, vector<16x384xbf16>
    tpu.vector_store %arg14[%c16, %c0_6], %7 {strides = array<i32>} : memref<288x384xbf16, #tpu.memory_space<vmem>>, vector<16x384xbf16>,
    %c17_i32 = arith.constant 17 : i32
    %9 = tpu.dynamic_rotate %2 by %c17_i32 dim 1 : vector<16x384xf32>, i32 -> vector<16x384xf32>
    %10 = arith.truncf %9 : vector<16x384xf32> to vector<16x384xbf16>
    %c32 = arith.constant 32 : index
    %c0_7 = arith.constant 0 : index
    %11 = vector.load %arg14[%c32, %c0_7] : memref<288x384xbf16, #tpu.memory_space<vmem>>, vector<16x384xbf16>
    tpu.vector_store %arg14[%c32, %c0_7], %10 {strides = array<i32>} : memref<288x384xbf16, #tpu.memory_space<vmem>>, vector<16x384xbf16>,
    %c1_i32 = arith.constant 1 : i32
    %12 = tpu.dynamic_rotate %2 by %c1_i32 dim 1 : vector<16x384xf32>, i32 -> vector<16x384xf32>
    %13 = arith.truncf %12 : vector<16x384xf32> to vector<16x384xbf16>
    %c48 = arith.constant 48 : index
    %c0_8 = arith.constant 0 : index
    %14 = vector.load %arg14[%c48, %c0_8] : memref<288x384xbf16, #tpu.memory_space<vmem>>, vector<16x384xbf16>
    tpu.vector_store %arg14[%c48, %c0_8], %13 {strides = array<i32>} : memref<288x384xbf16, #tpu.memory_space<vmem>>, vector<16x384xbf16>,
    %15 = arith.truncf %2 : vector<16x384xf32> to vector<16x384xbf16>
    %c64 = arith.constant 64 : index
    %c0_9 = arith.constant 0 : index
    %16 = vector.load %arg14[%c64, %c0_9] : memref<288x384xbf16, #tpu.memory_space<vmem>>, vector<16x384xbf16>
    tpu.vector_store %arg14[%c64, %c0_9], %15 {strides = array<i32>} : memref<288x384xbf16, #tpu.memory_space<vmem>>, vector<16x384xbf16>,
    %c383_i32 = arith.constant 383 : i32
    %17 = tpu.dynamic_rotate %2 by %c383_i32 dim 1 : vector<16x384xf32>, i32 -> vector<16x384xf32>
    %18 = arith.truncf %17 : vector<16x384xf32> to vector<16x384xbf16>
    %c80 = arith.constant 80 : index
    %c0_10 = arith.constant 0 : index
    %19 = vector.load %arg14[%c80, %c0_10] : memref<288x384xbf16, #tpu.memory_space<vmem>>, vector<16x384xbf16>
    tpu.vector_store %arg14[%c80, %c0_10], %18 {strides = array<i32>} : memref<288x384xbf16, #tpu.memory_space<vmem>>, vector<16x384xbf16>,
    %c367_i32 = arith.constant 367 : i32
    %20 = tpu.dynamic_rotate %2 by %c367_i32 dim 1 : vector<16x384xf32>, i32 -> vector<16x384xf32>
    %21 = arith.truncf %20 : vector<16x384xf32> to vector<16x384xbf16>
    %c96 = arith.constant 96 : index
    %c0_11 = arith.constant 0 : index
    %22 = vector.load %arg14[%c96, %c0_11] : memref<288x384xbf16, #tpu.memory_space<vmem>>, vector<16x384xbf16>
    tpu.vector_store %arg14[%c96, %c0_11], %21 {strides = array<i32>} : memref<288x384xbf16, #tpu.memory_space<vmem>>, vector<16x384xbf16>,
    %c366_i32 = arith.constant 366 : i32
    %23 = tpu.dynamic_rotate %2 by %c366_i32 dim 1 : vector<16x384xf32>, i32 -> vector<16x384xf32>
    %24 = arith.truncf %23 : vector<16x384xf32> to vector<16x384xbf16>
    %c112 = arith.constant 112 : index
    %c0_12 = arith.constant 0 : index
    %25 = vector.load %arg14[%c112, %c0_12] : memref<288x384xbf16, #tpu.memory_space<vmem>>, vector<16x384xbf16>
    tpu.vector_store %arg14[%c112, %c0_12], %24 {strides = array<i32>} : memref<288x384xbf16, #tpu.memory_space<vmem>>, vector<16x384xbf16>,
    %c365_i32 = arith.constant 365 : i32
    %26 = tpu.dynamic_rotate %2 by %c365_i32 dim 1 : vector<16x384xf32>, i32 -> vector<16x384xf32>
    %27 = arith.truncf %26 : vector<16x384xf32> to vector<16x384xbf16>
    %c128 = arith.constant 128 : index
    %c0_13 = arith.constant 0 : index
    %28 = vector.load %arg14[%c128, %c0_13] : memref<288x384xbf16, #tpu.memory_space<vmem>>, vector<16x384xbf16>
    tpu.vector_store %arg14[%c128, %c0_13], %27 {strides = array<i32>} : memref<288x384xbf16, #tpu.memory_space<vmem>>, vector<16x384xbf16>,
    %c0_14 = arith.constant 0 : index
    %c0_15 = arith.constant 0 : index
    %29 = vector.load %arg3[%c0_14, %c0_15] : memref<32x144xbf16, #tpu.memory_space<vmem>>, vector<32x144xbf16>
    %c0_16 = arith.constant 0 : index
    %c0_17 = arith.constant 0 : index
    %30 = vector.load %arg14[%c0_16, %c0_17] : memref<288x384xbf16, #tpu.memory_space<vmem>>, vector<144x384xbf16>
    %cst = arith.constant dense<0.000000e+00> : vector<32x384xf32>
    %31 = tpu.matmul %29, %30, %cst {dimension_numbers = #tpu.dot_dimension_numbers<[1], [0], [0], [1], [0, 0, 1, 1], [], []>} : vector<32x144xbf16>, vector<144x384xbf16>, vector<32x384xf32> -> vector<32x384xf32>
    %c0_18 = arith.constant 0 : index
    %c0_19 = arith.constant 0 : index
    %32 = vector.load %arg4[%c0_18, %c0_19] : memref<32x1xf32, #tpu.memory_space<vmem>>, vector<32x1xf32>
    %33 = vector.broadcast %32 : vector<32x1xf32> to vector<32x384xf32>
    %34 = arith.addf %31, %33 : vector<32x384xf32>
    %35 = math.tanh %34 : vector<32x384xf32>
    %36 = vector.broadcast %0 : vector<1x384xf32> to vector<32x384xf32>
    %37 = arith.mulf %36, %35 : vector<32x384xf32>
    %c19_i32_20 = arith.constant 19 : i32
    %38 = tpu.dynamic_rotate %37 by %c19_i32_20 dim 1 : vector<32x384xf32>, i32 -> vector<32x384xf32>
    %39 = arith.truncf %38 : vector<32x384xf32> to vector<32x384xbf16>
    %c0_21 = arith.constant 0 : index
    %c0_22 = arith.constant 0 : index
    %40 = vector.load %arg14[%c0_21, %c0_22] : memref<288x384xbf16, #tpu.memory_space<vmem>>, vector<32x384xbf16>
    tpu.vector_store %arg14[%c0_21, %c0_22], %39 {strides = array<i32>} : memref<288x384xbf16, #tpu.memory_space<vmem>>, vector<32x384xbf16>,
    %c18_i32_23 = arith.constant 18 : i32
    %41 = tpu.dynamic_rotate %37 by %c18_i32_23 dim 1 : vector<32x384xf32>, i32 -> vector<32x384xf32>
    %42 = arith.truncf %41 : vector<32x384xf32> to vector<32x384xbf16>
    %c32_24 = arith.constant 32 : index
    %c0_25 = arith.constant 0 : index
    %43 = vector.load %arg14[%c32_24, %c0_25] : memref<288x384xbf16, #tpu.memory_space<vmem>>, vector<32x384xbf16>
    tpu.vector_store %arg14[%c32_24, %c0_25], %42 {strides = array<i32>} : memref<288x384xbf16, #tpu.memory_space<vmem>>, vector<32x384xbf16>,
    %c17_i32_26 = arith.constant 17 : i32
    %44 = tpu.dynamic_rotate %37 by %c17_i32_26 dim 1 : vector<32x384xf32>, i32 -> vector<32x384xf32>
    %45 = arith.truncf %44 : vector<32x384xf32> to vector<32x384xbf16>
    %c64_27 = arith.constant 64 : index
    %c0_28 = arith.constant 0 : index
    %46 = vector.load %arg14[%c64_27, %c0_28] : memref<288x384xbf16, #tpu.memory_space<vmem>>, vector<32x384xbf16>
    tpu.vector_store %arg14[%c64_27, %c0_28], %45 {strides = array<i32>} : memref<288x384xbf16, #tpu.memory_space<vmem>>, vector<32x384xbf16>,
    %c1_i32_29 = arith.constant 1 : i32
    %47 = tpu.dynamic_rotate %37 by %c1_i32_29 dim 1 : vector<32x384xf32>, i32 -> vector<32x384xf32>
    %48 = arith.truncf %47 : vector<32x384xf32> to vector<32x384xbf16>
    %c96_30 = arith.constant 96 : index
    %c0_31 = arith.constant 0 : index
    %49 = vector.load %arg14[%c96_30, %c0_31] : memref<288x384xbf16, #tpu.memory_space<vmem>>, vector<32x384xbf16>
    tpu.vector_store %arg14[%c96_30, %c0_31], %48 {strides = array<i32>} : memref<288x384xbf16, #tpu.memory_space<vmem>>, vector<32x384xbf16>,
    %50 = arith.truncf %37 : vector<32x384xf32> to vector<32x384xbf16>
    %c128_32 = arith.constant 128 : index
    %c0_33 = arith.constant 0 : index
    %51 = vector.load %arg14[%c128_32, %c0_33] : memref<288x384xbf16, #tpu.memory_space<vmem>>, vector<32x384xbf16>
    tpu.vector_store %arg14[%c128_32, %c0_33], %50 {strides = array<i32>} : memref<288x384xbf16, #tpu.memory_space<vmem>>, vector<32x384xbf16>,
    %c383_i32_34 = arith.constant 383 : i32
    %52 = tpu.dynamic_rotate %37 by %c383_i32_34 dim 1 : vector<32x384xf32>, i32 -> vector<32x384xf32>
    %53 = arith.truncf %52 : vector<32x384xf32> to vector<32x384xbf16>
    %c160 = arith.constant 160 : index
    %c0_35 = arith.constant 0 : index
    %54 = vector.load %arg14[%c160, %c0_35] : memref<288x384xbf16, #tpu.memory_space<vmem>>, vector<32x384xbf16>
    tpu.vector_store %arg14[%c160, %c0_35], %53 {strides = array<i32>} : memref<288x384xbf16, #tpu.memory_space<vmem>>, vector<32x384xbf16>,
    %c367_i32_36 = arith.constant 367 : i32
    %55 = tpu.dynamic_rotate %37 by %c367_i32_36 dim 1 : vector<32x384xf32>, i32 -> vector<32x384xf32>
    %56 = arith.truncf %55 : vector<32x384xf32> to vector<32x384xbf16>
    %c192 = arith.constant 192 : index
    %c0_37 = arith.constant 0 : index
    %57 = vector.load %arg14[%c192, %c0_37] : memref<288x384xbf16, #tpu.memory_space<vmem>>, vector<32x384xbf16>
    tpu.vector_store %arg14[%c192, %c0_37], %56 {strides = array<i32>} : memref<288x384xbf16, #tpu.memory_space<vmem>>, vector<32x384xbf16>,
    %c366_i32_38 = arith.constant 366 : i32
    %58 = tpu.dynamic_rotate %37 by %c366_i32_38 dim 1 : vector<32x384xf32>, i32 -> vector<32x384xf32>
    %59 = arith.truncf %58 : vector<32x384xf32> to vector<32x384xbf16>
    %c224 = arith.constant 224 : index
    %c0_39 = arith.constant 0 : index
    %60 = vector.load %arg14[%c224, %c0_39] : memref<288x384xbf16, #tpu.memory_space<vmem>>, vector<32x384xbf16>
    tpu.vector_store %arg14[%c224, %c0_39], %59 {strides = array<i32>} : memref<288x384xbf16, #tpu.memory_space<vmem>>, vector<32x384xbf16>,
    %c365_i32_40 = arith.constant 365 : i32
    %61 = tpu.dynamic_rotate %37 by %c365_i32_40 dim 1 : vector<32x384xf32>, i32 -> vector<32x384xf32>
    %62 = arith.truncf %61 : vector<32x384xf32> to vector<32x384xbf16>
    %c256 = arith.constant 256 : index
    %c0_41 = arith.constant 0 : index
    %63 = vector.load %arg14[%c256, %c0_41] : memref<288x384xbf16, #tpu.memory_space<vmem>>, vector<32x384xbf16>
    tpu.vector_store %arg14[%c256, %c0_41], %62 {strides = array<i32>} : memref<288x384xbf16, #tpu.memory_space<vmem>>, vector<32x384xbf16>,
    %c0_42 = arith.constant 0 : index
    %c0_43 = arith.constant 0 : index
    %64 = vector.load %arg5[%c0_42, %c0_43] : memref<32x288xbf16, #tpu.memory_space<vmem>>, vector<32x288xbf16>
    %c0_44 = arith.constant 0 : index
    %c0_45 = arith.constant 0 : index
    %65 = vector.load %arg14[%c0_44, %c0_45] : memref<288x384xbf16, #tpu.memory_space<vmem>>, vector<288x384xbf16>
    %cst_46 = arith.constant dense<0.000000e+00> : vector<32x384xf32>
    %66 = tpu.matmul %64, %65, %cst_46 {dimension_numbers = #tpu.dot_dimension_numbers<[1], [0], [0], [1], [0, 0, 1, 1], [], []>} : vector<32x288xbf16>, vector<288x384xbf16>, vector<32x384xf32> -> vector<32x384xf32>
    %c0_47 = arith.constant 0 : index
    %c0_48 = arith.constant 0 : index
    %67 = vector.load %arg6[%c0_47, %c0_48] : memref<32x1xf32, #tpu.memory_space<vmem>>, vector<32x1xf32>
    %68 = vector.broadcast %67 : vector<32x1xf32> to vector<32x384xf32>
    %69 = arith.addf %66, %68 : vector<32x384xf32>
    %70 = math.tanh %69 : vector<32x384xf32>
    %71 = vector.broadcast %0 : vector<1x384xf32> to vector<32x384xf32>
    %72 = arith.mulf %71, %70 : vector<32x384xf32>
    %73 = arith.addf %72, %37 : vector<32x384xf32>
    %c19_i32_49 = arith.constant 19 : i32
    %74 = tpu.dynamic_rotate %73 by %c19_i32_49 dim 1 : vector<32x384xf32>, i32 -> vector<32x384xf32>
    %75 = arith.truncf %74 : vector<32x384xf32> to vector<32x384xbf16>
    %c0_50 = arith.constant 0 : index
    %c0_51 = arith.constant 0 : index
    %76 = vector.load %arg14[%c0_50, %c0_51] : memref<288x384xbf16, #tpu.memory_space<vmem>>, vector<32x384xbf16>
    tpu.vector_store %arg14[%c0_50, %c0_51], %75 {strides = array<i32>} : memref<288x384xbf16, #tpu.memory_space<vmem>>, vector<32x384xbf16>,
    %c18_i32_52 = arith.constant 18 : i32
    %77 = tpu.dynamic_rotate %73 by %c18_i32_52 dim 1 : vector<32x384xf32>, i32 -> vector<32x384xf32>
    %78 = arith.truncf %77 : vector<32x384xf32> to vector<32x384xbf16>
    %c32_53 = arith.constant 32 : index
    %c0_54 = arith.constant 0 : index
    %79 = vector.load %arg14[%c32_53, %c0_54] : memref<288x384xbf16, #tpu.memory_space<vmem>>, vector<32x384xbf16>
    tpu.vector_store %arg14[%c32_53, %c0_54], %78 {strides = array<i32>} : memref<288x384xbf16, #tpu.memory_space<vmem>>, vector<32x384xbf16>,
    %c17_i32_55 = arith.constant 17 : i32
    %80 = tpu.dynamic_rotate %73 by %c17_i32_55 dim 1 : vector<32x384xf32>, i32 -> vector<32x384xf32>
    %81 = arith.truncf %80 : vector<32x384xf32> to vector<32x384xbf16>
    %c64_56 = arith.constant 64 : index
    %c0_57 = arith.constant 0 : index
    %82 = vector.load %arg14[%c64_56, %c0_57] : memref<288x384xbf16, #tpu.memory_space<vmem>>, vector<32x384xbf16>
    tpu.vector_store %arg14[%c64_56, %c0_57], %81 {strides = array<i32>} : memref<288x384xbf16, #tpu.memory_space<vmem>>, vector<32x384xbf16>,
    %c1_i32_58 = arith.constant 1 : i32
    %83 = tpu.dynamic_rotate %73 by %c1_i32_58 dim 1 : vector<32x384xf32>, i32 -> vector<32x384xf32>
    %84 = arith.truncf %83 : vector<32x384xf32> to vector<32x384xbf16>
    %c96_59 = arith.constant 96 : index
    %c0_60 = arith.constant 0 : index
    %85 = vector.load %arg14[%c96_59, %c0_60] : memref<288x384xbf16, #tpu.memory_space<vmem>>, vector<32x384xbf16>
    tpu.vector_store %arg14[%c96_59, %c0_60], %84 {strides = array<i32>} : memref<288x384xbf16, #tpu.memory_space<vmem>>, vector<32x384xbf16>,
    %86 = arith.truncf %73 : vector<32x384xf32> to vector<32x384xbf16>
    %c128_61 = arith.constant 128 : index
    %c0_62 = arith.constant 0 : index
    %87 = vector.load %arg14[%c128_61, %c0_62] : memref<288x384xbf16, #tpu.memory_space<vmem>>, vector<32x384xbf16>
    tpu.vector_store %arg14[%c128_61, %c0_62], %86 {strides = array<i32>} : memref<288x384xbf16, #tpu.memory_space<vmem>>, vector<32x384xbf16>,
    %c383_i32_63 = arith.constant 383 : i32
    %88 = tpu.dynamic_rotate %73 by %c383_i32_63 dim 1 : vector<32x384xf32>, i32 -> vector<32x384xf32>
    %89 = arith.truncf %88 : vector<32x384xf32> to vector<32x384xbf16>
    %c160_64 = arith.constant 160 : index
    %c0_65 = arith.constant 0 : index
    %90 = vector.load %arg14[%c160_64, %c0_65] : memref<288x384xbf16, #tpu.memory_space<vmem>>, vector<32x384xbf16>
    tpu.vector_store %arg14[%c160_64, %c0_65], %89 {strides = array<i32>} : memref<288x384xbf16, #tpu.memory_space<vmem>>, vector<32x384xbf16>,
    %c367_i32_66 = arith.constant 367 : i32
    %91 = tpu.dynamic_rotate %73 by %c367_i32_66 dim 1 : vector<32x384xf32>, i32 -> vector<32x384xf32>
    %92 = arith.truncf %91 : vector<32x384xf32> to vector<32x384xbf16>
    %c192_67 = arith.constant 192 : index
    %c0_68 = arith.constant 0 : index
    %93 = vector.load %arg14[%c192_67, %c0_68] : memref<288x384xbf16, #tpu.memory_space<vmem>>, vector<32x384xbf16>
    tpu.vector_store %arg14[%c192_67, %c0_68], %92 {strides = array<i32>} : memref<288x384xbf16, #tpu.memory_space<vmem>>, vector<32x384xbf16>,
    %c366_i32_69 = arith.constant 366 : i32
    %94 = tpu.dynamic_rotate %73 by %c366_i32_69 dim 1 : vector<32x384xf32>, i32 -> vector<32x384xf32>
    %95 = arith.truncf %94 : vector<32x384xf32> to vector<32x384xbf16>
    %c224_70 = arith.constant 224 : index
    %c0_71 = arith.constant 0 : index
    %96 = vector.load %arg14[%c224_70, %c0_71] : memref<288x384xbf16, #tpu.memory_space<vmem>>, vector<32x384xbf16>
    tpu.vector_store %arg14[%c224_70, %c0_71], %95 {strides = array<i32>} : memref<288x384xbf16, #tpu.memory_space<vmem>>, vector<32x384xbf16>,
    %c365_i32_72 = arith.constant 365 : i32
    %97 = tpu.dynamic_rotate %73 by %c365_i32_72 dim 1 : vector<32x384xf32>, i32 -> vector<32x384xf32>
    %98 = arith.truncf %97 : vector<32x384xf32> to vector<32x384xbf16>
    %c256_73 = arith.constant 256 : index
    %c0_74 = arith.constant 0 : index
    %99 = vector.load %arg14[%c256_73, %c0_74] : memref<288x384xbf16, #tpu.memory_space<vmem>>, vector<32x384xbf16>
    tpu.vector_store %arg14[%c256_73, %c0_74], %98 {strides = array<i32>} : memref<288x384xbf16, #tpu.memory_space<vmem>>, vector<32x384xbf16>,
    %c0_75 = arith.constant 0 : index
    %c0_76 = arith.constant 0 : index
    %100 = vector.load %arg7[%c0_75, %c0_76] : memref<32x288xbf16, #tpu.memory_space<vmem>>, vector<32x288xbf16>
    %c0_77 = arith.constant 0 : index
    %c0_78 = arith.constant 0 : index
    %101 = vector.load %arg14[%c0_77, %c0_78] : memref<288x384xbf16, #tpu.memory_space<vmem>>, vector<288x384xbf16>
    %cst_79 = arith.constant dense<0.000000e+00> : vector<32x384xf32>
    %102 = tpu.matmul %100, %101, %cst_79 {dimension_numbers = #tpu.dot_dimension_numbers<[1], [0], [0], [1], [0, 0, 1, 1], [], []>} : vector<32x288xbf16>, vector<288x384xbf16>, vector<32x384xf32> -> vector<32x384xf32>
    %c0_80 = arith.constant 0 : index
    %c0_81 = arith.constant 0 : index
    %103 = vector.load %arg8[%c0_80, %c0_81] : memref<32x1xf32, #tpu.memory_space<vmem>>, vector<32x1xf32>
    %104 = vector.broadcast %103 : vector<32x1xf32> to vector<32x384xf32>
    %105 = arith.addf %102, %104 : vector<32x384xf32>
    %106 = math.tanh %105 : vector<32x384xf32>
    %107 = vector.broadcast %0 : vector<1x384xf32> to vector<32x384xf32>
    %108 = arith.mulf %107, %106 : vector<32x384xf32>
    %109 = arith.addf %108, %73 : vector<32x384xf32>
    %c19_i32_82 = arith.constant 19 : i32
    %110 = tpu.dynamic_rotate %109 by %c19_i32_82 dim 1 : vector<32x384xf32>, i32 -> vector<32x384xf32>
    %111 = arith.truncf %110 : vector<32x384xf32> to vector<32x384xbf16>
    %c0_83 = arith.constant 0 : index
    %c0_84 = arith.constant 0 : index
    %112 = vector.load %arg14[%c0_83, %c0_84] : memref<288x384xbf16, #tpu.memory_space<vmem>>, vector<32x384xbf16>
    tpu.vector_store %arg14[%c0_83, %c0_84], %111 {strides = array<i32>} : memref<288x384xbf16, #tpu.memory_space<vmem>>, vector<32x384xbf16>,
    %c18_i32_85 = arith.constant 18 : i32
    %113 = tpu.dynamic_rotate %109 by %c18_i32_85 dim 1 : vector<32x384xf32>, i32 -> vector<32x384xf32>
    %114 = arith.truncf %113 : vector<32x384xf32> to vector<32x384xbf16>
    %c32_86 = arith.constant 32 : index
    %c0_87 = arith.constant 0 : index
    %115 = vector.load %arg14[%c32_86, %c0_87] : memref<288x384xbf16, #tpu.memory_space<vmem>>, vector<32x384xbf16>
    tpu.vector_store %arg14[%c32_86, %c0_87], %114 {strides = array<i32>} : memref<288x384xbf16, #tpu.memory_space<vmem>>, vector<32x384xbf16>,
    %c17_i32_88 = arith.constant 17 : i32
    %116 = tpu.dynamic_rotate %109 by %c17_i32_88 dim 1 : vector<32x384xf32>, i32 -> vector<32x384xf32>
    %117 = arith.truncf %116 : vector<32x384xf32> to vector<32x384xbf16>
    %c64_89 = arith.constant 64 : index
    %c0_90 = arith.constant 0 : index
    %118 = vector.load %arg14[%c64_89, %c0_90] : memref<288x384xbf16, #tpu.memory_space<vmem>>, vector<32x384xbf16>
    tpu.vector_store %arg14[%c64_89, %c0_90], %117 {strides = array<i32>} : memref<288x384xbf16, #tpu.memory_space<vmem>>, vector<32x384xbf16>,
    %c1_i32_91 = arith.constant 1 : i32
    %119 = tpu.dynamic_rotate %109 by %c1_i32_91 dim 1 : vector<32x384xf32>, i32 -> vector<32x384xf32>
    %120 = arith.truncf %119 : vector<32x384xf32> to vector<32x384xbf16>
    %c96_92 = arith.constant 96 : index
    %c0_93 = arith.constant 0 : index
    %121 = vector.load %arg14[%c96_92, %c0_93] : memref<288x384xbf16, #tpu.memory_space<vmem>>, vector<32x384xbf16>
    tpu.vector_store %arg14[%c96_92, %c0_93], %120 {strides = array<i32>} : memref<288x384xbf16, #tpu.memory_space<vmem>>, vector<32x384xbf16>,
    %122 = arith.truncf %109 : vector<32x384xf32> to vector<32x384xbf16>
    %c128_94 = arith.constant 128 : index
    %c0_95 = arith.constant 0 : index
    %123 = vector.load %arg14[%c128_94, %c0_95] : memref<288x384xbf16, #tpu.memory_space<vmem>>, vector<32x384xbf16>
    tpu.vector_store %arg14[%c128_94, %c0_95], %122 {strides = array<i32>} : memref<288x384xbf16, #tpu.memory_space<vmem>>, vector<32x384xbf16>,
    %c383_i32_96 = arith.constant 383 : i32
    %124 = tpu.dynamic_rotate %109 by %c383_i32_96 dim 1 : vector<32x384xf32>, i32 -> vector<32x384xf32>
    %125 = arith.truncf %124 : vector<32x384xf32> to vector<32x384xbf16>
    %c160_97 = arith.constant 160 : index
    %c0_98 = arith.constant 0 : index
    %126 = vector.load %arg14[%c160_97, %c0_98] : memref<288x384xbf16, #tpu.memory_space<vmem>>, vector<32x384xbf16>
    tpu.vector_store %arg14[%c160_97, %c0_98], %125 {strides = array<i32>} : memref<288x384xbf16, #tpu.memory_space<vmem>>, vector<32x384xbf16>,
    %c367_i32_99 = arith.constant 367 : i32
    %127 = tpu.dynamic_rotate %109 by %c367_i32_99 dim 1 : vector<32x384xf32>, i32 -> vector<32x384xf32>
    %128 = arith.truncf %127 : vector<32x384xf32> to vector<32x384xbf16>
    %c192_100 = arith.constant 192 : index
    %c0_101 = arith.constant 0 : index
    %129 = vector.load %arg14[%c192_100, %c0_101] : memref<288x384xbf16, #tpu.memory_space<vmem>>, vector<32x384xbf16>
    tpu.vector_store %arg14[%c192_100, %c0_101], %128 {strides = array<i32>} : memref<288x384xbf16, #tpu.memory_space<vmem>>, vector<32x384xbf16>,
    %c366_i32_102 = arith.constant 366 : i32
    %130 = tpu.dynamic_rotate %109 by %c366_i32_102 dim 1 : vector<32x384xf32>, i32 -> vector<32x384xf32>
    %131 = arith.truncf %130 : vector<32x384xf32> to vector<32x384xbf16>
    %c224_103 = arith.constant 224 : index
    %c0_104 = arith.constant 0 : index
    %132 = vector.load %arg14[%c224_103, %c0_104] : memref<288x384xbf16, #tpu.memory_space<vmem>>, vector<32x384xbf16>
    tpu.vector_store %arg14[%c224_103, %c0_104], %131 {strides = array<i32>} : memref<288x384xbf16, #tpu.memory_space<vmem>>, vector<32x384xbf16>,
    %c365_i32_105 = arith.constant 365 : i32
    %133 = tpu.dynamic_rotate %109 by %c365_i32_105 dim 1 : vector<32x384xf32>, i32 -> vector<32x384xf32>
    %134 = arith.truncf %133 : vector<32x384xf32> to vector<32x384xbf16>
    %c256_106 = arith.constant 256 : index
    %c0_107 = arith.constant 0 : index
    %135 = vector.load %arg14[%c256_106, %c0_107] : memref<288x384xbf16, #tpu.memory_space<vmem>>, vector<32x384xbf16>
    tpu.vector_store %arg14[%c256_106, %c0_107], %134 {strides = array<i32>} : memref<288x384xbf16, #tpu.memory_space<vmem>>, vector<32x384xbf16>,
    %c0_108 = arith.constant 0 : index
    %c0_109 = arith.constant 0 : index
    %136 = vector.load %arg9[%c0_108, %c0_109] : memref<32x288xbf16, #tpu.memory_space<vmem>>, vector<32x288xbf16>
    %c0_110 = arith.constant 0 : index
    %c0_111 = arith.constant 0 : index
    %137 = vector.load %arg14[%c0_110, %c0_111] : memref<288x384xbf16, #tpu.memory_space<vmem>>, vector<288x384xbf16>
    %cst_112 = arith.constant dense<0.000000e+00> : vector<32x384xf32>
    %138 = tpu.matmul %136, %137, %cst_112 {dimension_numbers = #tpu.dot_dimension_numbers<[1], [0], [0], [1], [0, 0, 1, 1], [], []>} : vector<32x288xbf16>, vector<288x384xbf16>, vector<32x384xf32> -> vector<32x384xf32>
    %c0_113 = arith.constant 0 : index
    %c0_114 = arith.constant 0 : index
    %139 = vector.load %arg10[%c0_113, %c0_114] : memref<32x1xf32, #tpu.memory_space<vmem>>, vector<32x1xf32>
    %140 = vector.broadcast %139 : vector<32x1xf32> to vector<32x384xf32>
    %141 = arith.addf %138, %140 : vector<32x384xf32>
    %142 = math.tanh %141 : vector<32x384xf32>
    %143 = vector.broadcast %0 : vector<1x384xf32> to vector<32x384xf32>
    %144 = arith.mulf %143, %142 : vector<32x384xf32>
    %145 = arith.addf %144, %109 : vector<32x384xf32>
    %c19_i32_115 = arith.constant 19 : i32
    %146 = tpu.dynamic_rotate %145 by %c19_i32_115 dim 1 : vector<32x384xf32>, i32 -> vector<32x384xf32>
    %147 = arith.truncf %146 : vector<32x384xf32> to vector<32x384xbf16>
    %c0_116 = arith.constant 0 : index
    %c0_117 = arith.constant 0 : index
    %148 = vector.load %arg14[%c0_116, %c0_117] : memref<288x384xbf16, #tpu.memory_space<vmem>>, vector<32x384xbf16>
    tpu.vector_store %arg14[%c0_116, %c0_117], %147 {strides = array<i32>} : memref<288x384xbf16, #tpu.memory_space<vmem>>, vector<32x384xbf16>,
    %c18_i32_118 = arith.constant 18 : i32
    %149 = tpu.dynamic_rotate %145 by %c18_i32_118 dim 1 : vector<32x384xf32>, i32 -> vector<32x384xf32>
    %150 = arith.truncf %149 : vector<32x384xf32> to vector<32x384xbf16>
    %c32_119 = arith.constant 32 : index
    %c0_120 = arith.constant 0 : index
    %151 = vector.load %arg14[%c32_119, %c0_120] : memref<288x384xbf16, #tpu.memory_space<vmem>>, vector<32x384xbf16>
    tpu.vector_store %arg14[%c32_119, %c0_120], %150 {strides = array<i32>} : memref<288x384xbf16, #tpu.memory_space<vmem>>, vector<32x384xbf16>,
    %c17_i32_121 = arith.constant 17 : i32
    %152 = tpu.dynamic_rotate %145 by %c17_i32_121 dim 1 : vector<32x384xf32>, i32 -> vector<32x384xf32>
    %153 = arith.truncf %152 : vector<32x384xf32> to vector<32x384xbf16>
    %c64_122 = arith.constant 64 : index
    %c0_123 = arith.constant 0 : index
    %154 = vector.load %arg14[%c64_122, %c0_123] : memref<288x384xbf16, #tpu.memory_space<vmem>>, vector<32x384xbf16>
    tpu.vector_store %arg14[%c64_122, %c0_123], %153 {strides = array<i32>} : memref<288x384xbf16, #tpu.memory_space<vmem>>, vector<32x384xbf16>,
    %c1_i32_124 = arith.constant 1 : i32
    %155 = tpu.dynamic_rotate %145 by %c1_i32_124 dim 1 : vector<32x384xf32>, i32 -> vector<32x384xf32>
    %156 = arith.truncf %155 : vector<32x384xf32> to vector<32x384xbf16>
    %c96_125 = arith.constant 96 : index
    %c0_126 = arith.constant 0 : index
    %157 = vector.load %arg14[%c96_125, %c0_126] : memref<288x384xbf16, #tpu.memory_space<vmem>>, vector<32x384xbf16>
    tpu.vector_store %arg14[%c96_125, %c0_126], %156 {strides = array<i32>} : memref<288x384xbf16, #tpu.memory_space<vmem>>, vector<32x384xbf16>,
    %158 = arith.truncf %145 : vector<32x384xf32> to vector<32x384xbf16>
    %c128_127 = arith.constant 128 : index
    %c0_128 = arith.constant 0 : index
    %159 = vector.load %arg14[%c128_127, %c0_128] : memref<288x384xbf16, #tpu.memory_space<vmem>>, vector<32x384xbf16>
    tpu.vector_store %arg14[%c128_127, %c0_128], %158 {strides = array<i32>} : memref<288x384xbf16, #tpu.memory_space<vmem>>, vector<32x384xbf16>,
    %c383_i32_129 = arith.constant 383 : i32
    %160 = tpu.dynamic_rotate %145 by %c383_i32_129 dim 1 : vector<32x384xf32>, i32 -> vector<32x384xf32>
    %161 = arith.truncf %160 : vector<32x384xf32> to vector<32x384xbf16>
    %c160_130 = arith.constant 160 : index
    %c0_131 = arith.constant 0 : index
    %162 = vector.load %arg14[%c160_130, %c0_131] : memref<288x384xbf16, #tpu.memory_space<vmem>>, vector<32x384xbf16>
    tpu.vector_store %arg14[%c160_130, %c0_131], %161 {strides = array<i32>} : memref<288x384xbf16, #tpu.memory_space<vmem>>, vector<32x384xbf16>,
    %c367_i32_132 = arith.constant 367 : i32
    %163 = tpu.dynamic_rotate %145 by %c367_i32_132 dim 1 : vector<32x384xf32>, i32 -> vector<32x384xf32>
    %164 = arith.truncf %163 : vector<32x384xf32> to vector<32x384xbf16>
    %c192_133 = arith.constant 192 : index
    %c0_134 = arith.constant 0 : index
    %165 = vector.load %arg14[%c192_133, %c0_134] : memref<288x384xbf16, #tpu.memory_space<vmem>>, vector<32x384xbf16>
    tpu.vector_store %arg14[%c192_133, %c0_134], %164 {strides = array<i32>} : memref<288x384xbf16, #tpu.memory_space<vmem>>, vector<32x384xbf16>,
    %c366_i32_135 = arith.constant 366 : i32
    %166 = tpu.dynamic_rotate %145 by %c366_i32_135 dim 1 : vector<32x384xf32>, i32 -> vector<32x384xf32>
    %167 = arith.truncf %166 : vector<32x384xf32> to vector<32x384xbf16>
    %c224_136 = arith.constant 224 : index
    %c0_137 = arith.constant 0 : index
    %168 = vector.load %arg14[%c224_136, %c0_137] : memref<288x384xbf16, #tpu.memory_space<vmem>>, vector<32x384xbf16>
    tpu.vector_store %arg14[%c224_136, %c0_137], %167 {strides = array<i32>} : memref<288x384xbf16, #tpu.memory_space<vmem>>, vector<32x384xbf16>,
    %c365_i32_138 = arith.constant 365 : i32
    %169 = tpu.dynamic_rotate %145 by %c365_i32_138 dim 1 : vector<32x384xf32>, i32 -> vector<32x384xf32>
    %170 = arith.truncf %169 : vector<32x384xf32> to vector<32x384xbf16>
    %c256_139 = arith.constant 256 : index
    %c0_140 = arith.constant 0 : index
    %171 = vector.load %arg14[%c256_139, %c0_140] : memref<288x384xbf16, #tpu.memory_space<vmem>>, vector<32x384xbf16>
    tpu.vector_store %arg14[%c256_139, %c0_140], %170 {strides = array<i32>} : memref<288x384xbf16, #tpu.memory_space<vmem>>, vector<32x384xbf16>,
    %c0_141 = arith.constant 0 : index
    %c0_142 = arith.constant 0 : index
    %172 = vector.load %arg11[%c0_141, %c0_142] : memref<2x288xbf16, #tpu.memory_space<vmem>>, vector<2x288xbf16>
    %c0_143 = arith.constant 0 : index
    %c0_144 = arith.constant 0 : index
    %173 = vector.load %arg14[%c0_143, %c0_144] : memref<288x384xbf16, #tpu.memory_space<vmem>>, vector<288x384xbf16>
    %cst_145 = arith.constant dense<0.000000e+00> : vector<2x384xf32>
    %174 = tpu.matmul %172, %173, %cst_145 {dimension_numbers = #tpu.dot_dimension_numbers<[1], [0], [0], [1], [0, 0, 1, 1], [], []>} : vector<2x288xbf16>, vector<288x384xbf16>, vector<2x384xf32> -> vector<2x384xf32>
    %c0_146 = arith.constant 0 : index
    %c0_147 = arith.constant 0 : index
    %175 = vector.load %arg12[%c0_146, %c0_147] : memref<2x1xf32, #tpu.memory_space<vmem>>, vector<2x1xf32>
    %176 = vector.broadcast %175 : vector<2x1xf32> to vector<2x384xf32>
    %177 = arith.addf %174, %176 : vector<2x384xf32>
    %c0_148 = arith.constant 0 : index
    %c0_149 = arith.constant 0 : index
    %c0_150 = arith.constant 0 : index
    %178 = vector.load %arg13[%c0_148, %c0_149, %c0_150] : memref<1x2x384xf32, #tpu.memory_space<vmem>>, vector<1x2x384xf32>
    %179 = vector.shape_cast %178 : vector<1x2x384xf32> to vector<2x384xf32>
    %180 = vector.shape_cast %177 : vector<2x384xf32> to vector<1x2x384xf32>
    tpu.vector_store %arg13[%c0_148, %c0_149, %c0_150], %180 {strides = array<i32>} : memref<1x2x384xf32, #tpu.memory_space<vmem>>, vector<1x2x384xf32>,
    return
  }
  func.func @transform_0(%arg0: i32) -> (i32, i32, i32) {
    %c0_i32 = arith.constant 0 : i32
    %c0_i32_0 = arith.constant 0 : i32
    %c0_i32_1 = arith.constant 0 : i32
    return %arg0, %c0_i32, %c0_i32_0 : i32, i32, i32
  }
  func.func @transform_1(%arg0: i32) -> (i32, i32) {
    %c0_i32 = arith.constant 0 : i32
    %c0_i32_0 = arith.constant 0 : i32
    %c0_i32_1 = arith.constant 0 : i32
    return %c0_i32, %c0_i32_0 : i32, i32
  }
  func.func @transform_2(%arg0: i32) -> (i32, i32) {
    %c0_i32 = arith.constant 0 : i32
    %c0_i32_0 = arith.constant 0 : i32
    %c0_i32_1 = arith.constant 0 : i32
    return %c0_i32, %c0_i32_0 : i32, i32
  }
  func.func @transform_3(%arg0: i32) -> (i32, i32) {
    %c0_i32 = arith.constant 0 : i32
    %c0_i32_0 = arith.constant 0 : i32
    %c0_i32_1 = arith.constant 0 : i32
    return %c0_i32, %c0_i32_0 : i32, i32
  }
  func.func @transform_4(%arg0: i32) -> (i32, i32) {
    %c0_i32 = arith.constant 0 : i32
    %c0_i32_0 = arith.constant 0 : i32
    %c0_i32_1 = arith.constant 0 : i32
    return %c0_i32, %c0_i32_0 : i32, i32
  }
  func.func @transform_5(%arg0: i32) -> (i32, i32) {
    %c0_i32 = arith.constant 0 : i32
    %c0_i32_0 = arith.constant 0 : i32
    %c0_i32_1 = arith.constant 0 : i32
    return %c0_i32, %c0_i32_0 : i32, i32
  }
  func.func @transform_6(%arg0: i32) -> (i32, i32) {
    %c0_i32 = arith.constant 0 : i32
    %c0_i32_0 = arith.constant 0 : i32
    %c0_i32_1 = arith.constant 0 : i32
    return %c0_i32, %c0_i32_0 : i32, i32
  }
  func.func @transform_7(%arg0: i32) -> (i32, i32) {
    %c0_i32 = arith.constant 0 : i32
    %c0_i32_0 = arith.constant 0 : i32
    %c0_i32_1 = arith.constant 0 : i32
    return %c0_i32, %c0_i32_0 : i32, i32
  }
  func.func @transform_8(%arg0: i32) -> (i32, i32) {
    %c0_i32 = arith.constant 0 : i32
    %c0_i32_0 = arith.constant 0 : i32
    %c0_i32_1 = arith.constant 0 : i32
    return %c0_i32, %c0_i32_0 : i32, i32
  }
  func.func @transform_9(%arg0: i32) -> (i32, i32) {
    %c0_i32 = arith.constant 0 : i32
    %c0_i32_0 = arith.constant 0 : i32
    %c0_i32_1 = arith.constant 0 : i32
    return %c0_i32, %c0_i32_0 : i32, i32
  }
  func.func @transform_10(%arg0: i32) -> (i32, i32) {
    %c0_i32 = arith.constant 0 : i32
    %c0_i32_0 = arith.constant 0 : i32
    %c0_i32_1 = arith.constant 0 : i32
    return %c0_i32, %c0_i32_0 : i32, i32
  }
  func.func @transform_11(%arg0: i32) -> (i32, i32) {
    %c0_i32 = arith.constant 0 : i32
    %c0_i32_0 = arith.constant 0 : i32
    %c0_i32_1 = arith.constant 0 : i32
    return %c0_i32, %c0_i32_0 : i32, i32
  }
  func.func @transform_12(%arg0: i32) -> (i32, i32, i32) {
    %c0_i32 = arith.constant 0 : i32
    %c0_i32_0 = arith.constant 0 : i32
    %c0_i32_1 = arith.constant 0 : i32
    return %arg0, %c0_i32, %c0_i32_0 : i32, i32, i32
  }
}

</mosaic_0001>

<llo_original>
// kernel: tpu_custom_call.1
$region0: #{tpu_custom_call.1}
  #allocation0 [shape = 'u32[]', space=smem, size = 0x4, offset = 0x4, fixed_abs, tag = 'smem constant byte address 0x4 - core index']
  #allocation1 [shape = 'u32[144,128]{1,0:T(1,128)}', space=vmem, size = 0x12000, scoped, tag = 'internal scratch']
  #allocation2 [shape = 'bf16[288,384]{1,0:T(16,128)(2,1)}', space=vmem, size = 0x36000, scoped, tag = 'scratch operand']
  %s0 = inlined_call_operand.vmem [shape: f32[2,16,384], index: 0, kind: input, shape index: {}]
  %s1 = inlined_call_operand.vmem [shape: f32[1,384], index: 1, kind: input, shape index: {}]
  %s2 = inlined_call_operand.hbm [shape: bf16[32,144], index: 2, kind: input, shape index: {}]
  %s3 = inlined_call_operand.vmem [shape: f32[32,1], index: 3, kind: input, shape index: {}]
  %s4 = inlined_call_operand.vmem [shape: bf16[32,288], index: 4, kind: input, shape index: {}]
  %s5 = inlined_call_operand.vmem [shape: f32[32,1], index: 5, kind: input, shape index: {}]
  %s6 = inlined_call_operand.hbm [shape: bf16[32,288], index: 6, kind: input, shape index: {}]
  %s7 = inlined_call_operand.vmem [shape: f32[32,1], index: 7, kind: input, shape index: {}]
  %s8 = inlined_call_operand.hbm [shape: bf16[32,288], index: 8, kind: input, shape index: {}]
  %s9 = inlined_call_operand.vmem [shape: f32[32,1], index: 9, kind: input, shape index: {}]
  %s10 = inlined_call_operand.vmem [shape: bf16[2,288], index: 10, kind: input, shape index: {}]
  %s11 = inlined_call_operand.vmem [shape: f32[2,1], index: 11, kind: input, shape index: {}]
  %s12 = inlined_call_operand.hbm [shape: f32[2,2,384], index: 12, kind: output, shape index: {}]
  %s13 = sld [smem:[#allocation0]]
  $region93: #{tpu_custom_call.1} parent=0
    _
  %s15 = ssub.s32 1, %s13
  %s16 = scalar_select 0, %s15, %s13
  $region1: #{tpu_custom_call.1} parent=0
    #allocation3 [shape = 'u8[16384]{0}', space=vmem, size = 0x4000, scoped, tag = 'input window, operand 2, single buffered']
    #allocation4 [shape = 's32[2]{0}', space=sflag, size = 0x8, scoped, tag = 'scoped memory for tpu_custom_call.1']
    #allocation5 [shape = 's32[2]{0}', space=sflag, size = 0x8, scoped, tag = 'scoped memory for tpu_custom_call.1']
    #allocation6 [shape = 'u8[24576]{0}', space=vmem, size = 0x6000, scoped, tag = 'input window, operand 6, single buffered']
    #allocation7 [shape = 's32[1]{0}', space=sflag, size = 0x4, scoped, tag = 'scoped memory for tpu_custom_call.1']
    #allocation8 [shape = 'u8[24576]{0}', space=vmem, size = 0x6000, scoped, tag = 'input window, operand 8, single buffered']
    #allocation9 [shape = 'u8[6144]{0}', space=vmem, size = 0x1800, scoped, tag = 'output window, operand 0']
    %17 = vsyncpa [#allocation4], 0
    %18 = vsyncpa [#allocation7], 0
    %19 = vsyncpa [#allocation5], 0
    %s20 = scalar_lea.sflag [#allocation5], 1
    %21 = vsyncpa %s20, 0
    loop: start=0, step=1, limit=4
    $region2: #{tpu_custom_call.1} parent=1 // loop_pre_header
      _
    $region3: #{tpu_custom_call.1} parent=1 // loop_header
      %s23 = sphi 0, %s27
      %p24 = scmp.ge.s32.totalorder %s23, 4
      %s33 = sphi 0, %s35
      %s36 = sphi 0, %s33
      %s37 = sphi 0, %s36
      %s53 = sphi 0, %s37
      %s57 = sphi 0, %s57
      %s59 = sphi 0, %s57
      %s60 = sphi 0, %s59
      %s74 = sphi 0, %s60
      %s78 = sphi 0, %s78
      %s80 = sphi 0, %s78
      %s81 = sphi 0, %s80
      %s95 = sphi 0, %s81
      %s99 = sphi 0, %s99
      %s101 = sphi 0, %s99
      %s102 = sphi 0, %s101
      %s116 = sphi 0, %s102
      %s120 = sphi 0, %s120
      %s122 = sphi 0, %s120
      %s123 = sphi 0, %s122
      %s137 = sphi 0, %s123
      %s141 = sphi 0, %s141
      %s143 = sphi 0, %s141
      %s144 = sphi 0, %s143
      %s158 = sphi 0, %s144
      %s162 = sphi 0, %s162
      %s164 = sphi 0, %s162
      %s165 = sphi 0, %s164
      %s179 = sphi 0, %s165
      %s183 = sphi 0, %s183
      %s185 = sphi 0, %s183
      %s186 = sphi 0, %s185
      %s200 = sphi 0, %s186
      %s204 = sphi 0, %s204
      %s206 = sphi 0, %s204
      %s207 = sphi 0, %s206
      %s221 = sphi 0, %s207
      %s225 = sphi 0, %s225
      %s227 = sphi 0, %s225
      %s228 = sphi 0, %s227
      %s242 = sphi 0, %s228
      %s246 = sphi 0, %s246
      %s248 = sphi 0, %s246
      %s249 = sphi 0, %s248
      %s263 = sphi 0, %s249
      %s267 = sphi 0, %s267
      %s269 = sphi 0, %s267
      %s270 = sphi 0, %s269
      %s284 = sphi 0, %s270
      %s290 = sphi 0, %s292
      %s293 = sphi 0, %s290
      %s294 = sphi 0, %s293
      %s310 = sphi 0, %s294
    $region4: #{tpu_custom_call.1} parent=1 // loop_header_branch
      %26 = sbr.rel (%p24) target = $region8
    $region5: #{tpu_custom_call.1} parent=1 // loop_body
      %s28 = ssub.s32 %s23, 1
      %s29 = ssub.s32 %s23, 2
      %s30 = sadd.s32 %s23, 1
      %s31 = ssub.s32 %s23, %s30
      %p32 = scmp.eq.s32.totalorder %s31, 0
      %s34 = sadd.s32 %s33, 1
      %s35 = scalar_select %p32, %s33, %s34
      %p38 = pneg %p32
      %p39 = scmp.eq.s32.totalorder %s23, 1
      %p40 = por %p38, %p39
      %p41 = scmp.ne.s32.totalorder %s33, %s36
      %p42 = scmp.eq.s32.totalorder %s23, 0
      %p43 = por %p41, %p42
      %p44 = scmp.ne.s32.totalorder %s33, %s36
      %p45 = scmp.eq.s32.totalorder %s28, 1
      %p46 = por %p44, %p45
      %p47 = scmp.ne.s32.totalorder %s36, %s37
      %p48 = scmp.eq.s32.totalorder %s28, 0
      %p49 = por %p47, %p48
      %p50 = scmp.ne.s32.totalorder %s36, %s37
      %p51 = scmp.eq.s32.totalorder %s29, 1
      %p52 = por %p50, %p51
      %p54 = scmp.ne.s32.totalorder %s37, %s53
      %p55 = scmp.eq.s32.totalorder %s29, 0
      %p56 = por %p54, %p55
      %s58 = sadd.s32 %s57, 1
      %p61 = scmp.eq.s32.totalorder %s23, 1
      %p62 = scmp.ne.s32.totalorder %s57, %s59
      %p63 = scmp.eq.s32.totalorder %s23, 0
      %p64 = por %p62, %p63
      %p65 = scmp.ne.s32.totalorder %s57, %s59
      %p66 = scmp.eq.s32.totalorder %s28, 1
      %p67 = por %p65, %p66
      %p68 = scmp.ne.s32.totalorder %s59, %s60
      %p69 = scmp.eq.s32.totalorder %s28, 0
      %p70 = por %p68, %p69
      %p71 = scmp.ne.s32.totalorder %s59, %s60
      %p72 = scmp.eq.s32.totalorder %s29, 1
      %p73 = por %p71, %p72
      %p75 = scmp.ne.s32.totalorder %s60, %s74
      %p76 = scmp.eq.s32.totalorder %s29, 0
      %p77 = por %p75, %p76
      %s79 = sadd.s32 %s78, 1
      %p82 = scmp.eq.s32.totalorder %s23, 1
      %p83 = scmp.ne.s32.totalorder %s78, %s80
      %p84 = scmp.eq.s32.totalorder %s23, 0
      %p85 = por %p83, %p84
      %p86 = scmp.ne.s32.totalorder %s78, %s80
      %p87 = scmp.eq.s32.totalorder %s28, 1
      %p88 = por %p86, %p87
      %p89 = scmp.ne.s32.totalorder %s80, %s81
      %p90 = scmp.eq.s32.totalorder %s28, 0
      %p91 = por %p89, %p90
      %p92 = scmp.ne.s32.totalorder %s80, %s81
      %p93 = scmp.eq.s32.totalorder %s29, 1
      %p94 = por %p92, %p93
      %p96 = scmp.ne.s32.totalorder %s81, %s95
      %p97 = scmp.eq.s32.totalorder %s29, 0
      %p98 = por %p96, %p97
      %s100 = sadd.s32 %s99, 1
      %p103 = scmp.eq.s32.totalorder %s23, 1
      %p104 = scmp.ne.s32.totalorder %s99, %s101
      %p105 = scmp.eq.s32.totalorder %s23, 0
      %p106 = por %p104, %p105
      %p107 = scmp.ne.s32.totalorder %s99, %s101
      %p108 = scmp.eq.s32.totalorder %s28, 1
      %p109 = por %p107, %p108
      %p110 = scmp.ne.s32.totalorder %s101, %s102
      %p111 = scmp.eq.s32.totalorder %s28, 0
      %p112 = por %p110, %p111
      %p113 = scmp.ne.s32.totalorder %s101, %s102
      %p114 = scmp.eq.s32.totalorder %s29, 1
      %p115 = por %p113, %p114
      %p117 = scmp.ne.s32.totalorder %s102, %s116
      %p118 = scmp.eq.s32.totalorder %s29, 0
      %p119 = por %p117, %p118
      %s121 = sadd.s32 %s120, 1
      %p124 = scmp.eq.s32.totalorder %s23, 1
      %p125 = scmp.ne.s32.totalorder %s120, %s122
      %p126 = scmp.eq.s32.totalorder %s23, 0
      %p127 = por %p125, %p126
      %p128 = scmp.ne.s32.totalorder %s120, %s122
      %p129 = scmp.eq.s32.totalorder %s28, 1
      %p130 = por %p128, %p129
      %p131 = scmp.ne.s32.totalorder %s122, %s123
      %p132 = scmp.eq.s32.totalorder %s28, 0
      %p133 = por %p131, %p132
      %p134 = scmp.ne.s32.totalorder %s122, %s123
      %p135 = scmp.eq.s32.totalorder %s29, 1
      %p136 = por %p134, %p135
      %p138 = scmp.ne.s32.totalorder %s123, %s137
      %p139 = scmp.eq.s32.totalorder %s29, 0
      %p140 = por %p138, %p139
      %s142 = sadd.s32 %s141, 1
      %p145 = scmp.eq.s32.totalorder %s23, 1
      %p146 = scmp.ne.s32.totalorder %s141, %s143
      %p147 = scmp.eq.s32.totalorder %s23, 0
      %p148 = por %p146, %p147
      %p149 = scmp.ne.s32.totalorder %s141, %s143
      %p150 = scmp.eq.s32.totalorder %s28, 1
      %p151 = por %p149, %p150
      %p152 = scmp.ne.s32.totalorder %s143, %s144
      %p153 = scmp.eq.s32.totalorder %s28, 0
      %p154 = por %p152, %p153
      %p155 = scmp.ne.s32.totalorder %s143, %s144
      %p156 = scmp.eq.s32.totalorder %s29, 1
      %p157 = por %p155, %p156
      %p159 = scmp.ne.s32.totalorder %s144, %s158
      %p160 = scmp.eq.s32.totalorder %s29, 0
      %p161 = por %p159, %p160
      %s163 = sadd.s32 %s162, 1
      %p166 = scmp.eq.s32.totalorder %s23, 1
      %p167 = scmp.ne.s32.totalorder %s162, %s164
      %p168 = scmp.eq.s32.totalorder %s23, 0
      %p169 = por %p167, %p168
      %p170 = scmp.ne.s32.totalorder %s162, %s164
      %p171 = scmp.eq.s32.totalorder %s28, 1
      %p172 = por %p170, %p171
      %p173 = scmp.ne.s32.totalorder %s164, %s165
      %p174 = scmp.eq.s32.totalorder %s28, 0
      %p175 = por %p173, %p174
      %p176 = scmp.ne.s32.totalorder %s164, %s165
      %p177 = scmp.eq.s32.totalorder %s29, 1
      %p178 = por %p176, %p177
      %p180 = scmp.ne.s32.totalorder %s165, %s179
      %p181 = scmp.eq.s32.totalorder %s29, 0
      %p182 = por %p180, %p181
      %s184 = sadd.s32 %s183, 1
      %p187 = scmp.eq.s32.totalorder %s23, 1
      %p188 = scmp.ne.s32.totalorder %s183, %s185
      %p189 = scmp.eq.s32.totalorder %s23, 0
      %p190 = por %p188, %p189
      %p191 = scmp.ne.s32.totalorder %s183, %s185
      %p192 = scmp.eq.s32.totalorder %s28, 1
      %p193 = por %p191, %p192
      %p194 = scmp.ne.s32.totalorder %s185, %s186
      %p195 = scmp.eq.s32.totalorder %s28, 0
      %p196 = por %p194, %p195
      %p197 = scmp.ne.s32.totalorder %s185, %s186
      %p198 = scmp.eq.s32.totalorder %s29, 1
      %p199 = por %p197, %p198
      %p201 = scmp.ne.s32.totalorder %s186, %s200
      %p202 = scmp.eq.s32.totalorder %s29, 0
      %p203 = por %p201, %p202
      %s205 = sadd.s32 %s204, 1
      %p208 = scmp.eq.s32.totalorder %s23, 1
      %p209 = scmp.ne.s32.totalorder %s204, %s206
      %p210 = scmp.eq.s32.totalorder %s23, 0
      %p211 = por %p209, %p210
      %p212 = scmp.ne.s32.totalorder %s204, %s206
      %p213 = scmp.eq.s32.totalorder %s28, 1
      %p214 = por %p212, %p213
      %p215 = scmp.ne.s32.totalorder %s206, %s207
      %p216 = scmp.eq.s32.totalorder %s28, 0
      %p217 = por %p215, %p216
      %p218 = scmp.ne.s32.totalorder %s206, %s207
      %p219 = scmp.eq.s32.totalorder %s29, 1
      %p220 = por %p218, %p219
      %p222 = scmp.ne.s32.totalorder %s207, %s221
      %p223 = scmp.eq.s32.totalorder %s29, 0
      %p224 = por %p222, %p223
      %s226 = sadd.s32 %s225, 1
      %p229 = scmp.eq.s32.totalorder %s23, 1
      %p230 = scmp.ne.s32.totalorder %s225, %s227
      %p231 = scmp.eq.s32.totalorder %s23, 0
      %p232 = por %p230, %p231
      %p233 = scmp.ne.s32.totalorder %s225, %s227
      %p234 = scmp.eq.s32.totalorder %s28, 1
      %p235 = por %p233, %p234
      %p236 = scmp.ne.s32.totalorder %s227, %s228
      %p237 = scmp.eq.s32.totalorder %s28, 0
      %p238 = por %p236, %p237
      %p239 = scmp.ne.s32.totalorder %s227, %s228
      %p240 = scmp.eq.s32.totalorder %s29, 1
      %p241 = por %p239, %p240
      %p243 = scmp.ne.s32.totalorder %s228, %s242
      %p244 = scmp.eq.s32.totalorder %s29, 0
      %p245 = por %p243, %p244
      %s247 = sadd.s32 %s246, 1
      %p250 = scmp.eq.s32.totalorder %s23, 1
      %p251 = scmp.ne.s32.totalorder %s246, %s248
      %p252 = scmp.eq.s32.totalorder %s23, 0
      %p253 = por %p251, %p252
      %p254 = scmp.ne.s32.totalorder %s246, %s248
      %p255 = scmp.eq.s32.totalorder %s28, 1
      %p256 = por %p254, %p255
      %p257 = scmp.ne.s32.totalorder %s248, %s249
      %p258 = scmp.eq.s32.totalorder %s28, 0
      %p259 = por %p257, %p258
      %p260 = scmp.ne.s32.totalorder %s248, %s249
      %p261 = scmp.eq.s32.totalorder %s29, 1
      %p262 = por %p260, %p261
      %p264 = scmp.ne.s32.totalorder %s249, %s263
      %p265 = scmp.eq.s32.totalorder %s29, 0
      %p266 = por %p264, %p265
      %s268 = sadd.s32 %s267, 1
      %p271 = scmp.eq.s32.totalorder %s23, 1
      %p272 = scmp.ne.s32.totalorder %s267, %s269
      %p273 = scmp.eq.s32.totalorder %s23, 0
      %p274 = por %p272, %p273
      %p275 = scmp.ne.s32.totalorder %s267, %s269
      %p276 = scmp.eq.s32.totalorder %s28, 1
      %p277 = por %p275, %p276
      %p278 = scmp.ne.s32.totalorder %s269, %s270
      %p279 = scmp.eq.s32.totalorder %s28, 0
      %p280 = por %p278, %p279
      %p281 = scmp.ne.s32.totalorder %s269, %s270
      %p282 = scmp.eq.s32.totalorder %s29, 1
      %p283 = por %p281, %p282
      %p285 = scmp.ne.s32.totalorder %s270, %s284
      %p286 = scmp.eq.s32.totalorder %s29, 0
      %p287 = por %p285, %p286
      %s288 = ssub.s32 %s23, %s30
      %p289 = scmp.eq.s32.totalorder %s288, 0
      %s291 = sadd.s32 %s290, 1
      %s292 = scalar_select %p289, %s290, %s291
      %p295 = pneg %p289
      %p296 = scmp.eq.s32.totalorder %s23, 1
      %p297 = por %p295, %p296
      %p298 = scmp.ne.s32.totalorder %s290, %s293
      %p299 = scmp.eq.s32.totalorder %s23, 0
      %p300 = por %p298, %p299
      %p301 = scmp.ne.s32.totalorder %s290, %s293
      %p302 = scmp.eq.s32.totalorder %s28, 1
      %p303 = por %p301, %p302
      %p304 = scmp.ne.s32.totalorder %s293, %s294
      %p305 = scmp.eq.s32.totalorder %s28, 0
      %p306 = por %p304, %p305
      %p307 = scmp.ne.s32.totalorder %s293, %s294
      %p308 = scmp.eq.s32.totalorder %s29, 1
      %p309 = por %p307, %p308
      %p311 = scmp.ne.s32.totalorder %s294, %s310
      %p312 = scmp.eq.s32.totalorder %s29, 0
      %p313 = por %p311, %p312
      %p314 = scmp.le.s32.totalorder 1, %s23
      %p315 = scmp.lt.s32.totalorder %s23, 3
      %p316 = pnand %p314, %p315
      %p317 = pneg %p316
      // Predicated region
      $region9: #{tpu_custom_call.1} parent=5 // pred_check
        _
      $region10: #{tpu_custom_call.1} parent=5 // pred_check_branch
        %319 = sbr.rel (%p316) target = $region12
      $region11: #{tpu_custom_call.1} parent=5 // pred_region
        %s320 = ssub.s32 %s23, 1
        // Predicated region
        $region13: #{tpu_custom_call.1} parent=11 // pred_check
          %p321 = pneg %p70
        $region14: #{tpu_custom_call.1} parent=11 // pred_check_branch
          %323 = sbr.rel (%p321) target = $region16
        $region15: #{tpu_custom_call.1} parent=11 // pred_region
          _
        $region16: #{tpu_custom_call.1} parent=11 // pred_fallthru
          _
        // Predicated region
        $region17: #{tpu_custom_call.1} parent=11 // pred_check
          %p324 = pneg %p91
        $region18: #{tpu_custom_call.1} parent=11 // pred_check_branch
          %326 = sbr.rel (%p324) target = $region20
        $region19: #{tpu_custom_call.1} parent=11 // pred_region
          %s328 = ssub.s32 512, 512
          %329 = vsyncadd [#allocation4], %s328
          %s330 = sshll.u32 [#allocation3], 4
          %s331 = int_to_ptr.vmem [resolvable:$true] %s330
          %336 = dma.hbm_to_vmem [thread:$0]  %s2, 512, %s331, [#allocation4], 128, 128, 8
        $region20: #{tpu_custom_call.1} parent=11 // pred_fallthru
          _
        // Predicated region
        $region21: #{tpu_custom_call.1} parent=11 // pred_check
          %p337 = pneg %p112
        $region22: #{tpu_custom_call.1} parent=11 // pred_check_branch
          %339 = sbr.rel (%p337) target = $region24
        $region23: #{tpu_custom_call.1} parent=11 // pred_region
          _
        $region24: #{tpu_custom_call.1} parent=11 // pred_fallthru
          _
        // Predicated region
        $region25: #{tpu_custom_call.1} parent=11 // pred_check
          %p340 = pneg %p133
        $region26: #{tpu_custom_call.1} parent=11 // pred_check_branch
          %342 = sbr.rel (%p340) target = $region28
        $region27: #{tpu_custom_call.1} parent=11 // pred_region
          _
        $region28: #{tpu_custom_call.1} parent=11 // pred_fallthru
          _
        // Predicated region
        $region29: #{tpu_custom_call.1} parent=11 // pred_check
          %p343 = pneg %p154
        $region30: #{tpu_custom_call.1} parent=11 // pred_check_branch
          %345 = sbr.rel (%p343) target = $region32
        $region31: #{tpu_custom_call.1} parent=11 // pred_region
          _
        $region32: #{tpu_custom_call.1} parent=11 // pred_fallthru
          _
        // Predicated region
        $region33: #{tpu_custom_call.1} parent=11 // pred_check
          %p346 = pneg %p175
        $region34: #{tpu_custom_call.1} parent=11 // pred_check_branch
          %348 = sbr.rel (%p346) target = $region36
        $region35: #{tpu_custom_call.1} parent=11 // pred_region
          %s350 = ssub.s32 768, 768
          %351 = vsyncadd [#allocation7], %s350
          %s352 = sshll.u32 [#allocation6], 4
          %s353 = int_to_ptr.vmem [resolvable:$true] %s352
          %358 = dma.hbm_to_vmem [thread:$0]  %s6, 768, %s353, [#allocation7], 192, 192, 12
        $region36: #{tpu_custom_call.1} parent=11 // pred_fallthru
          _
        // Predicated region
        $region37: #{tpu_custom_call.1} parent=11 // pred_check
          %p359 = pneg %p196
        $region38: #{tpu_custom_call.1} parent=11 // pred_check_branch
          %361 = sbr.rel (%p359) target = $region40
        $region39: #{tpu_custom_call.1} parent=11 // pred_region
          _
        $region40: #{tpu_custom_call.1} parent=11 // pred_fallthru
          _
        // Predicated region
        $region41: #{tpu_custom_call.1} parent=11 // pred_check
          %p362 = pneg %p217
        $region42: #{tpu_custom_call.1} parent=11 // pred_check_branch
          %364 = sbr.rel (%p362) target = $region44
        $region43: #{tpu_custom_call.1} parent=11 // pred_region
          %s366 = ssub.s32 768, 768
          %367 = vsyncadd [#allocation7], %s366
          %s368 = sshll.u32 [#allocation8], 4
          %s369 = int_to_ptr.vmem [resolvable:$true] %s368
          %374 = dma.hbm_to_vmem [thread:$0]  %s8, 768, %s369, [#allocation7], 192, 192, 12
        $region44: #{tpu_custom_call.1} parent=11 // pred_fallthru
          _
        // Predicated region
        $region45: #{tpu_custom_call.1} parent=11 // pred_check
          %p375 = pneg %p238
        $region46: #{tpu_custom_call.1} parent=11 // pred_check_branch
          %377 = sbr.rel (%p375) target = $region48
        $region47: #{tpu_custom_call.1} parent=11 // pred_region
          _
        $region48: #{tpu_custom_call.1} parent=11 // pred_fallthru
          _
        // Predicated region
        $region49: #{tpu_custom_call.1} parent=11 // pred_check
          %p378 = pneg %p259
        $region50: #{tpu_custom_call.1} parent=11 // pred_check_branch
          %380 = sbr.rel (%p378) target = $region52
        $region51: #{tpu_custom_call.1} parent=11 // pred_region
          _
        $region52: #{tpu_custom_call.1} parent=11 // pred_fallthru
          _
        // Predicated region
        $region53: #{tpu_custom_call.1} parent=11 // pred_check
          %p381 = pneg %p280
        $region54: #{tpu_custom_call.1} parent=11 // pred_check_branch
          %383 = sbr.rel (%p381) target = $region56
        $region55: #{tpu_custom_call.1} parent=11 // pred_region
          _
        $region56: #{tpu_custom_call.1} parent=11 // pred_fallthru
          _
      $region12: #{tpu_custom_call.1} parent=5 // pred_fallthru
        _
      %p384 = scmp.lt.s32.totalorder %s23, 2
      // Predicated region
      $region57: #{tpu_custom_call.1} parent=5 // pred_check
        %p385 = pneg %p384
      $region58: #{tpu_custom_call.1} parent=5 // pred_check_branch
        %387 = sbr.rel (%p385) target = $region60
      $region59: #{tpu_custom_call.1} parent=5 // pred_region
        // Predicated region
        $region61: #{tpu_custom_call.1} parent=59 // pred_check
          %p388 = pneg %p43
        $region62: #{tpu_custom_call.1} parent=59 // pred_check_branch
          %390 = sbr.rel (%p388) target = $region64
        $region63: #{tpu_custom_call.1} parent=59 // pred_region
          %p391 = scmp.lt.s32.totalorder %s23, 1
          %s392 = scalar_select %p391, %s23, 1
          %s393 = smul.addr %s392, 6
          %s394 = smul.addr %s393, 8
          %s395 = scalar_lea.vmem %s0, %s394
        $region64: #{tpu_custom_call.1} parent=59 // pred_fallthru
          _
      $region60: #{tpu_custom_call.1} parent=5 // pred_fallthru
        _
      %p396 = scmp.le.s32.totalorder 1, %s23
      %p397 = scmp.lt.s32.totalorder %s23, 3
      %p398 = pnand %p396, %p397
      %p399 = pneg %p398
      // Predicated region
      $region65: #{tpu_custom_call.1} parent=5 // pred_check
        _
      $region66: #{tpu_custom_call.1} parent=5 // pred_check_branch
        %401 = sbr.rel (%p398) target = $region68
      $region67: #{tpu_custom_call.1} parent=5 // pred_region
        %s402 = ssub.s32 %s23, 1
        // Predicated region
        $region69: #{tpu_custom_call.1} parent=67 // pred_check
          %p403 = pneg %p91
        $region70: #{tpu_custom_call.1} parent=67 // pred_check_branch
          %405 = sbr.rel (%p403) target = $region72
        $region71: #{tpu_custom_call.1} parent=67 // pred_region
          %406 = dma.done [#allocation4], 512
        $region72: #{tpu_custom_call.1} parent=67 // pred_fallthru
          _
        // Predicated region
        $region73: #{tpu_custom_call.1} parent=67 // pred_check
          %p407 = pneg %p175
        $region74: #{tpu_custom_call.1} parent=67 // pred_check_branch
          %409 = sbr.rel (%p407) target = $region76
        $region75: #{tpu_custom_call.1} parent=67 // pred_region
          %410 = dma.done [#allocation7], 768
        $region76: #{tpu_custom_call.1} parent=67 // pred_fallthru
          _
        // Predicated region
        $region77: #{tpu_custom_call.1} parent=67 // pred_check
          %p411 = pneg %p217
        $region78: #{tpu_custom_call.1} parent=67 // pred_check_branch
          %413 = sbr.rel (%p411) target = $region80
        $region79: #{tpu_custom_call.1} parent=67 // pred_region
          %414 = dma.done [#allocation7], 768
        $region80: #{tpu_custom_call.1} parent=67 // pred_fallthru
          _
        %p415 = scmp.lt.s32.totalorder %s28, 1
        %s416 = scalar_select %p415, %s28, 1
        %s417 = smul.addr %s416, 6
        %s418 = smul.addr %s417, 8
        %s419 = scalar_lea.vmem %s0, %s418
        %p420 = pneg %p49
        %p421 = pneg %p46
        %p422 = pneg %p70
        %p423 = pneg %p67
        %p424 = pneg %p91
        %p425 = pneg %p88
        %p426 = pneg %p112
        %p427 = pneg %p109
        %p428 = pneg %p133
        %p429 = pneg %p130
        %p430 = pneg %p154
        %p431 = pneg %p151
        %p432 = pneg %p175
        %p433 = pneg %p172
        %p434 = pneg %p196
        %p435 = pneg %p193
        %p436 = pneg %p217
        %p437 = pneg %p214
        %p438 = pneg %p238
        %p439 = pneg %p235
        %p440 = pneg %p259
        %p441 = pneg %p256
        %p442 = pneg %p280
        %p443 = pneg %p277
        %p444 = pneg %p306
        %p445 = pneg %p303
        %s446 = sand.u32 %s293, 1
        %s447 = scalar_lea.sflag [#allocation5], %s446
        %s448 = sand.u32 %s293, 1
        %s449 = smul.addr %s448, 6
        %s450 = scalar_lea.vmem [#allocation9], %s449
        %p451 = scmp.lt.s32.totalorder %s28, 1
        %s452 = scalar_select %p451, %s28, 1
        %s453 = smul.addr %s452, 6
        %s454 = smul.addr %s453, 8
        %s455 = scalar_lea.vmem %s0, %s454
        %v457 = vld [vmem:[%s1] sm:$0x7]
        %v458 = vld [vmem:[%s455] sm:$0xff]
        %v459 = vld [vmem:[%s455 + $0x8] sm:$0xff]
        %v460 = vld [vmem:[%s455 + $0x10] sm:$0xff]
        %v461 = vld [vmem:[%s455 + $0x18] sm:$0xff]
        %v462 = vld [vmem:[%s455 + $0x20] sm:$0xff]
        %v463 = vld [vmem:[%s455 + $0x28] sm:$0xff]
        %464 = vrot.lane.b32.xlu0 %v458, 19
        %v465 = vpop.permute.xlu0 %464
        %466 = vrot.lane.b32.xlu0 %v461, 19
        %v467 = vpop.permute.xlu0 %466
        %468 = vrot.lane.b32.xlu0 %v459, 19
        %v469 = vpop.permute.xlu0 %468
        %470 = vrot.lane.b32.xlu0 %v462, 19
        %v471 = vpop.permute.xlu0 %470
        %472 = vrot.lane.b32.xlu0 %v460, 19
        %v473 = vpop.permute.xlu0 %472
        %474 = vrot.lane.b32.xlu0 %v463, 19
        %v475 = vpop.permute.xlu0 %474
        %v476 = vlaneseq
        %v477 = vand.u32 %v476, 127
        %vm478 = vcmp.lt.s32.totalorder %v477, 19
        %v479 = vsel %vm478, %v469, %v473
        %v480 = vsel %vm478, %v471, %v475
        %v481 = vsel %vm478, %v465, %v469
        %v482 = vsel %vm478, %v467, %v471
        %v483 = vsel %vm478, %v473, %v465
        %v484 = vsel %vm478, %v475, %v467
        %v485 = vpack.c.bf16 %v484, %v483
        %v486 = vpack.c.bf16 %v482, %v481
        %v487 = vpack.c.bf16 %v480, %v479
        %488 = vst [vmem:[#allocation2] sm:$0xff] %v485
        %489 = vst [vmem:[#allocation2 + $0x8] sm:$0xff] %v486
        %490 = vst [vmem:[#allocation2 + $0x10] sm:$0xff] %v487
        %491 = vrot.lane.b32.xlu0 %v458, 18
        %v492 = vpop.permute.xlu0 %491
        %493 = vrot.lane.b32.xlu0 %v461, 18
        %v494 = vpop.permute.xlu0 %493
        %495 = vrot.lane.b32.xlu0 %v459, 18
        %v496 = vpop.permute.xlu0 %495
        %497 = vrot.lane.b32.xlu0 %v462, 18
        %v498 = vpop.permute.xlu0 %497
        %499 = vrot.lane.b32.xlu0 %v460, 18
        %v500 = vpop.permute.xlu0 %499
        %501 = vrot.lane.b32.xlu0 %v463, 18
        %v502 = vpop.permute.xlu0 %501
        %vm503 = vcmp.lt.s32.totalorder %v477, 18
        %v504 = vsel %vm503, %v496, %v500
        %v505 = vsel %vm503, %v498, %v502
        %v506 = vsel %vm503, %v492, %v496
        %v507 = vsel %vm503, %v494, %v498
        %v508 = vsel %vm503, %v500, %v492
        %v509 = vsel %vm503, %v502, %v494
        %v510 = vpack.c.bf16 %v509, %v508
        %v511 = vpack.c.bf16 %v507, %v506
        %v512 = vpack.c.bf16 %v505, %v504
        %513 = vst [vmem:[#allocation2 + $0x18] sm:$0xff] %v510
        %514 = vst [vmem:[#allocation2 + $0x20] sm:$0xff] %v511
        %515 = vst [vmem:[#allocation2 + $0x28] sm:$0xff] %v512
        %516 = vrot.lane.b32.xlu0 %v458, 17
        %v517 = vpop.permute.xlu0 %516
        %518 = vrot.lane.b32.xlu0 %v461, 17
        %v519 = vpop.permute.xlu0 %518
        %520 = vrot.lane.b32.xlu0 %v459, 17
        %v521 = vpop.permute.xlu0 %520
        %522 = vrot.lane.b32.xlu0 %v462, 17
        %v523 = vpop.permute.xlu0 %522
        %524 = vrot.lane.b32.xlu0 %v460, 17
        %v525 = vpop.permute.xlu0 %524
        %526 = vrot.lane.b32.xlu0 %v463, 17
        %v527 = vpop.permute.xlu0 %526
        %vm528 = vcmp.lt.s32.totalorder %v477, 17
        %v529 = vsel %vm528, %v521, %v525
        %v530 = vsel %vm528, %v523, %v527
        %v531 = vsel %vm528, %v517, %v521
        %v532 = vsel %vm528, %v519, %v523
        %v533 = vsel %vm528, %v525, %v517
        %v534 = vsel %vm528, %v527, %v519
        %v535 = vpack.c.bf16 %v534, %v533
        %v536 = vpack.c.bf16 %v532, %v531
        %v537 = vpack.c.bf16 %v530, %v529
        %538 = vst [vmem:[#allocation2 + $0x30] sm:$0xff] %v535
        %539 = vst [vmem:[#allocation2 + $0x38] sm:$0xff] %v536
        %540 = vst [vmem:[#allocation2 + $0x40] sm:$0xff] %v537
        %541 = vrot.lane.b32.xlu0 %v458, 1
        %v542 = vpop.permute.xlu0 %541
        %543 = vrot.lane.b32.xlu0 %v461, 1
        %v544 = vpop.permute.xlu0 %543
        %545 = vrot.lane.b32.xlu0 %v459, 1
        %v546 = vpop.permute.xlu0 %545
        %547 = vrot.lane.b32.xlu0 %v462, 1
        %v548 = vpop.permute.xlu0 %547
        %549 = vrot.lane.b32.xlu0 %v460, 1
        %v550 = vpop.permute.xlu0 %549
        %551 = vrot.lane.b32.xlu0 %v463, 1
        %v552 = vpop.permute.xlu0 %551
        %vm553 = vcmp.lt.s32.totalorder %v477, 1
        %v554 = vsel %vm553, %v546, %v550
        %v555 = vsel %vm553, %v548, %v552
        %v556 = vsel %vm553, %v542, %v546
        %v557 = vsel %vm553, %v544, %v548
        %v558 = vsel %vm553, %v550, %v542
        %v559 = vsel %vm553, %v552, %v544
        %v560 = vpack.c.bf16 %v559, %v558
        %v561 = vpack.c.bf16 %v557, %v556
        %v562 = vpack.c.bf16 %v555, %v554
        %563 = vst [vmem:[#allocation2 + $0x48] sm:$0xff] %v560
        %564 = vst [vmem:[#allocation2 + $0x50] sm:$0xff] %v561
        %565 = vst [vmem:[#allocation2 + $0x58] sm:$0xff] %v562
        %v566 = vpack.c.bf16 %v461, %v458
        %v567 = vpack.c.bf16 %v462, %v459
        %v568 = vpack.c.bf16 %v463, %v460
        %569 = vst [vmem:[#allocation2 + $0x60] sm:$0xff] %v566
        %570 = vst [vmem:[#allocation2 + $0x68] sm:$0xff] %v567
        %571 = vst [vmem:[#allocation2 + $0x70] sm:$0xff] %v568
        %572 = vrot.lane.b32.xlu0 %v458, 127
        %v573 = vpop.permute.xlu0 %572
        %574 = vrot.lane.b32.xlu0 %v461, 127
        %v575 = vpop.permute.xlu0 %574
        %576 = vrot.lane.b32.xlu0 %v459, 127
        %v577 = vpop.permute.xlu0 %576
        %578 = vrot.lane.b32.xlu0 %v462, 127
        %v579 = vpop.permute.xlu0 %578
        %580 = vrot.lane.b32.xlu0 %v460, 127
        %v581 = vpop.permute.xlu0 %580
        %582 = vrot.lane.b32.xlu0 %v463, 127
        %v583 = vpop.permute.xlu0 %582
        %vm584 = vcmp.lt.s32.totalorder %v477, 127
        %v585 = vsel %vm584, %v577, %v581
        %v586 = vsel %vm584, %v579, %v583
        %v587 = vsel %vm584, %v573, %v577
        %v588 = vsel %vm584, %v575, %v579
        %v589 = vsel %vm584, %v581, %v573
        %v590 = vsel %vm584, %v583, %v575
        %v591 = vpack.c.bf16 %v588, %v587
        %v592 = vpack.c.bf16 %v586, %v585
        %v593 = vpack.c.bf16 %v590, %v589
        %594 = vst [vmem:[#allocation2 + $0x78] sm:$0xff] %v591
        %595 = vst [vmem:[#allocation2 + $0x80] sm:$0xff] %v592
        %596 = vst [vmem:[#allocation2 + $0x88] sm:$0xff] %v593
        %597 = vrot.lane.b32.xlu0 %v458, 111
        %v598 = vpop.permute.xlu0 %597
        %599 = vrot.lane.b32.xlu0 %v461, 111
        %v600 = vpop.permute.xlu0 %599
        %601 = vrot.lane.b32.xlu0 %v459, 111
        %v602 = vpop.permute.xlu0 %601
        %603 = vrot.lane.b32.xlu0 %v462, 111
        %v604 = vpop.permute.xlu0 %603
        %605 = vrot.lane.b32.xlu0 %v460, 111
        %v606 = vpop.permute.xlu0 %605
        %607 = vrot.lane.b32.xlu0 %v463, 111
        %v608 = vpop.permute.xlu0 %607
        %vm609 = vcmp.lt.s32.totalorder %v477, 111
        %v610 = vsel %vm609, %v602, %v606
        %v611 = vsel %vm609, %v604, %v608
        %v612 = vsel %vm609, %v598, %v602
        %v613 = vsel %vm609, %v600, %v604
        %v614 = vsel %vm609, %v606, %v598
        %v615 = vsel %vm609, %v608, %v600
        %v616 = vpack.c.bf16 %v613, %v612
        %v617 = vpack.c.bf16 %v611, %v610
        %v618 = vpack.c.bf16 %v615, %v614
        %619 = vst [vmem:[#allocation2 + $0x90] sm:$0xff] %v616
        %620 = vst [vmem:[#allocation2 + $0x98] sm:$0xff] %v617
        %621 = vst [vmem:[#allocation2 + $0xa0] sm:$0xff] %v618
        %622 = vrot.lane.b32.xlu0 %v458, 110
        %v623 = vpop.permute.xlu0 %622
        %624 = vrot.lane.b32.xlu0 %v461, 110
        %v625 = vpop.permute.xlu0 %624
        %626 = vrot.lane.b32.xlu0 %v459, 110
        %v627 = vpop.permute.xlu0 %626
        %628 = vrot.lane.b32.xlu0 %v462, 110
        %v629 = vpop.permute.xlu0 %628
        %630 = vrot.lane.b32.xlu0 %v460, 110
        %v631 = vpop.permute.xlu0 %630
        %632 = vrot.lane.b32.xlu0 %v463, 110
        %v633 = vpop.permute.xlu0 %632
        %vm634 = vcmp.lt.s32.totalorder %v477, 110
        %v635 = vsel %vm634, %v627, %v631
        %v636 = vsel %vm634, %v629, %v633
        %v637 = vsel %vm634, %v623, %v627
        %v638 = vsel %vm634, %v625, %v629
        %v639 = vsel %vm634, %v631, %v623
        %v640 = vsel %vm634, %v633, %v625
        %v641 = vpack.c.bf16 %v638, %v637
        %v642 = vpack.c.bf16 %v636, %v635
        %v643 = vpack.c.bf16 %v640, %v639
        %644 = vst [vmem:[#allocation2 + $0xa8] sm:$0xff] %v641
        %645 = vst [vmem:[#allocation2 + $0xb0] sm:$0xff] %v642
        %646 = vst [vmem:[#allocation2 + $0xb8] sm:$0xff] %v643
        %647 = vrot.lane.b32.xlu0 %v458, 109
        %v648 = vpop.permute.xlu0 %647
        %649 = vrot.lane.b32.xlu0 %v461, 109
        %v650 = vpop.permute.xlu0 %649
        %651 = vrot.lane.b32.xlu0 %v459, 109
        %v652 = vpop.permute.xlu0 %651
        %653 = vrot.lane.b32.xlu0 %v462, 109
        %v654 = vpop.permute.xlu0 %653
        %655 = vrot.lane.b32.xlu0 %v460, 109
        %v656 = vpop.permute.xlu0 %655
        %657 = vrot.lane.b32.xlu0 %v463, 109
        %v658 = vpop.permute.xlu0 %657
        %vm659 = vcmp.lt.s32.totalorder %v477, 109
        %v660 = vsel %vm659, %v652, %v656
        %v661 = vsel %vm659, %v654, %v658
        %v662 = vsel %vm659, %v648, %v652
        %v663 = vsel %vm659, %v650, %v654
        %v664 = vsel %vm659, %v656, %v648
        %v665 = vsel %vm659, %v658, %v650
        %v666 = vpack.c.bf16 %v663, %v662
        %v667 = vpack.c.bf16 %v661, %v660
        %v668 = vpack.c.bf16 %v665, %v664
        %669 = vst [vmem:[#allocation2 + $0xc0] sm:$0xff] %v666
        %670 = vst [vmem:[#allocation2 + $0xc8] sm:$0xff] %v667
        %671 = vst [vmem:[#allocation2 + $0xd0] sm:$0xff] %v668
        %v672 = vld [vmem:[#allocation3] sm:$0xff]
        %v673 = vld [vmem:[#allocation3 + $0x8] sm:$0xff]
        %v674 = vld [vmem:[#allocation3 + $0x10] sm:$0xff]
        %v675 = vld [vmem:[#allocation3 + $0x18] sm:$0xff]
        %v676 = vld [vmem:[#allocation2] sm:$0xff]
        %v677 = vld [vmem:[#allocation2 + $0x8] sm:$0xff]
        %v678 = vld [vmem:[#allocation2 + $0x10] sm:$0xff]
        %v679 = vld [vmem:[#allocation2 + $0x18] sm:$0xff]
        %v680 = vld [vmem:[#allocation2 + $0x20] sm:$0xff]
        %v681 = vld [vmem:[#allocation2 + $0x28] sm:$0xff]
        %v682 = vld [vmem:[#allocation2 + $0x30] sm:$0xff]
        %v683 = vld [vmem:[#allocation2 + $0x38] sm:$0xff]
        %v684 = vld [vmem:[#allocation2 + $0x40] sm:$0xff]
        %v685 = vld [vmem:[#allocation2 + $0x48] sm:$0xff]
        %v686 = vld [vmem:[#allocation2 + $0x50] sm:$0xff]
        %v687 = vld [vmem:[#allocation2 + $0x58] sm:$0xff]
        %v688 = vld [vmem:[#allocation2 + $0x60] sm:$0xff]
        %v689 = vld [vmem:[#allocation2 + $0x68] sm:$0xff]
        %v690 = vld [vmem:[#allocation2 + $0x70] sm:$0xff]
        %v691 = vld [vmem:[#allocation2 + $0x78] sm:$0xff]
        %v692 = vld [vmem:[#allocation2 + $0x80] sm:$0xff]
        %v693 = vld [vmem:[#allocation2 + $0x88] sm:$0xff]
        %v694 = vld [vmem:[#allocation2 + $0x90] sm:$0xff]
        %v695 = vld [vmem:[#allocation2 + $0x98] sm:$0xff]
        %v696 = vld [vmem:[#allocation2 + $0xa0] sm:$0xff]
        %v697 = vld [vmem:[#allocation2 + $0xa8] sm:$0xff]
        %v698 = vld [vmem:[#allocation2 + $0xb0] sm:$0xff]
        %v699 = vld [vmem:[#allocation2 + $0xb8] sm:$0xff]
        %v700 = vld [vmem:[#allocation2 + $0xc0] sm:$0xff]
        %v701 = vld [vmem:[#allocation2 + $0xc8] sm:$0xff]
        %v702 = vld [vmem:[#allocation2 + $0xd0] sm:$0xff]
        %v703 = vld [vmem:[%s3] sm:$0xff]
        %v704 = vld [vmem:[%s3 + $0x8] sm:$0xff]
        %v705 = vld [vmem:[%s3 + $0x10] sm:$0xff]
        %v706 = vld [vmem:[%s3 + $0x18] sm:$0xff]
        %708 = vset.pattern.permute.xlu0 0
        %709 = vperm.xlu0 %708, %v703
        %v710 = vpop.permute.xlu0 %709
        %713 = vset.pattern.permute.xlu0 0
        %714 = vperm.xlu0 %713, %v704
        %v715 = vpop.permute.xlu0 %714
        %718 = vset.pattern.permute.xlu0 0
        %719 = vperm.xlu0 %718, %v705
        %v720 = vpop.permute.xlu0 %719
        %723 = vset.pattern.permute.xlu0 0
        %724 = vperm.xlu0 %723, %v706
        %v725 = vpop.permute.xlu0 %724
        %v731 = vunpack.c.l.b16 %v672
        %v732 = vunpack.c.h.b16 %v672
        %v733 = vunpack.c.l.b16 %v673
        %v734 = vunpack.c.h.b16 %v673
        %v735 = vunpack.c.l.b16 %v674
        %v736 = vunpack.c.h.b16 %v674
        %v737 = vunpack.c.l.b16 %v675
        %v738 = vunpack.c.h.b16 %v675
        %v739 = vpack.c.b16 %v733, %v731
        %v740 = vpack.c.b16 %v734, %v732
        %v741 = vpack.c.b16 %v737, %v735
        %v742 = vpack.c.b16 %v738, %v736
        %vm745 = vcmask 130048
        %v747 = vsel %vm745, %v740, 0
        %v750 = vsel %vm745, %v742, 0
        %752 = vmatprep.subr.bf16.mxu0 %v677
        %753 = vmatpush1.bf16.msra.mxu0 %v676
        %754 = vmatprep.subr.bf16.mxu0 %v680
        %755 = vmatpush1.bf16.msra.mxu0 %v679
        %756 = vmatprep.subr.bf16.mxu0 %v683
        %757 = vmatpush1.bf16.msra.mxu0 %v682
        %758 = vmatprep.subr.bf16.mxu0 %v686
        %759 = vmatpush1.bf16.msra.mxu0 %v685
        %760 = vmatprep.subr.bf16.mxu0 %v689
        %761 = vmatpush1.bf16.msra.mxu0 %v688
        %762 = vmatprep.subr.bf16.mxu0 %v692
        %763 = vmatpush1.bf16.msra.mxu0 %v691
        %764 = vmatprep.subr.bf16.mxu0 %v695
        %765 = vmatpush1.bf16.msra.mxu0 %v694
        %766 = vmatprep.subr.bf16.mxu0 %v698
        %767 = vmatpush1.bf16.msra.mxu0 %v697
        %768 = vmatprep.subr.bf16.mxu0 %v701
        %769 = vmatpush1.bf16.msra.mxu0 %v700
        %770 = vmatprep.subr.bf16.mxu0 0
        %771 = vmatpush1.bf16.msra.mxu0 0
        %772 = vmatprep.subr.bf16.mxu0 0
        %773 = vmatpush1.bf16.msra.mxu0 0
        %774 = vmatprep.subr.bf16.mxu0 0
        %775 = vmatpush1.bf16.msra.mxu0 0
        %776 = vmatprep.subr.bf16.mxu0 0
        %777 = vmatpush1.bf16.msra.mxu0 0
        %778 = vmatprep.subr.bf16.mxu0 0
        %779 = vmatpush1.bf16.msra.mxu0 0
        %780 = vmatprep.subr.bf16.mxu0 0
        %781 = vmatpush1.bf16.msra.mxu0 0
        %782 = vmatprep.subr.bf16.mxu0 0
        %783 = vmatpush1.bf16.msra.mxu0 0
        %784 = vmatprep.mubr.bf16.mxu0 %v747
        %785 = vmatmul.mubr.bf16.gmra.mrb[0].mxu0 %v739
        %v786 = vpop.f32.mrb[0].mxu0
        %v787 = vadd.f32 %v710, %v786
        %v788 = vpop.f32.mrb[0].mxu0
        %v789 = vadd.f32 %v710, %v788
        %v790 = vpop.f32.mrb[0].mxu0
        %v791 = vadd.f32 %v715, %v790
        %v792 = vpop.f32.mrb[0].mxu0
        %v793 = vadd.f32 %v715, %v792
        %794 = vmatprep.mubr.bf16.mxu0 %v750
        %795 = vmatmul.mubr.bf16.gmra.mrb[0].mxu0 %v741
        %v796 = vpop.f32.mrb[0].mxu0
        %v797 = vadd.f32 %v720, %v796
        %v798 = vpop.f32.mrb[0].mxu0
        %v799 = vadd.f32 %v720, %v798
        %v800 = vpop.f32.mrb[0].mxu0
        %v801 = vadd.f32 %v725, %v800
        %v802 = vpop.f32.mrb[0].mxu0
        %v803 = vadd.f32 %v725, %v802
        %804 = vdwg.mxu0
        %805 = vmatprep.subr.bf16.mxu0 0
        %806 = vmatpush1.bf16.msra.mxu0 %v678
        %807 = vmatprep.subr.bf16.mxu0 0
        %808 = vmatpush1.bf16.msra.mxu0 %v681
        %809 = vmatprep.subr.bf16.mxu0 0
        %810 = vmatpush1.bf16.msra.mxu0 %v684
        %811 = vmatprep.subr.bf16.mxu0 0
        %812 = vmatpush1.bf16.msra.mxu0 %v687
        %813 = vmatprep.subr.bf16.mxu0 0
        %814 = vmatpush1.bf16.msra.mxu0 %v690
        %815 = vmatprep.subr.bf16.mxu0 0
        %816 = vmatpush1.bf16.msra.mxu0 %v693
        %817 = vmatprep.subr.bf16.mxu0 0
        %818 = vmatpush1.bf16.msra.mxu0 %v696
        %819 = vmatprep.subr.bf16.mxu0 0
        %820 = vmatpush1.bf16.msra.mxu0 %v699
        %821 = vmatprep.subr.bf16.mxu0 0
        %822 = vmatpush1.bf16.msra.mxu0 %v702
        %823 = vmatprep.subr.bf16.mxu0 0
        %824 = vmatpush1.bf16.msra.mxu0 0
        %825 = vmatprep.subr.bf16.mxu0 0
        %826 = vmatpush1.bf16.msra.mxu0 0
        %827 = vmatprep.subr.bf16.mxu0 0
        %828 = vmatpush1.bf16.msra.mxu0 0
        %829 = vmatprep.subr.bf16.mxu0 0
        %830 = vmatpush1.bf16.msra.mxu0 0
        %831 = vmatprep.subr.bf16.mxu0 0
        %832 = vmatpush1.bf16.msra.mxu0 0
        %833 = vmatprep.subr.bf16.mxu0 0
        %834 = vmatpush1.bf16.msra.mxu0 0
        %835 = vmatprep.subr.bf16.mxu0 0
        %836 = vmatpush1.bf16.msra.mxu0 0
        %837 = vmatprep.mubr.bf16.mxu0 %v747
        %838 = vmatmul.mubr.bf16.gmra.mrb[0].mxu0 %v739
        %v839 = vpop.f32.mrb[0].mxu0
        %v840 = vadd.f32 %v710, %v839
        %v841 = vpop.f32.mrb[0].mxu0
        %v842 = vpop.f32.mrb[0].mxu0
        %v843 = vadd.f32 %v715, %v842
        %v844 = vpop.f32.mrb[0].mxu0
        %845 = vmatprep.mubr.bf16.mxu0 %v750
        %846 = vmatmul.mubr.bf16.gmra.mrb[0].mxu0 %v741
        %v847 = vpop.f32.mrb[0].mxu0
        %v848 = vadd.f32 %v720, %v847
        %v849 = vpop.f32.mrb[0].mxu0
        %v850 = vpop.f32.mrb[0].mxu0
        %v851 = vadd.f32 %v725, %v850
        %v852 = vpop.f32.mrb[0].mxu0
        %853 = vdwg.mxu0
        %v854 = vtanh.pop %v787
        %v855 = vtanh.pop %v789
        %v856 = vtanh.pop %v840
        %v857 = vtanh.pop %v791
        %v858 = vtanh.pop %v793
        %v859 = vtanh.pop %v843
        %v860 = vtanh.pop %v797
        %v861 = vtanh.pop %v799
        %v862 = vtanh.pop %v848
        %v863 = vtanh.pop %v801
        %v864 = vtanh.pop %v803
        %v865 = vtanh.pop %v851
        %v867 = vlaneseq
        %v868 = vshrl.u32 %v867, 7
        %v869 = vsub.s32 0, %v868
        %v870 = vrot.slane %v457, %v869
        %v871 = vlaneseq
        %v872 = vshrl.u32 %v871, 7
        %v873 = vsub.s32 1, %v872
        %v874 = vrot.slane %v457, %v873
        %v875 = vlaneseq
        %v876 = vshrl.u32 %v875, 7
        %v877 = vsub.s32 2, %v876
        %v878 = vrot.slane %v457, %v877
        %v882 = vmul.f32 %v870, %v854
        %v883 = vmul.f32 %v874, %v855
        %v884 = vmul.f32 %v878, %v856
        %v885 = vmul.f32 %v870, %v857
        %v886 = vmul.f32 %v874, %v858
        %v887 = vmul.f32 %v878, %v859
        %v888 = vmul.f32 %v870, %v860
        %v889 = vmul.f32 %v874, %v861
        %v890 = vmul.f32 %v878, %v862
        %v891 = vmul.f32 %v870, %v863
        %v892 = vmul.f32 %v874, %v864
        %v893 = vmul.f32 %v878, %v865
        %894 = vrot.lane.b32.xlu0 %v882, 19
        %v895 = vpop.permute.xlu0 %894
        %896 = vrot.lane.b32.xlu0 %v885, 19
        %v897 = vpop.permute.xlu0 %896
        %898 = vrot.lane.b32.xlu0 %v888, 19
        %v899 = vpop.permute.xlu0 %898
        %900 = vrot.lane.b32.xlu0 %v891, 19
        %v901 = vpop.permute.xlu0 %900
        %902 = vrot.lane.b32.xlu0 %v883, 19
        %v903 = vpop.permute.xlu0 %902
        %904 = vrot.lane.b32.xlu0 %v886, 19
        %v905 = vpop.permute.xlu0 %904
        %906 = vrot.lane.b32.xlu0 %v889, 19
        %v907 = vpop.permute.xlu0 %906
        %908 = vrot.lane.b32.xlu0 %v892, 19
        %v909 = vpop.permute.xlu0 %908
        %910 = vrot.lane.b32.xlu0 %v884, 19
        %v911 = vpop.permute.xlu0 %910
        %912 = vrot.lane.b32.xlu0 %v887, 19
        %v913 = vpop.permute.xlu0 %912
        %914 = vrot.lane.b32.xlu0 %v890, 19
        %v915 = vpop.permute.xlu0 %914
        %916 = vrot.lane.b32.xlu0 %v893, 19
        %v917 = vpop.permute.xlu0 %916
        %v918 = vsel %vm478, %v903, %v911
        %v919 = vsel %vm478, %v905, %v913
        %v920 = vsel %vm478, %v907, %v915
        %v921 = vsel %vm478, %v909, %v917
        %v922 = vsel %vm478, %v895, %v903
        %v923 = vsel %vm478, %v897, %v905
        %v924 = vsel %vm478, %v899, %v907
        %v925 = vsel %vm478, %v901, %v909
        %v926 = vsel %vm478, %v911, %v895
        %v927 = vsel %vm478, %v913, %v897
        %v928 = vsel %vm478, %v915, %v899
        %v929 = vsel %vm478, %v917, %v901
        %v930 = vpack.c.bf16 %v927, %v926
        %v931 = vpack.c.bf16 %v923, %v922
        %v932 = vpack.c.bf16 %v919, %v918
        %v933 = vpack.c.bf16 %v929, %v928
        %v934 = vpack.c.bf16 %v925, %v924
        %v935 = vpack.c.bf16 %v921, %v920
        %936 = vst [vmem:[#allocation2] sm:$0xff] %v930
        %937 = vst [vmem:[#allocation2 + $0x8] sm:$0xff] %v931
        %938 = vst [vmem:[#allocation2 + $0x10] sm:$0xff] %v932
        %939 = vst [vmem:[#allocation2 + $0x18] sm:$0xff] %v933
        %940 = vst [vmem:[#allocation2 + $0x20] sm:$0xff] %v934
        %941 = vst [vmem:[#allocation2 + $0x28] sm:$0xff] %v935
        %942 = vrot.lane.b32.xlu0 %v882, 18
        %v943 = vpop.permute.xlu0 %942
        %944 = vrot.lane.b32.xlu0 %v885, 18
        %v945 = vpop.permute.xlu0 %944
        %946 = vrot.lane.b32.xlu0 %v888, 18
        %v947 = vpop.permute.xlu0 %946
        %948 = vrot.lane.b32.xlu0 %v891, 18
        %v949 = vpop.permute.xlu0 %948
        %950 = vrot.lane.b32.xlu0 %v883, 18
        %v951 = vpop.permute.xlu0 %950
        %952 = vrot.lane.b32.xlu0 %v886, 18
        %v953 = vpop.permute.xlu0 %952
        %954 = vrot.lane.b32.xlu0 %v889, 18
        %v955 = vpop.permute.xlu0 %954
        %956 = vrot.lane.b32.xlu0 %v892, 18
        %v957 = vpop.permute.xlu0 %956
        %958 = vrot.lane.b32.xlu0 %v884, 18
        %v959 = vpop.permute.xlu0 %958
        %960 = vrot.lane.b32.xlu0 %v887, 18
        %v961 = vpop.permute.xlu0 %960
        %962 = vrot.lane.b32.xlu0 %v890, 18
        %v963 = vpop.permute.xlu0 %962
        %964 = vrot.lane.b32.xlu0 %v893, 18
        %v965 = vpop.permute.xlu0 %964
        %v966 = vsel %vm503, %v951, %v959
        %v967 = vsel %vm503, %v953, %v961
        %v968 = vsel %vm503, %v955, %v963
        %v969 = vsel %vm503, %v957, %v965
        %v970 = vsel %vm503, %v943, %v951
        %v971 = vsel %vm503, %v945, %v953
        %v972 = vsel %vm503, %v947, %v955
        %v973 = vsel %vm503, %v949, %v957
        %v974 = vsel %vm503, %v959, %v943
        %v975 = vsel %vm503, %v961, %v945
        %v976 = vsel %vm503, %v963, %v947
        %v977 = vsel %vm503, %v965, %v949
        %v978 = vpack.c.bf16 %v975, %v974
        %v979 = vpack.c.bf16 %v971, %v970
        %v980 = vpack.c.bf16 %v967, %v966
        %v981 = vpack.c.bf16 %v977, %v976
        %v982 = vpack.c.bf16 %v973, %v972
        %v983 = vpack.c.bf16 %v969, %v968
        %984 = vst [vmem:[#allocation2 + $0x30] sm:$0xff] %v978
        %985 = vst [vmem:[#allocation2 + $0x38] sm:$0xff] %v979
        %986 = vst [vmem:[#allocation2 + $0x40] sm:$0xff] %v980
        %987 = vst [vmem:[#allocation2 + $0x48] sm:$0xff] %v981
        %988 = vst [vmem:[#allocation2 + $0x50] sm:$0xff] %v982
        %989 = vst [vmem:[#allocation2 + $0x58] sm:$0xff] %v983
        %990 = vrot.lane.b32.xlu0 %v882, 17
        %v991 = vpop.permute.xlu0 %990
        %992 = vrot.lane.b32.xlu0 %v885, 17
        %v993 = vpop.permute.xlu0 %992
        %994 = vrot.lane.b32.xlu0 %v888, 17
        %v995 = vpop.permute.xlu0 %994
        %996 = vrot.lane.b32.xlu0 %v891, 17
        %v997 = vpop.permute.xlu0 %996
        %998 = vrot.lane.b32.xlu0 %v883, 17
        %v999 = vpop.permute.xlu0 %998
        %1000 = vrot.lane.b32.xlu0 %v886, 17
        %v1001 = vpop.permute.xlu0 %1000
        %1002 = vrot.lane.b32.xlu0 %v889, 17
        %v1003 = vpop.permute.xlu0 %1002
        %1004 = vrot.lane.b32.xlu0 %v892, 17
        %v1005 = vpop.permute.xlu0 %1004
        %1006 = vrot.lane.b32.xlu0 %v884, 17
        %v1007 = vpop.permute.xlu0 %1006
        %1008 = vrot.lane.b32.xlu0 %v887, 17
        %v1009 = vpop.permute.xlu0 %1008
        %1010 = vrot.lane.b32.xlu0 %v890, 17
        %v1011 = vpop.permute.xlu0 %1010
        %1012 = vrot.lane.b32.xlu0 %v893, 17
        %v1013 = vpop.permute.xlu0 %1012
        %v1014 = vsel %vm528, %v999, %v1007
        %v1015 = vsel %vm528, %v1001, %v1009
        %v1016 = vsel %vm528, %v1003, %v1011
        %v1017 = vsel %vm528, %v1005, %v1013
        %v1018 = vsel %vm528, %v991, %v999
        %v1019 = vsel %vm528, %v993, %v1001
        %v1020 = vsel %vm528, %v995, %v1003
        %v1021 = vsel %vm528, %v997, %v1005
        %v1022 = vsel %vm528, %v1007, %v991
        %v1023 = vsel %vm528, %v1009, %v993
        %v1024 = vsel %vm528, %v1011, %v995
        %v1025 = vsel %vm528, %v1013, %v997
        %v1026 = vpack.c.bf16 %v1023, %v1022
        %v1027 = vpack.c.bf16 %v1019, %v1018
        %v1028 = vpack.c.bf16 %v1015, %v1014
        %v1029 = vpack.c.bf16 %v1025, %v1024
        %v1030 = vpack.c.bf16 %v1021, %v1020
        %v1031 = vpack.c.bf16 %v1017, %v1016
        %1032 = vst [vmem:[#allocation2 + $0x60] sm:$0xff] %v1026
        %1033 = vst [vmem:[#allocation2 + $0x68] sm:$0xff] %v1027
        %1034 = vst [vmem:[#allocation2 + $0x70] sm:$0xff] %v1028
        %1035 = vst [vmem:[#allocation2 + $0x78] sm:$0xff] %v1029
        %1036 = vst [vmem:[#allocation2 + $0x80] sm:$0xff] %v1030
        %1037 = vst [vmem:[#allocation2 + $0x88] sm:$0xff] %v1031
        %1038 = vrot.lane.b32.xlu0 %v882, 1
        %v1039 = vpop.permute.xlu0 %1038
        %1040 = vrot.lane.b32.xlu0 %v885, 1
        %v1041 = vpop.permute.xlu0 %1040
        %1042 = vrot.lane.b32.xlu0 %v888, 1
        %v1043 = vpop.permute.xlu0 %1042
        %1044 = vrot.lane.b32.xlu0 %v891, 1
        %v1045 = vpop.permute.xlu0 %1044
        %1046 = vrot.lane.b32.xlu0 %v883, 1
        %v1047 = vpop.permute.xlu0 %1046
        %1048 = vrot.lane.b32.xlu0 %v886, 1
        %v1049 = vpop.permute.xlu0 %1048
        %1050 = vrot.lane.b32.xlu0 %v889, 1
        %v1051 = vpop.permute.xlu0 %1050
        %1052 = vrot.lane.b32.xlu0 %v892, 1
        %v1053 = vpop.permute.xlu0 %1052
        %1054 = vrot.lane.b32.xlu0 %v884, 1
        %v1055 = vpop.permute.xlu0 %1054
        %1056 = vrot.lane.b32.xlu0 %v887, 1
        %v1057 = vpop.permute.xlu0 %1056
        %1058 = vrot.lane.b32.xlu0 %v890, 1
        %v1059 = vpop.permute.xlu0 %1058
        %1060 = vrot.lane.b32.xlu0 %v893, 1
        %v1061 = vpop.permute.xlu0 %1060
        %v1062 = vsel %vm553, %v1047, %v1055
        %v1063 = vsel %vm553, %v1049, %v1057
        %v1064 = vsel %vm553, %v1051, %v1059
        %v1065 = vsel %vm553, %v1053, %v1061
        %v1066 = vsel %vm553, %v1039, %v1047
        %v1067 = vsel %vm553, %v1041, %v1049
        %v1068 = vsel %vm553, %v1043, %v1051
        %v1069 = vsel %vm553, %v1045, %v1053
        %v1070 = vsel %vm553, %v1055, %v1039
        %v1071 = vsel %vm553, %v1057, %v1041
        %v1072 = vsel %vm553, %v1059, %v1043
        %v1073 = vsel %vm553, %v1061, %v1045
        %v1074 = vpack.c.bf16 %v1071, %v1070
        %v1075 = vpack.c.bf16 %v1067, %v1066
        %v1076 = vpack.c.bf16 %v1063, %v1062
        %v1077 = vpack.c.bf16 %v1073, %v1072
        %v1078 = vpack.c.bf16 %v1069, %v1068
        %v1079 = vpack.c.bf16 %v1065, %v1064
        %1080 = vst [vmem:[#allocation2 + $0x90] sm:$0xff] %v1074
        %1081 = vst [vmem:[#allocation2 + $0x98] sm:$0xff] %v1075
        %1082 = vst [vmem:[#allocation2 + $0xa0] sm:$0xff] %v1076
        %1083 = vst [vmem:[#allocation2 + $0xa8] sm:$0xff] %v1077
        %1084 = vst [vmem:[#allocation2 + $0xb0] sm:$0xff] %v1078
        %1085 = vst [vmem:[#allocation2 + $0xb8] sm:$0xff] %v1079
        %v1086 = vpack.c.bf16 %v885, %v882
        %v1087 = vpack.c.bf16 %v886, %v883
        %v1088 = vpack.c.bf16 %v887, %v884
        %v1089 = vpack.c.bf16 %v891, %v888
        %v1090 = vpack.c.bf16 %v892, %v889
        %v1091 = vpack.c.bf16 %v893, %v890
        %1092 = vst [vmem:[#allocation2 + $0xc0] sm:$0xff] %v1086
        %1093 = vst [vmem:[#allocation2 + $0xc8] sm:$0xff] %v1087
        %1094 = vst [vmem:[#allocation2 + $0xd0] sm:$0xff] %v1088
        %1095 = vst [vmem:[#allocation2 + $0xd8] sm:$0xff] %v1089
        %1096 = vst [vmem:[#allocation2 + $0xe0] sm:$0xff] %v1090
        %1097 = vst [vmem:[#allocation2 + $0xe8] sm:$0xff] %v1091
        %1098 = vrot.lane.b32.xlu0 %v882, 127
        %v1099 = vpop.permute.xlu0 %1098
        %1100 = vrot.lane.b32.xlu0 %v885, 127
        %v1101 = vpop.permute.xlu0 %1100
        %1102 = vrot.lane.b32.xlu0 %v888, 127
        %v1103 = vpop.permute.xlu0 %1102
        %1104 = vrot.lane.b32.xlu0 %v891, 127
        %v1105 = vpop.permute.xlu0 %1104
        %1106 = vrot.lane.b32.xlu0 %v883, 127
        %v1107 = vpop.permute.xlu0 %1106
        %1108 = vrot.lane.b32.xlu0 %v886, 127
        %v1109 = vpop.permute.xlu0 %1108
        %1110 = vrot.lane.b32.xlu0 %v889, 127
        %v1111 = vpop.permute.xlu0 %1110
        %1112 = vrot.lane.b32.xlu0 %v892, 127
        %v1113 = vpop.permute.xlu0 %1112
        %1114 = vrot.lane.b32.xlu0 %v884, 127
        %v1115 = vpop.permute.xlu0 %1114
        %1116 = vrot.lane.b32.xlu0 %v887, 127
        %v1117 = vpop.permute.xlu0 %1116
        %1118 = vrot.lane.b32.xlu0 %v890, 127
        %v1119 = vpop.permute.xlu0 %1118
        %1120 = vrot.lane.b32.xlu0 %v893, 127
        %v1121 = vpop.permute.xlu0 %1120
        %v1122 = vsel %vm584, %v1107, %v1115
        %v1123 = vsel %vm584, %v1109, %v1117
        %v1124 = vsel %vm584, %v1111, %v1119
        %v1125 = vsel %vm584, %v1113, %v1121
        %v1126 = vsel %vm584, %v1099, %v1107
        %v1127 = vsel %vm584, %v1101, %v1109
        %v1128 = vsel %vm584, %v1103, %v1111
        %v1129 = vsel %vm584, %v1105, %v1113
        %v1130 = vsel %vm584, %v1115, %v1099
        %v1131 = vsel %vm584, %v1117, %v1101
        %v1132 = vsel %vm584, %v1119, %v1103
        %v1133 = vsel %vm584, %v1121, %v1105
        %v1134 = vpack.c.bf16 %v1127, %v1126
        %v1135 = vpack.c.bf16 %v1123, %v1122
        %v1136 = vpack.c.bf16 %v1131, %v1130
        %v1137 = vpack.c.bf16 %v1129, %v1128
        %v1138 = vpack.c.bf16 %v1125, %v1124
        %v1139 = vpack.c.bf16 %v1133, %v1132
        %1140 = vst [vmem:[#allocation2 + $0xf0] sm:$0xff] %v1134
        %1141 = vst [vmem:[#allocation2 + $0xf8] sm:$0xff] %v1135
        %1142 = vst [vmem:[#allocation2 + $0x100] sm:$0xff] %v1136
        %1143 = vst [vmem:[#allocation2 + $0x108] sm:$0xff] %v1137
        %1144 = vst [vmem:[#allocation2 + $0x110] sm:$0xff] %v1138
        %1145 = vst [vmem:[#allocation2 + $0x118] sm:$0xff] %v1139
        %1146 = vrot.lane.b32.xlu0 %v882, 111
        %v1147 = vpop.permute.xlu0 %1146
        %1148 = vrot.lane.b32.xlu0 %v885, 111
        %v1149 = vpop.permute.xlu0 %1148
        %1150 = vrot.lane.b32.xlu0 %v888, 111
        %v1151 = vpop.permute.xlu0 %1150
        %1152 = vrot.lane.b32.xlu0 %v891, 111
        %v1153 = vpop.permute.xlu0 %1152
        %1154 = vrot.lane.b32.xlu0 %v883, 111
        %v1155 = vpop.permute.xlu0 %1154
        %1156 = vrot.lane.b32.xlu0 %v886, 111
        %v1157 = vpop.permute.xlu0 %1156
        %1158 = vrot.lane.b32.xlu0 %v889, 111
        %v1159 = vpop.permute.xlu0 %1158
        %1160 = vrot.lane.b32.xlu0 %v892, 111
        %v1161 = vpop.permute.xlu0 %1160
        %1162 = vrot.lane.b32.xlu0 %v884, 111
        %v1163 = vpop.permute.xlu0 %1162
        %1164 = vrot.lane.b32.xlu0 %v887, 111
        %v1165 = vpop.permute.xlu0 %1164
        %1166 = vrot.lane.b32.xlu0 %v890, 111
        %v1167 = vpop.permute.xlu0 %1166
        %1168 = vrot.lane.b32.xlu0 %v893, 111
        %v1169 = vpop.permute.xlu0 %1168
        %v1170 = vsel %vm609, %v1155, %v1163
        %v1171 = vsel %vm609, %v1157, %v1165
        %v1172 = vsel %vm609, %v1159, %v1167
        %v1173 = vsel %vm609, %v1161, %v1169
        %v1174 = vsel %vm609, %v1147, %v1155
        %v1175 = vsel %vm609, %v1149, %v1157
        %v1176 = vsel %vm609, %v1151, %v1159
        %v1177 = vsel %vm609, %v1153, %v1161
        %v1178 = vsel %vm609, %v1163, %v1147
        %v1179 = vsel %vm609, %v1165, %v1149
        %v1180 = vsel %vm609, %v1167, %v1151
        %v1181 = vsel %vm609, %v1169, %v1153
        %v1182 = vpack.c.bf16 %v1175, %v1174
        %v1183 = vpack.c.bf16 %v1171, %v1170
        %v1184 = vpack.c.bf16 %v1179, %v1178
        %v1185 = vpack.c.bf16 %v1177, %v1176
        %v1186 = vpack.c.bf16 %v1173, %v1172
        %v1187 = vpack.c.bf16 %v1181, %v1180
        %1188 = vst [vmem:[#allocation2 + $0x120] sm:$0xff] %v1182
        %1189 = vst [vmem:[#allocation2 + $0x128] sm:$0xff] %v1183
        %1190 = vst [vmem:[#allocation2 + $0x130] sm:$0xff] %v1184
        %1191 = vst [vmem:[#allocation2 + $0x138] sm:$0xff] %v1185
        %1192 = vst [vmem:[#allocation2 + $0x140] sm:$0xff] %v1186
        %1193 = vst [vmem:[#allocation2 + $0x148] sm:$0xff] %v1187
        %1194 = vrot.lane.b32.xlu0 %v882, 110
        %v1195 = vpop.permute.xlu0 %1194
        %1196 = vrot.lane.b32.xlu0 %v885, 110
        %v1197 = vpop.permute.xlu0 %1196
        %1198 = vrot.lane.b32.xlu0 %v888, 110
        %v1199 = vpop.permute.xlu0 %1198
        %1200 = vrot.lane.b32.xlu0 %v891, 110
        %v1201 = vpop.permute.xlu0 %1200
        %1202 = vrot.lane.b32.xlu0 %v883, 110
        %v1203 = vpop.permute.xlu0 %1202
        %1204 = vrot.lane.b32.xlu0 %v886, 110
        %v1205 = vpop.permute.xlu0 %1204
        %1206 = vrot.lane.b32.xlu0 %v889, 110
        %v1207 = vpop.permute.xlu0 %1206
        %1208 = vrot.lane.b32.xlu0 %v892, 110
        %v1209 = vpop.permute.xlu0 %1208
        %1210 = vrot.lane.b32.xlu0 %v884, 110
        %v1211 = vpop.permute.xlu0 %1210
        %1212 = vrot.lane.b32.xlu0 %v887, 110
        %v1213 = vpop.permute.xlu0 %1212
        %1214 = vrot.lane.b32.xlu0 %v890, 110
        %v1215 = vpop.permute.xlu0 %1214
        %1216 = vrot.lane.b32.xlu0 %v893, 110
        %v1217 = vpop.permute.xlu0 %1216
        %v1218 = vsel %vm634, %v1203, %v1211
        %v1219 = vsel %vm634, %v1205, %v1213
        %v1220 = vsel %vm634, %v1207, %v1215
        %v1221 = vsel %vm634, %v1209, %v1217
        %v1222 = vsel %vm634, %v1195, %v1203
        %v1223 = vsel %vm634, %v1197, %v1205
        %v1224 = vsel %vm634, %v1199, %v1207
        %v1225 = vsel %vm634, %v1201, %v1209
        %v1226 = vsel %vm634, %v1211, %v1195
        %v1227 = vsel %vm634, %v1213, %v1197
        %v1228 = vsel %vm634, %v1215, %v1199
        %v1229 = vsel %vm634, %v1217, %v1201
        %v1230 = vpack.c.bf16 %v1223, %v1222
        %v1231 = vpack.c.bf16 %v1219, %v1218
        %v1232 = vpack.c.bf16 %v1227, %v1226
        %v1233 = vpack.c.bf16 %v1225, %v1224
        %v1234 = vpack.c.bf16 %v1221, %v1220
        %v1235 = vpack.c.bf16 %v1229, %v1228
        %1236 = vst [vmem:[#allocation2 + $0x150] sm:$0xff] %v1230
        %1237 = vst [vmem:[#allocation2 + $0x158] sm:$0xff] %v1231
        %1238 = vst [vmem:[#allocation2 + $0x160] sm:$0xff] %v1232
        %1239 = vst [vmem:[#allocation2 + $0x168] sm:$0xff] %v1233
        %1240 = vst [vmem:[#allocation2 + $0x170] sm:$0xff] %v1234
        %1241 = vst [vmem:[#allocation2 + $0x178] sm:$0xff] %v1235
        %1242 = vrot.lane.b32.xlu0 %v882, 109
        %v1243 = vpop.permute.xlu0 %1242
        %1244 = vrot.lane.b32.xlu0 %v885, 109
        %v1245 = vpop.permute.xlu0 %1244
        %1246 = vrot.lane.b32.xlu0 %v888, 109
        %v1247 = vpop.permute.xlu0 %1246
        %1248 = vrot.lane.b32.xlu0 %v891, 109
        %v1249 = vpop.permute.xlu0 %1248
        %1250 = vrot.lane.b32.xlu0 %v883, 109
        %v1251 = vpop.permute.xlu0 %1250
        %1252 = vrot.lane.b32.xlu0 %v886, 109
        %v1253 = vpop.permute.xlu0 %1252
        %1254 = vrot.lane.b32.xlu0 %v889, 109
        %v1255 = vpop.permute.xlu0 %1254
        %1256 = vrot.lane.b32.xlu0 %v892, 109
        %v1257 = vpop.permute.xlu0 %1256
        %1258 = vrot.lane.b32.xlu0 %v884, 109
        %v1259 = vpop.permute.xlu0 %1258
        %1260 = vrot.lane.b32.xlu0 %v887, 109
        %v1261 = vpop.permute.xlu0 %1260
        %1262 = vrot.lane.b32.xlu0 %v890, 109
        %v1263 = vpop.permute.xlu0 %1262
        %1264 = vrot.lane.b32.xlu0 %v893, 109
        %v1265 = vpop.permute.xlu0 %1264
        %v1266 = vsel %vm659, %v1251, %v1259
        %v1267 = vsel %vm659, %v1253, %v1261
        %v1268 = vsel %vm659, %v1255, %v1263
        %v1269 = vsel %vm659, %v1257, %v1265
        %v1270 = vsel %vm659, %v1243, %v1251
        %v1271 = vsel %vm659, %v1245, %v1253
        %v1272 = vsel %vm659, %v1247, %v1255
        %v1273 = vsel %vm659, %v1249, %v1257
        %v1274 = vsel %vm659, %v1259, %v1243
        %v1275 = vsel %vm659, %v1261, %v1245
        %v1276 = vsel %vm659, %v1263, %v1247
        %v1277 = vsel %vm659, %v1265, %v1249
        %v1278 = vpack.c.bf16 %v1271, %v1270
        %v1279 = vpack.c.bf16 %v1267, %v1266
        %v1280 = vpack.c.bf16 %v1275, %v1274
        %v1281 = vpack.c.bf16 %v1273, %v1272
        %v1282 = vpack.c.bf16 %v1269, %v1268
        %v1283 = vpack.c.bf16 %v1277, %v1276
        %1284 = vst [vmem:[#allocation2 + $0x180] sm:$0xff] %v1278
        %1285 = vst [vmem:[#allocation2 + $0x188] sm:$0xff] %v1279
        %1286 = vst [vmem:[#allocation2 + $0x190] sm:$0xff] %v1280
        %1287 = vst [vmem:[#allocation2 + $0x198] sm:$0xff] %v1281
        %1288 = vst [vmem:[#allocation2 + $0x1a0] sm:$0xff] %v1282
        %1289 = vst [vmem:[#allocation2 + $0x1a8] sm:$0xff] %v1283
        %v1290 = vld [vmem:[%s4] sm:$0xff]
        %v1291 = vld [vmem:[%s4 + $0x8] sm:$0xf]
        %v1292 = vld [vmem:[%s4 + $0xc] sm:$0xff]
        %v1293 = vld [vmem:[%s4 + $0x14] sm:$0xf]
        %v1294 = vld [vmem:[%s4 + $0x18] sm:$0xff]
        %v1295 = vld [vmem:[%s4 + $0x20] sm:$0xf]
        %v1296 = vld [vmem:[%s4 + $0x24] sm:$0xff]
        %v1297 = vld [vmem:[%s4 + $0x2c] sm:$0xf]
        %v1298 = vld [vmem:[#allocation2] sm:$0xff]
        %v1299 = vld [vmem:[#allocation2 + $0x8] sm:$0xff]
        %v1300 = vld [vmem:[#allocation2 + $0x10] sm:$0xff]
        %v1301 = vld [vmem:[#allocation2 + $0x18] sm:$0xff]
        %v1302 = vld [vmem:[#allocation2 + $0x20] sm:$0xff]
        %v1303 = vld [vmem:[#allocation2 + $0x28] sm:$0xff]
        %v1304 = vld [vmem:[#allocation2 + $0x30] sm:$0xff]
        %v1305 = vld [vmem:[#allocation2 + $0x38] sm:$0xff]
        %v1306 = vld [vmem:[#allocation2 + $0x40] sm:$0xff]
        %v1307 = vld [vmem:[#allocation2 + $0x48] sm:$0xff]
        %v1308 = vld [vmem:[#allocation2 + $0x50] sm:$0xff]
        %v1309 = vld [vmem:[#allocation2 + $0x58] sm:$0xff]
        %v1310 = vld [vmem:[#allocation2 + $0x60] sm:$0xff]
        %v1311 = vld [vmem:[#allocation2 + $0x68] sm:$0xff]
        %v1312 = vld [vmem:[#allocation2 + $0x70] sm:$0xff]
        %v1313 = vld [vmem:[#allocation2 + $0x78] sm:$0xff]
        %v1314 = vld [vmem:[#allocation2 + $0x80] sm:$0xff]
        %v1315 = vld [vmem:[#allocation2 + $0x88] sm:$0xff]
        %v1316 = vld [vmem:[#allocation2 + $0x90] sm:$0xff]
        %v1317 = vld [vmem:[#allocation2 + $0x98] sm:$0xff]
        %v1318 = vld [vmem:[#allocation2 + $0xa0] sm:$0xff]
        %v1319 = vld [vmem:[#allocation2 + $0xa8] sm:$0xff]
        %v1320 = vld [vmem:[#allocation2 + $0xb0] sm:$0xff]
        %v1321 = vld [vmem:[#allocation2 + $0xb8] sm:$0xff]
        %v1322 = vld [vmem:[#allocation2 + $0xc0] sm:$0xff]
        %v1323 = vld [vmem:[#allocation2 + $0xc8] sm:$0xff]
        %v1324 = vld [vmem:[#allocation2 + $0xd0] sm:$0xff]
        %v1325 = vld [vmem:[#allocation2 + $0xd8] sm:$0xff]
        %v1326 = vld [vmem:[#allocation2 + $0xe0] sm:$0xff]
        %v1327 = vld [vmem:[#allocation2 + $0xe8] sm:$0xff]
        %v1328 = vld [vmem:[#allocation2 + $0xf0] sm:$0xff]
        %v1329 = vld [vmem:[#allocation2 + $0xf8] sm:$0xff]
        %v1330 = vld [vmem:[#allocation2 + $0x100] sm:$0xff]
        %v1331 = vld [vmem:[#allocation2 + $0x108] sm:$0xff]
        %v1332 = vld [vmem:[#allocation2 + $0x110] sm:$0xff]
        %v1333 = vld [vmem:[#allocation2 + $0x118] sm:$0xff]
        %v1334 = vld [vmem:[#allocation2 + $0x120] sm:$0xff]
        %v1335 = vld [vmem:[#allocation2 + $0x128] sm:$0xff]
        %v1336 = vld [vmem:[#allocation2 + $0x130] sm:$0xff]
        %v1337 = vld [vmem:[#allocation2 + $0x138] sm:$0xff]
        %v1338 = vld [vmem:[#allocation2 + $0x140] sm:$0xff]
        %v1339 = vld [vmem:[#allocation2 + $0x148] sm:$0xff]
        %v1340 = vld [vmem:[#allocation2 + $0x150] sm:$0xff]
        %v1341 = vld [vmem:[#allocation2 + $0x158] sm:$0xff]
        %v1342 = vld [vmem:[#allocation2 + $0x160] sm:$0xff]
        %v1343 = vld [vmem:[#allocation2 + $0x168] sm:$0xff]
        %v1344 = vld [vmem:[#allocation2 + $0x170] sm:$0xff]
        %v1345 = vld [vmem:[#allocation2 + $0x178] sm:$0xff]
        %v1346 = vld [vmem:[#allocation2 + $0x180] sm:$0xff]
        %v1347 = vld [vmem:[#allocation2 + $0x188] sm:$0xff]
        %v1348 = vld [vmem:[#allocation2 + $0x190] sm:$0xff]
        %v1349 = vld [vmem:[#allocation2 + $0x198] sm:$0xff]
        %v1350 = vld [vmem:[#allocation2 + $0x1a0] sm:$0xff]
        %v1351 = vld [vmem:[#allocation2 + $0x1a8] sm:$0xff]
        %v1352 = vld [vmem:[%s5] sm:$0xff]
        %v1353 = vld [vmem:[%s5 + $0x8] sm:$0xff]
        %v1354 = vld [vmem:[%s5 + $0x10] sm:$0xff]
        %v1355 = vld [vmem:[%s5 + $0x18] sm:$0xff]
        %1357 = vset.pattern.permute.xlu0 0
        %1358 = vperm.xlu0 %1357, %v1352
        %v1359 = vpop.permute.xlu0 %1358
        %1362 = vset.pattern.permute.xlu0 0
        %1363 = vperm.xlu0 %1362, %v1353
        %v1364 = vpop.permute.xlu0 %1363
        %1367 = vset.pattern.permute.xlu0 0
        %1368 = vperm.xlu0 %1367, %v1354
        %v1369 = vpop.permute.xlu0 %1368
        %1372 = vset.pattern.permute.xlu0 0
        %1373 = vperm.xlu0 %1372, %v1355
        %v1374 = vpop.permute.xlu0 %1373
        %v1384 = vunpack.c.l.b16 %v1290
        %v1385 = vunpack.c.h.b16 %v1290
        %v1386 = vunpack.c.l.b16 %v1291
        %v1387 = vunpack.c.l.b16 %v1292
        %v1388 = vunpack.c.h.b16 %v1292
        %v1389 = vunpack.c.l.b16 %v1293
        %v1390 = vunpack.c.l.b16 %v1294
        %v1391 = vunpack.c.h.b16 %v1294
        %v1392 = vunpack.c.l.b16 %v1295
        %v1393 = vunpack.c.l.b16 %v1296
        %v1394 = vunpack.c.h.b16 %v1296
        %v1395 = vunpack.c.l.b16 %v1297
        %v1396 = vpack.c.b16 %v1387, %v1384
        %v1397 = vpack.c.b16 %v1388, %v1385
        %v1398 = vpack.c.b16 %v1389, %v1386
        %v1399 = vpack.c.b16 %v1393, %v1390
        %v1400 = vpack.c.b16 %v1394, %v1391
        %v1401 = vpack.c.b16 %v1395, %v1392
        %vm1406 = vcmask 261120
        %v1408 = vsel %vm1406, %v1398, 0
        %v1411 = vsel %vm1406, %v1401, 0
        %1413 = vmatprep.subr.bf16.mxu0 %v1299
        %1414 = vmatpush1.bf16.msra.mxu0 %v1298
        %1415 = vmatprep.subr.bf16.mxu0 %v1302
        %1416 = vmatpush1.bf16.msra.mxu0 %v1301
        %1417 = vmatprep.subr.bf16.mxu0 %v1305
        %1418 = vmatpush1.bf16.msra.mxu0 %v1304
        %1419 = vmatprep.subr.bf16.mxu0 %v1308
        %1420 = vmatpush1.bf16.msra.mxu0 %v1307
        %1421 = vmatprep.subr.bf16.mxu0 %v1311
        %1422 = vmatpush1.bf16.msra.mxu0 %v1310
        %1423 = vmatprep.subr.bf16.mxu0 %v1314
        %1424 = vmatpush1.bf16.msra.mxu0 %v1313
        %1425 = vmatprep.subr.bf16.mxu0 %v1317
        %1426 = vmatpush1.bf16.msra.mxu0 %v1316
        %1427 = vmatprep.subr.bf16.mxu0 %v1320
        %1428 = vmatpush1.bf16.msra.mxu0 %v1319
        %1429 = vmatprep.subr.bf16.mxu0 %v1323
        %1430 = vmatpush1.bf16.msra.mxu0 %v1322
        %1431 = vmatprep.subr.bf16.mxu0 %v1326
        %1432 = vmatpush1.bf16.msra.mxu0 %v1325
        %1433 = vmatprep.subr.bf16.mxu0 %v1329
        %1434 = vmatpush1.bf16.msra.mxu0 %v1328
        %1435 = vmatprep.subr.bf16.mxu0 %v1332
        %1436 = vmatpush1.bf16.msra.mxu0 %v1331
        %1437 = vmatprep.subr.bf16.mxu0 %v1335
        %1438 = vmatpush1.bf16.msra.mxu0 %v1334
        %1439 = vmatprep.subr.bf16.mxu0 %v1338
        %1440 = vmatpush1.bf16.msra.mxu0 %v1337
        %1441 = vmatprep.subr.bf16.mxu0 %v1341
        %1442 = vmatpush1.bf16.msra.mxu0 %v1340
        %1443 = vmatprep.subr.bf16.mxu0 %v1344
        %1444 = vmatpush1.bf16.msra.mxu0 %v1343
        %1445 = vmatprep.mubr.bf16.mxu0 %v1397
        %1446 = vmatmul.mubr.bf16.gmra.mrb[0].mxu0 %v1396
        %v1447 = vpop.f32.mrb[0].mxu0
        %v1448 = vadd.f32 %v1359, %v1447
        %v1449 = vpop.f32.mrb[0].mxu0
        %v1450 = vadd.f32 %v1359, %v1449
        %v1451 = vpop.f32.mrb[0].mxu0
        %v1452 = vadd.f32 %v1364, %v1451
        %v1453 = vpop.f32.mrb[0].mxu0
        %v1454 = vadd.f32 %v1364, %v1453
        %1455 = vmatprep.mubr.bf16.mxu0 %v1400
        %1456 = vmatmul.mubr.bf16.gmra.mrb[0].mxu0 %v1399
        %v1457 = vpop.f32.mrb[0].mxu0
        %v1458 = vadd.f32 %v1369, %v1457
        %v1459 = vpop.f32.mrb[0].mxu0
        %v1460 = vadd.f32 %v1369, %v1459
        %v1461 = vpop.f32.mrb[0].mxu0
        %v1462 = vadd.f32 %v1374, %v1461
        %v1463 = vpop.f32.mrb[0].mxu0
        %v1464 = vadd.f32 %v1374, %v1463
        %1465 = vdwg.mxu0
        %1466 = vmatprep.subr.bf16.mxu0 %v1347
        %1467 = vmatpush1.bf16.msra.mxu0 %v1346
        %1468 = vmatprep.subr.bf16.mxu0 %v1350
        %1469 = vmatpush1.bf16.msra.mxu0 %v1349
        %1470 = vmatprep.subr.bf16.mxu0 0
        %1471 = vmatpush1.bf16.msra.mxu0 0
        %1472 = vmatprep.subr.bf16.mxu0 0
        %1473 = vmatpush1.bf16.msra.mxu0 0
        %1474 = vmatprep.subr.bf16.mxu0 0
        %1475 = vmatpush1.bf16.msra.mxu0 0
        %1476 = vmatprep.subr.bf16.mxu0 0
        %1477 = vmatpush1.bf16.msra.mxu0 0
        %1478 = vmatprep.subr.bf16.mxu0 0
        %1479 = vmatpush1.bf16.msra.mxu0 0
        %1480 = vmatprep.subr.bf16.mxu0 0
        %1481 = vmatpush1.bf16.msra.mxu0 0
        %1482 = vmatprep.subr.bf16.mxu0 0
        %1483 = vmatpush1.bf16.msra.mxu0 0
        %1484 = vmatprep.subr.bf16.mxu0 0
        %1485 = vmatpush1.bf16.msra.mxu0 0
        %1486 = vmatprep.subr.bf16.mxu0 0
        %1487 = vmatpush1.bf16.msra.mxu0 0
        %1488 = vmatprep.subr.bf16.mxu0 0
        %1489 = vmatpush1.bf16.msra.mxu0 0
        %1490 = vmatprep.subr.bf16.mxu0 0
        %1491 = vmatpush1.bf16.msra.mxu0 0
        %1492 = vmatprep.subr.bf16.mxu0 0
        %1493 = vmatpush1.bf16.msra.mxu0 0
        %1494 = vmatprep.subr.bf16.mxu0 0
        %1495 = vmatpush1.bf16.msra.mxu0 0
        %1496 = vmatprep.subr.bf16.mxu0 0
        %1497 = vmatpush1.bf16.msra.mxu0 0
        %1498 = vmatprep.mubr.bf16.mxu0 0
        %1499 = vmatmul.mubr.bf16.gmra.mrb[0].mxu0 %v1408
        %v1500 = vpop.f32.mrb[0].mxu0
        %v1501 = vadd.f32 %v1448, %v1500
        %v1502 = vpop.f32.mrb[0].mxu0
        %v1503 = vadd.f32 %v1450, %v1502
        %v1504 = vpop.f32.mrb[0].mxu0
        %v1505 = vadd.f32 %v1452, %v1504
        %v1506 = vpop.f32.mrb[0].mxu0
        %v1507 = vadd.f32 %v1454, %v1506
        %1508 = vmatprep.mubr.bf16.mxu0 0
        %1509 = vmatmul.mubr.bf16.gmra.mrb[0].mxu0 %v1411
        %v1510 = vpop.f32.mrb[0].mxu0
        %v1511 = vadd.f32 %v1458, %v1510
        %v1512 = vpop.f32.mrb[0].mxu0
        %v1513 = vadd.f32 %v1460, %v1512
        %v1514 = vpop.f32.mrb[0].mxu0
        %v1515 = vadd.f32 %v1462, %v1514
        %v1516 = vpop.f32.mrb[0].mxu0
        %v1517 = vadd.f32 %v1464, %v1516
        %1518 = vdwg.mxu0
        %1519 = vmatprep.subr.bf16.mxu0 0
        %1520 = vmatpush1.bf16.msra.mxu0 %v1300
        %1521 = vmatprep.subr.bf16.mxu0 0
        %1522 = vmatpush1.bf16.msra.mxu0 %v1303
        %1523 = vmatprep.subr.bf16.mxu0 0
        %1524 = vmatpush1.bf16.msra.mxu0 %v1306
        %1525 = vmatprep.subr.bf16.mxu0 0
        %1526 = vmatpush1.bf16.msra.mxu0 %v1309
        %1527 = vmatprep.subr.bf16.mxu0 0
        %1528 = vmatpush1.bf16.msra.mxu0 %v1312
        %1529 = vmatprep.subr.bf16.mxu0 0
        %1530 = vmatpush1.bf16.msra.mxu0 %v1315
        %1531 = vmatprep.subr.bf16.mxu0 0
        %1532 = vmatpush1.bf16.msra.mxu0 %v1318
        %1533 = vmatprep.subr.bf16.mxu0 0
        %1534 = vmatpush1.bf16.msra.mxu0 %v1321
        %1535 = vmatprep.subr.bf16.mxu0 0
        %1536 = vmatpush1.bf16.msra.mxu0 %v1324
        %1537 = vmatprep.subr.bf16.mxu0 0
        %1538 = vmatpush1.bf16.msra.mxu0 %v1327
        %1539 = vmatprep.subr.bf16.mxu0 0
        %1540 = vmatpush1.bf16.msra.mxu0 %v1330
        %1541 = vmatprep.subr.bf16.mxu0 0
        %1542 = vmatpush1.bf16.msra.mxu0 %v1333
        %1543 = vmatprep.subr.bf16.mxu0 0
        %1544 = vmatpush1.bf16.msra.mxu0 %v1336
        %1545 = vmatprep.subr.bf16.mxu0 0
        %1546 = vmatpush1.bf16.msra.mxu0 %v1339
        %1547 = vmatprep.subr.bf16.mxu0 0
        %1548 = vmatpush1.bf16.msra.mxu0 %v1342
        %1549 = vmatprep.subr.bf16.mxu0 0
        %1550 = vmatpush1.bf16.msra.mxu0 %v1345
        %1551 = vmatprep.mubr.bf16.mxu0 %v1397
        %1552 = vmatmul.mubr.bf16.gmra.mrb[0].mxu0 %v1396
        %v1553 = vpop.f32.mrb[0].mxu0
        %v1554 = vadd.f32 %v1359, %v1553
        %v1555 = vpop.f32.mrb[0].mxu0
        %v1556 = vpop.f32.mrb[0].mxu0
        %v1557 = vadd.f32 %v1364, %v1556
        %v1558 = vpop.f32.mrb[0].mxu0
        %1559 = vmatprep.mubr.bf16.mxu0 %v1400
        %1560 = vmatmul.mubr.bf16.gmra.mrb[0].mxu0 %v1399
        %v1561 = vpop.f32.mrb[0].mxu0
        %v1562 = vadd.f32 %v1369, %v1561
        %v1563 = vpop.f32.mrb[0].mxu0
        %v1564 = vpop.f32.mrb[0].mxu0
        %v1565 = vadd.f32 %v1374, %v1564
        %v1566 = vpop.f32.mrb[0].mxu0
        %1567 = vdwg.mxu0
        %1568 = vmatprep.subr.bf16.mxu0 0
        %1569 = vmatpush1.bf16.msra.mxu0 %v1348
        %1570 = vmatprep.subr.bf16.mxu0 0
        %1571 = vmatpush1.bf16.msra.mxu0 %v1351
        %1572 = vmatprep.subr.bf16.mxu0 0
        %1573 = vmatpush1.bf16.msra.mxu0 0
        %1574 = vmatprep.subr.bf16.mxu0 0
        %1575 = vmatpush1.bf16.msra.mxu0 0
        %1576 = vmatprep.subr.bf16.mxu0 0
        %1577 = vmatpush1.bf16.msra.mxu0 0
        %1578 = vmatprep.subr.bf16.mxu0 0
        %1579 = vmatpush1.bf16.msra.mxu0 0
        %1580 = vmatprep.subr.bf16.mxu0 0
        %1581 = vmatpush1.bf16.msra.mxu0 0
        %1582 = vmatprep.subr.bf16.mxu0 0
        %1583 = vmatpush1.bf16.msra.mxu0 0
        %1584 = vmatprep.subr.bf16.mxu0 0
        %1585 = vmatpush1.bf16.msra.mxu0 0
        %1586 = vmatprep.subr.bf16.mxu0 0
        %1587 = vmatpush1.bf16.msra.mxu0 0
        %1588 = vmatprep.subr.bf16.mxu0 0
        %1589 = vmatpush1.bf16.msra.mxu0 0
        %1590 = vmatprep.subr.bf16.mxu0 0
        %1591 = vmatpush1.bf16.msra.mxu0 0
        %1592 = vmatprep.subr.bf16.mxu0 0
        %1593 = vmatpush1.bf16.msra.mxu0 0
        %1594 = vmatprep.subr.bf16.mxu0 0
        %1595 = vmatpush1.bf16.msra.mxu0 0
        %1596 = vmatprep.subr.bf16.mxu0 0
        %1597 = vmatpush1.bf16.msra.mxu0 0
        %1598 = vmatprep.subr.bf16.mxu0 0
        %1599 = vmatpush1.bf16.msra.mxu0 0
        %1600 = vmatprep.mubr.bf16.mxu0 0
        %1601 = vmatmul.mubr.bf16.gmra.mrb[0].mxu0 %v1408
        %v1602 = vpop.f32.mrb[0].mxu0
        %v1603 = vadd.f32 %v1554, %v1602
        %v1604 = vpop.f32.mrb[0].mxu0
        %v1605 = vpop.f32.mrb[0].mxu0
        %v1606 = vadd.f32 %v1557, %v1605
        %v1607 = vpop.f32.mrb[0].mxu0
        %1608 = vmatprep.mubr.bf16.mxu0 0
        %1609 = vmatmul.mubr.bf16.gmra.mrb[0].mxu0 %v1411
        %v1610 = vpop.f32.mrb[0].mxu0
        %v1611 = vadd.f32 %v1562, %v1610
        %v1612 = vpop.f32.mrb[0].mxu0
        %v1613 = vpop.f32.mrb[0].mxu0
        %v1614 = vadd.f32 %v1565, %v1613
        %v1615 = vpop.f32.mrb[0].mxu0
        %1616 = vdwg.mxu0
        %v1617 = vtanh.pop %v1501
        %v1618 = vtanh.pop %v1503
        %v1619 = vtanh.pop %v1603
        %v1620 = vtanh.pop %v1505
        %v1621 = vtanh.pop %v1507
        %v1622 = vtanh.pop %v1606
        %v1623 = vtanh.pop %v1511
        %v1624 = vtanh.pop %v1513
        %v1625 = vtanh.pop %v1611
        %v1626 = vtanh.pop %v1515
        %v1627 = vtanh.pop %v1517
        %v1628 = vtanh.pop %v1614
        %v1629 = vmul.f32 %v870, %v1617
        %v1630 = vmul.f32 %v874, %v1618
        %v1631 = vmul.f32 %v878, %v1619
        %v1632 = vmul.f32 %v870, %v1620
        %v1633 = vmul.f32 %v874, %v1621
        %v1634 = vmul.f32 %v878, %v1622
        %v1635 = vmul.f32 %v870, %v1623
        %v1636 = vmul.f32 %v874, %v1624
        %v1637 = vmul.f32 %v878, %v1625
        %v1638 = vmul.f32 %v870, %v1626
        %v1639 = vmul.f32 %v874, %v1627
        %v1640 = vmul.f32 %v878, %v1628
        %v1641 = vadd.f32 %v1629, %v882
        %v1642 = vadd.f32 %v1630, %v883
        %v1643 = vadd.f32 %v1631, %v884
        %v1644 = vadd.f32 %v1632, %v885
        %v1645 = vadd.f32 %v1633, %v886
        %v1646 = vadd.f32 %v1634, %v887
        %v1647 = vadd.f32 %v1635, %v888
        %v1648 = vadd.f32 %v1636, %v889
        %v1649 = vadd.f32 %v1637, %v890
        %v1650 = vadd.f32 %v1638, %v891
        %v1651 = vadd.f32 %v1639, %v892
        %v1652 = vadd.f32 %v1640, %v893
        %1653 = vrot.lane.b32.xlu0 %v1641, 19
        %v1654 = vpop.permute.xlu0 %1653
        %1655 = vrot.lane.b32.xlu0 %v1644, 19
        %v1656 = vpop.permute.xlu0 %1655
        %1657 = vrot.lane.b32.xlu0 %v1647, 19
        %v1658 = vpop.permute.xlu0 %1657
        %1659 = vrot.lane.b32.xlu0 %v1650, 19
        %v1660 = vpop.permute.xlu0 %1659
        %1661 = vrot.lane.b32.xlu0 %v1642, 19
        %v1662 = vpop.permute.xlu0 %1661
        %1663 = vrot.lane.b32.xlu0 %v1645, 19
        %v1664 = vpop.permute.xlu0 %1663
        %1665 = vrot.lane.b32.xlu0 %v1648, 19
        %v1666 = vpop.permute.xlu0 %1665
        %1667 = vrot.lane.b32.xlu0 %v1651, 19
        %v1668 = vpop.permute.xlu0 %1667
        %1669 = vrot.lane.b32.xlu0 %v1643, 19
        %v1670 = vpop.permute.xlu0 %1669
        %1671 = vrot.lane.b32.xlu0 %v1646, 19
        %v1672 = vpop.permute.xlu0 %1671
        %1673 = vrot.lane.b32.xlu0 %v1649, 19
        %v1674 = vpop.permute.xlu0 %1673
        %1675 = vrot.lane.b32.xlu0 %v1652, 19
        %v1676 = vpop.permute.xlu0 %1675
        %v1677 = vsel %vm478, %v1662, %v1670
        %v1678 = vsel %vm478, %v1664, %v1672
        %v1679 = vsel %vm478, %v1666, %v1674
        %v1680 = vsel %vm478, %v1668, %v1676
        %v1681 = vsel %vm478, %v1654, %v1662
        %v1682 = vsel %vm478, %v1656, %v1664
        %v1683 = vsel %vm478, %v1658, %v1666
        %v1684 = vsel %vm478, %v1660, %v1668
        %v1685 = vsel %vm478, %v1670, %v1654
        %v1686 = vsel %vm478, %v1672, %v1656
        %v1687 = vsel %vm478, %v1674, %v1658
        %v1688 = vsel %vm478, %v1676, %v1660
        %v1689 = vpack.c.bf16 %v1686, %v1685
        %v1690 = vpack.c.bf16 %v1682, %v1681
        %v1691 = vpack.c.bf16 %v1678, %v1677
        %v1692 = vpack.c.bf16 %v1688, %v1687
        %v1693 = vpack.c.bf16 %v1684, %v1683
        %v1694 = vpack.c.bf16 %v1680, %v1679
        %1695 = vst [vmem:[#allocation2] sm:$0xff] %v1689
        %1696 = vst [vmem:[#allocation2 + $0x8] sm:$0xff] %v1690
        %1697 = vst [vmem:[#allocation2 + $0x10] sm:$0xff] %v1691
        %1698 = vst [vmem:[#allocation2 + $0x18] sm:$0xff] %v1692
        %1699 = vst [vmem:[#allocation2 + $0x20] sm:$0xff] %v1693
        %1700 = vst [vmem:[#allocation2 + $0x28] sm:$0xff] %v1694
        %1701 = vrot.lane.b32.xlu0 %v1641, 18
        %v1702 = vpop.permute.xlu0 %1701
        %1703 = vrot.lane.b32.xlu0 %v1644, 18
        %v1704 = vpop.permute.xlu0 %1703
        %1705 = vrot.lane.b32.xlu0 %v1647, 18
        %v1706 = vpop.permute.xlu0 %1705
        %1707 = vrot.lane.b32.xlu0 %v1650, 18
        %v1708 = vpop.permute.xlu0 %1707
        %1709 = vrot.lane.b32.xlu0 %v1642, 18
        %v1710 = vpop.permute.xlu0 %1709
        %1711 = vrot.lane.b32.xlu0 %v1645, 18
        %v1712 = vpop.permute.xlu0 %1711
        %1713 = vrot.lane.b32.xlu0 %v1648, 18
        %v1714 = vpop.permute.xlu0 %1713
        %1715 = vrot.lane.b32.xlu0 %v1651, 18
        %v1716 = vpop.permute.xlu0 %1715
        %1717 = vrot.lane.b32.xlu0 %v1643, 18
        %v1718 = vpop.permute.xlu0 %1717
        %1719 = vrot.lane.b32.xlu0 %v1646, 18
        %v1720 = vpop.permute.xlu0 %1719
        %1721 = vrot.lane.b32.xlu0 %v1649, 18
        %v1722 = vpop.permute.xlu0 %1721
        %1723 = vrot.lane.b32.xlu0 %v1652, 18
        %v1724 = vpop.permute.xlu0 %1723
        %v1725 = vsel %vm503, %v1710, %v1718
        %v1726 = vsel %vm503, %v1712, %v1720
        %v1727 = vsel %vm503, %v1714, %v1722
        %v1728 = vsel %vm503, %v1716, %v1724
        %v1729 = vsel %vm503, %v1702, %v1710
        %v1730 = vsel %vm503, %v1704, %v1712
        %v1731 = vsel %vm503, %v1706, %v1714
        %v1732 = vsel %vm503, %v1708, %v1716
        %v1733 = vsel %vm503, %v1718, %v1702
        %v1734 = vsel %vm503, %v1720, %v1704
        %v1735 = vsel %vm503, %v1722, %v1706
        %v1736 = vsel %vm503, %v1724, %v1708
        %v1737 = vpack.c.bf16 %v1734, %v1733
        %v1738 = vpack.c.bf16 %v1730, %v1729
        %v1739 = vpack.c.bf16 %v1726, %v1725
        %v1740 = vpack.c.bf16 %v1736, %v1735
        %v1741 = vpack.c.bf16 %v1732, %v1731
        %v1742 = vpack.c.bf16 %v1728, %v1727
        %1743 = vst [vmem:[#allocation2 + $0x30] sm:$0xff] %v1737
        %1744 = vst [vmem:[#allocation2 + $0x38] sm:$0xff] %v1738
        %1745 = vst [vmem:[#allocation2 + $0x40] sm:$0xff] %v1739
        %1746 = vst [vmem:[#allocation2 + $0x48] sm:$0xff] %v1740
        %1747 = vst [vmem:[#allocation2 + $0x50] sm:$0xff] %v1741
        %1748 = vst [vmem:[#allocation2 + $0x58] sm:$0xff] %v1742
        %1749 = vrot.lane.b32.xlu0 %v1641, 17
        %v1750 = vpop.permute.xlu0 %1749
        %1751 = vrot.lane.b32.xlu0 %v1644, 17
        %v1752 = vpop.permute.xlu0 %1751
        %1753 = vrot.lane.b32.xlu0 %v1647, 17
        %v1754 = vpop.permute.xlu0 %1753
        %1755 = vrot.lane.b32.xlu0 %v1650, 17
        %v1756 = vpop.permute.xlu0 %1755
        %1757 = vrot.lane.b32.xlu0 %v1642, 17
        %v1758 = vpop.permute.xlu0 %1757
        %1759 = vrot.lane.b32.xlu0 %v1645, 17
        %v1760 = vpop.permute.xlu0 %1759
        %1761 = vrot.lane.b32.xlu0 %v1648, 17
        %v1762 = vpop.permute.xlu0 %1761
        %1763 = vrot.lane.b32.xlu0 %v1651, 17
        %v1764 = vpop.permute.xlu0 %1763
        %1765 = vrot.lane.b32.xlu0 %v1643, 17
        %v1766 = vpop.permute.xlu0 %1765
        %1767 = vrot.lane.b32.xlu0 %v1646, 17
        %v1768 = vpop.permute.xlu0 %1767
        %1769 = vrot.lane.b32.xlu0 %v1649, 17
        %v1770 = vpop.permute.xlu0 %1769
        %1771 = vrot.lane.b32.xlu0 %v1652, 17
        %v1772 = vpop.permute.xlu0 %1771
        %v1773 = vsel %vm528, %v1758, %v1766
        %v1774 = vsel %vm528, %v1760, %v1768
        %v1775 = vsel %vm528, %v1762, %v1770
        %v1776 = vsel %vm528, %v1764, %v1772
        %v1777 = vsel %vm528, %v1750, %v1758
        %v1778 = vsel %vm528, %v1752, %v1760
        %v1779 = vsel %vm528, %v1754, %v1762
        %v1780 = vsel %vm528, %v1756, %v1764
        %v1781 = vsel %vm528, %v1766, %v1750
        %v1782 = vsel %vm528, %v1768, %v1752
        %v1783 = vsel %vm528, %v1770, %v1754
        %v1784 = vsel %vm528, %v1772, %v1756
        %v1785 = vpack.c.bf16 %v1782, %v1781
        %v1786 = vpack.c.bf16 %v1778, %v1777
        %v1787 = vpack.c.bf16 %v1774, %v1773
        %v1788 = vpack.c.bf16 %v1784, %v1783
        %v1789 = vpack.c.bf16 %v1780, %v1779
        %v1790 = vpack.c.bf16 %v1776, %v1775
        %1791 = vst [vmem:[#allocation2 + $0x60] sm:$0xff] %v1785
        %1792 = vst [vmem:[#allocation2 + $0x68] sm:$0xff] %v1786
        %1793 = vst [vmem:[#allocation2 + $0x70] sm:$0xff] %v1787
        %1794 = vst [vmem:[#allocation2 + $0x78] sm:$0xff] %v1788
        %1795 = vst [vmem:[#allocation2 + $0x80] sm:$0xff] %v1789
        %1796 = vst [vmem:[#allocation2 + $0x88] sm:$0xff] %v1790
        %1797 = vrot.lane.b32.xlu0 %v1641, 1
        %v1798 = vpop.permute.xlu0 %1797
        %1799 = vrot.lane.b32.xlu0 %v1644, 1
        %v1800 = vpop.permute.xlu0 %1799
        %1801 = vrot.lane.b32.xlu0 %v1647, 1
        %v1802 = vpop.permute.xlu0 %1801
        %1803 = vrot.lane.b32.xlu0 %v1650, 1
        %v1804 = vpop.permute.xlu0 %1803
        %1805 = vrot.lane.b32.xlu0 %v1642, 1
        %v1806 = vpop.permute.xlu0 %1805
        %1807 = vrot.lane.b32.xlu0 %v1645, 1
        %v1808 = vpop.permute.xlu0 %1807
        %1809 = vrot.lane.b32.xlu0 %v1648, 1
        %v1810 = vpop.permute.xlu0 %1809
        %1811 = vrot.lane.b32.xlu0 %v1651, 1
        %v1812 = vpop.permute.xlu0 %1811
        %1813 = vrot.lane.b32.xlu0 %v1643, 1
        %v1814 = vpop.permute.xlu0 %1813
        %1815 = vrot.lane.b32.xlu0 %v1646, 1
        %v1816 = vpop.permute.xlu0 %1815
        %1817 = vrot.lane.b32.xlu0 %v1649, 1
        %v1818 = vpop.permute.xlu0 %1817
        %1819 = vrot.lane.b32.xlu0 %v1652, 1
        %v1820 = vpop.permute.xlu0 %1819
        %v1821 = vsel %vm553, %v1806, %v1814
        %v1822 = vsel %vm553, %v1808, %v1816
        %v1823 = vsel %vm553, %v1810, %v1818
        %v1824 = vsel %vm553, %v1812, %v1820
        %v1825 = vsel %vm553, %v1798, %v1806
        %v1826 = vsel %vm553, %v1800, %v1808
        %v1827 = vsel %vm553, %v1802, %v1810
        %v1828 = vsel %vm553, %v1804, %v1812
        %v1829 = vsel %vm553, %v1814, %v1798
        %v1830 = vsel %vm553, %v1816, %v1800
        %v1831 = vsel %vm553, %v1818, %v1802
        %v1832 = vsel %vm553, %v1820, %v1804
        %v1833 = vpack.c.bf16 %v1830, %v1829
        %v1834 = vpack.c.bf16 %v1826, %v1825
        %v1835 = vpack.c.bf16 %v1822, %v1821
        %v1836 = vpack.c.bf16 %v1832, %v1831
        %v1837 = vpack.c.bf16 %v1828, %v1827
        %v1838 = vpack.c.bf16 %v1824, %v1823
        %1839 = vst [vmem:[#allocation2 + $0x90] sm:$0xff] %v1833
        %1840 = vst [vmem:[#allocation2 + $0x98] sm:$0xff] %v1834
        %1841 = vst [vmem:[#allocation2 + $0xa0] sm:$0xff] %v1835
        %1842 = vst [vmem:[#allocation2 + $0xa8] sm:$0xff] %v1836
        %1843 = vst [vmem:[#allocation2 + $0xb0] sm:$0xff] %v1837
        %1844 = vst [vmem:[#allocation2 + $0xb8] sm:$0xff] %v1838
        %v1845 = vpack.c.bf16 %v1644, %v1641
        %v1846 = vpack.c.bf16 %v1645, %v1642
        %v1847 = vpack.c.bf16 %v1646, %v1643
        %v1848 = vpack.c.bf16 %v1650, %v1647
        %v1849 = vpack.c.bf16 %v1651, %v1648
        %v1850 = vpack.c.bf16 %v1652, %v1649
        %1851 = vst [vmem:[#allocation2 + $0xc0] sm:$0xff] %v1845
        %1852 = vst [vmem:[#allocation2 + $0xc8] sm:$0xff] %v1846
        %1853 = vst [vmem:[#allocation2 + $0xd0] sm:$0xff] %v1847
        %1854 = vst [vmem:[#allocation2 + $0xd8] sm:$0xff] %v1848
        %1855 = vst [vmem:[#allocation2 + $0xe0] sm:$0xff] %v1849
        %1856 = vst [vmem:[#allocation2 + $0xe8] sm:$0xff] %v1850
        %1857 = vrot.lane.b32.xlu0 %v1641, 127
        %v1858 = vpop.permute.xlu0 %1857
        %1859 = vrot.lane.b32.xlu0 %v1644, 127
        %v1860 = vpop.permute.xlu0 %1859
        %1861 = vrot.lane.b32.xlu0 %v1647, 127
        %v1862 = vpop.permute.xlu0 %1861
        %1863 = vrot.lane.b32.xlu0 %v1650, 127
        %v1864 = vpop.permute.xlu0 %1863
        %1865 = vrot.lane.b32.xlu0 %v1642, 127
        %v1866 = vpop.permute.xlu0 %1865
        %1867 = vrot.lane.b32.xlu0 %v1645, 127
        %v1868 = vpop.permute.xlu0 %1867
        %1869 = vrot.lane.b32.xlu0 %v1648, 127
        %v1870 = vpop.permute.xlu0 %1869
        %1871 = vrot.lane.b32.xlu0 %v1651, 127
        %v1872 = vpop.permute.xlu0 %1871
        %1873 = vrot.lane.b32.xlu0 %v1643, 127
        %v1874 = vpop.permute.xlu0 %1873
        %1875 = vrot.lane.b32.xlu0 %v1646, 127
        %v1876 = vpop.permute.xlu0 %1875
        %1877 = vrot.lane.b32.xlu0 %v1649, 127
        %v1878 = vpop.permute.xlu0 %1877
        %1879 = vrot.lane.b32.xlu0 %v1652, 127
        %v1880 = vpop.permute.xlu0 %1879
        %v1881 = vsel %vm584, %v1866, %v1874
        %v1882 = vsel %vm584, %v1868, %v1876
        %v1883 = vsel %vm584, %v1870, %v1878
        %v1884 = vsel %vm584, %v1872, %v1880
        %v1885 = vsel %vm584, %v1858, %v1866
        %v1886 = vsel %vm584, %v1860, %v1868
        %v1887 = vsel %vm584, %v1862, %v1870
        %v1888 = vsel %vm584, %v1864, %v1872
        %v1889 = vsel %vm584, %v1874, %v1858
        %v1890 = vsel %vm584, %v1876, %v1860
        %v1891 = vsel %vm584, %v1878, %v1862
        %v1892 = vsel %vm584, %v1880, %v1864
        %v1893 = vpack.c.bf16 %v1886, %v1885
        %v1894 = vpack.c.bf16 %v1882, %v1881
        %v1895 = vpack.c.bf16 %v1890, %v1889
        %v1896 = vpack.c.bf16 %v1888, %v1887
        %v1897 = vpack.c.bf16 %v1884, %v1883
        %v1898 = vpack.c.bf16 %v1892, %v1891
        %1899 = vst [vmem:[#allocation2 + $0xf0] sm:$0xff] %v1893
        %1900 = vst [vmem:[#allocation2 + $0xf8] sm:$0xff] %v1894
        %1901 = vst [vmem:[#allocation2 + $0x100] sm:$0xff] %v1895
        %1902 = vst [vmem:[#allocation2 + $0x108] sm:$0xff] %v1896
        %1903 = vst [vmem:[#allocation2 + $0x110] sm:$0xff] %v1897
        %1904 = vst [vmem:[#allocation2 + $0x118] sm:$0xff] %v1898
        %1905 = vrot.lane.b32.xlu0 %v1641, 111
        %v1906 = vpop.permute.xlu0 %1905
        %1907 = vrot.lane.b32.xlu0 %v1644, 111
        %v1908 = vpop.permute.xlu0 %1907
        %1909 = vrot.lane.b32.xlu0 %v1647, 111
        %v1910 = vpop.permute.xlu0 %1909
        %1911 = vrot.lane.b32.xlu0 %v1650, 111
        %v1912 = vpop.permute.xlu0 %1911
        %1913 = vrot.lane.b32.xlu0 %v1642, 111
        %v1914 = vpop.permute.xlu0 %1913
        %1915 = vrot.lane.b32.xlu0 %v1645, 111
        %v1916 = vpop.permute.xlu0 %1915
        %1917 = vrot.lane.b32.xlu0 %v1648, 111
        %v1918 = vpop.permute.xlu0 %1917
        %1919 = vrot.lane.b32.xlu0 %v1651, 111
        %v1920 = vpop.permute.xlu0 %1919
        %1921 = vrot.lane.b32.xlu0 %v1643, 111
        %v1922 = vpop.permute.xlu0 %1921
        %1923 = vrot.lane.b32.xlu0 %v1646, 111
        %v1924 = vpop.permute.xlu0 %1923
        %1925 = vrot.lane.b32.xlu0 %v1649, 111
        %v1926 = vpop.permute.xlu0 %1925
        %1927 = vrot.lane.b32.xlu0 %v1652, 111
        %v1928 = vpop.permute.xlu0 %1927
        %v1929 = vsel %vm609, %v1914, %v1922
        %v1930 = vsel %vm609, %v1916, %v1924
        %v1931 = vsel %vm609, %v1918, %v1926
        %v1932 = vsel %vm609, %v1920, %v1928
        %v1933 = vsel %vm609, %v1906, %v1914
        %v1934 = vsel %vm609, %v1908, %v1916
        %v1935 = vsel %vm609, %v1910, %v1918
        %v1936 = vsel %vm609, %v1912, %v1920
        %v1937 = vsel %vm609, %v1922, %v1906
        %v1938 = vsel %vm609, %v1924, %v1908
        %v1939 = vsel %vm609, %v1926, %v1910
        %v1940 = vsel %vm609, %v1928, %v1912
        %v1941 = vpack.c.bf16 %v1934, %v1933
        %v1942 = vpack.c.bf16 %v1930, %v1929
        %v1943 = vpack.c.bf16 %v1938, %v1937
        %v1944 = vpack.c.bf16 %v1936, %v1935
        %v1945 = vpack.c.bf16 %v1932, %v1931
        %v1946 = vpack.c.bf16 %v1940, %v1939
        %1947 = vst [vmem:[#allocation2 + $0x120] sm:$0xff] %v1941
        %1948 = vst [vmem:[#allocation2 + $0x128] sm:$0xff] %v1942
        %1949 = vst [vmem:[#allocation2 + $0x130] sm:$0xff] %v1943
        %1950 = vst [vmem:[#allocation2 + $0x138] sm:$0xff] %v1944
        %1951 = vst [vmem:[#allocation2 + $0x140] sm:$0xff] %v1945
        %1952 = vst [vmem:[#allocation2 + $0x148] sm:$0xff] %v1946
        %1953 = vrot.lane.b32.xlu0 %v1641, 110
        %v1954 = vpop.permute.xlu0 %1953
        %1955 = vrot.lane.b32.xlu0 %v1644, 110
        %v1956 = vpop.permute.xlu0 %1955
        %1957 = vrot.lane.b32.xlu0 %v1647, 110
        %v1958 = vpop.permute.xlu0 %1957
        %1959 = vrot.lane.b32.xlu0 %v1650, 110
        %v1960 = vpop.permute.xlu0 %1959
        %1961 = vrot.lane.b32.xlu0 %v1642, 110
        %v1962 = vpop.permute.xlu0 %1961
        %1963 = vrot.lane.b32.xlu0 %v1645, 110
        %v1964 = vpop.permute.xlu0 %1963
        %1965 = vrot.lane.b32.xlu0 %v1648, 110
        %v1966 = vpop.permute.xlu0 %1965
        %1967 = vrot.lane.b32.xlu0 %v1651, 110
        %v1968 = vpop.permute.xlu0 %1967
        %1969 = vrot.lane.b32.xlu0 %v1643, 110
        %v1970 = vpop.permute.xlu0 %1969
        %1971 = vrot.lane.b32.xlu0 %v1646, 110
        %v1972 = vpop.permute.xlu0 %1971
        %1973 = vrot.lane.b32.xlu0 %v1649, 110
        %v1974 = vpop.permute.xlu0 %1973
        %1975 = vrot.lane.b32.xlu0 %v1652, 110
        %v1976 = vpop.permute.xlu0 %1975
        %v1977 = vsel %vm634, %v1962, %v1970
        %v1978 = vsel %vm634, %v1964, %v1972
        %v1979 = vsel %vm634, %v1966, %v1974
        %v1980 = vsel %vm634, %v1968, %v1976
        %v1981 = vsel %vm634, %v1954, %v1962
        %v1982 = vsel %vm634, %v1956, %v1964
        %v1983 = vsel %vm634, %v1958, %v1966
        %v1984 = vsel %vm634, %v1960, %v1968
        %v1985 = vsel %vm634, %v1970, %v1954
        %v1986 = vsel %vm634, %v1972, %v1956
        %v1987 = vsel %vm634, %v1974, %v1958
        %v1988 = vsel %vm634, %v1976, %v1960
        %v1989 = vpack.c.bf16 %v1982, %v1981
        %v1990 = vpack.c.bf16 %v1978, %v1977
        %v1991 = vpack.c.bf16 %v1986, %v1985
        %v1992 = vpack.c.bf16 %v1984, %v1983
        %v1993 = vpack.c.bf16 %v1980, %v1979
        %v1994 = vpack.c.bf16 %v1988, %v1987
        %1995 = vst [vmem:[#allocation2 + $0x150] sm:$0xff] %v1989
        %1996 = vst [vmem:[#allocation2 + $0x158] sm:$0xff] %v1990
        %1997 = vst [vmem:[#allocation2 + $0x160] sm:$0xff] %v1991
        %1998 = vst [vmem:[#allocation2 + $0x168] sm:$0xff] %v1992
        %1999 = vst [vmem:[#allocation2 + $0x170] sm:$0xff] %v1993
        %2000 = vst [vmem:[#allocation2 + $0x178] sm:$0xff] %v1994
        %2001 = vrot.lane.b32.xlu0 %v1641, 109
        %v2002 = vpop.permute.xlu0 %2001
        %2003 = vrot.lane.b32.xlu0 %v1644, 109
        %v2004 = vpop.permute.xlu0 %2003
        %2005 = vrot.lane.b32.xlu0 %v1647, 109
        %v2006 = vpop.permute.xlu0 %2005
        %2007 = vrot.lane.b32.xlu0 %v1650, 109
        %v2008 = vpop.permute.xlu0 %2007
        %2009 = vrot.lane.b32.xlu0 %v1642, 109
        %v2010 = vpop.permute.xlu0 %2009
        %2011 = vrot.lane.b32.xlu0 %v1645, 109
        %v2012 = vpop.permute.xlu0 %2011
        %2013 = vrot.lane.b32.xlu0 %v1648, 109
        %v2014 = vpop.permute.xlu0 %2013
        %2015 = vrot.lane.b32.xlu0 %v1651, 109
        %v2016 = vpop.permute.xlu0 %2015
        %2017 = vrot.lane.b32.xlu0 %v1643, 109
        %v2018 = vpop.permute.xlu0 %2017
        %2019 = vrot.lane.b32.xlu0 %v1646, 109
        %v2020 = vpop.permute.xlu0 %2019
        %2021 = vrot.lane.b32.xlu0 %v1649, 109
        %v2022 = vpop.permute.xlu0 %2021
        %2023 = vrot.lane.b32.xlu0 %v1652, 109
        %v2024 = vpop.permute.xlu0 %2023
        %v2025 = vsel %vm659, %v2010, %v2018
        %v2026 = vsel %vm659, %v2012, %v2020
        %v2027 = vsel %vm659, %v2014, %v2022
        %v2028 = vsel %vm659, %v2016, %v2024
        %v2029 = vsel %vm659, %v2002, %v2010
        %v2030 = vsel %vm659, %v2004, %v2012
        %v2031 = vsel %vm659, %v2006, %v2014
        %v2032 = vsel %vm659, %v2008, %v2016
        %v2033 = vsel %vm659, %v2018, %v2002
        %v2034 = vsel %vm659, %v2020, %v2004
        %v2035 = vsel %vm659, %v2022, %v2006
        %v2036 = vsel %vm659, %v2024, %v2008
        %v2037 = vpack.c.bf16 %v2030, %v2029
        %v2038 = vpack.c.bf16 %v2026, %v2025
        %v2039 = vpack.c.bf16 %v2034, %v2033
        %v2040 = vpack.c.bf16 %v2032, %v2031
        %v2041 = vpack.c.bf16 %v2028, %v2027
        %v2042 = vpack.c.bf16 %v2036, %v2035
        %2043 = vst [vmem:[#allocation2 + $0x180] sm:$0xff] %v2037
        %2044 = vst [vmem:[#allocation2 + $0x188] sm:$0xff] %v2038
        %2045 = vst [vmem:[#allocation2 + $0x190] sm:$0xff] %v2039
        %2046 = vst [vmem:[#allocation2 + $0x198] sm:$0xff] %v2040
        %2047 = vst [vmem:[#allocation2 + $0x1a0] sm:$0xff] %v2041
        %2048 = vst [vmem:[#allocation2 + $0x1a8] sm:$0xff] %v2042
        %v2049 = vld [vmem:[#allocation6] sm:$0xff]
        %v2050 = vld [vmem:[#allocation6 + $0x8] sm:$0xf]
        %v2051 = vld [vmem:[#allocation6 + $0xc] sm:$0xff]
        %v2052 = vld [vmem:[#allocation6 + $0x14] sm:$0xf]
        %v2053 = vld [vmem:[#allocation6 + $0x18] sm:$0xff]
        %v2054 = vld [vmem:[#allocation6 + $0x20] sm:$0xf]
        %v2055 = vld [vmem:[#allocation6 + $0x24] sm:$0xff]
        %v2056 = vld [vmem:[#allocation6 + $0x2c] sm:$0xf]
        %v2057 = vld [vmem:[#allocation2] sm:$0xff]
        %v2058 = vld [vmem:[#allocation2 + $0x8] sm:$0xff]
        %v2059 = vld [vmem:[#allocation2 + $0x10] sm:$0xff]
        %v2060 = vld [vmem:[#allocation2 + $0x18] sm:$0xff]
        %v2061 = vld [vmem:[#allocation2 + $0x20] sm:$0xff]
        %v2062 = vld [vmem:[#allocation2 + $0x28] sm:$0xff]
        %v2063 = vld [vmem:[#allocation2 + $0x30] sm:$0xff]
        %v2064 = vld [vmem:[#allocation2 + $0x38] sm:$0xff]
        %v2065 = vld [vmem:[#allocation2 + $0x40] sm:$0xff]
        %v2066 = vld [vmem:[#allocation2 + $0x48] sm:$0xff]
        %v2067 = vld [vmem:[#allocation2 + $0x50] sm:$0xff]
        %v2068 = vld [vmem:[#allocation2 + $0x58] sm:$0xff]
        %v2069 = vld [vmem:[#allocation2 + $0x60] sm:$0xff]
        %v2070 = vld [vmem:[#allocation2 + $0x68] sm:$0xff]
        %v2071 = vld [vmem:[#allocation2 + $0x70] sm:$0xff]
        %v2072 = vld [vmem:[#allocation2 + $0x78] sm:$0xff]
        %v2073 = vld [vmem:[#allocation2 + $0x80] sm:$0xff]
        %v2074 = vld [vmem:[#allocation2 + $0x88] sm:$0xff]
        %v2075 = vld [vmem:[#allocation2 + $0x90] sm:$0xff]
        %v2076 = vld [vmem:[#allocation2 + $0x98] sm:$0xff]
        %v2077 = vld [vmem:[#allocation2 + $0xa0] sm:$0xff]
        %v2078 = vld [vmem:[#allocation2 + $0xa8] sm:$0xff]
        %v2079 = vld [vmem:[#allocation2 + $0xb0] sm:$0xff]
        %v2080 = vld [vmem:[#allocation2 + $0xb8] sm:$0xff]
        %v2081 = vld [vmem:[#allocation2 + $0xc0] sm:$0xff]
        %v2082 = vld [vmem:[#allocation2 + $0xc8] sm:$0xff]
        %v2083 = vld [vmem:[#allocation2 + $0xd0] sm:$0xff]
        %v2084 = vld [vmem:[#allocation2 + $0xd8] sm:$0xff]
        %v2085 = vld [vmem:[#allocation2 + $0xe0] sm:$0xff]
        %v2086 = vld [vmem:[#allocation2 + $0xe8] sm:$0xff]
        %v2087 = vld [vmem:[#allocation2 + $0xf0] sm:$0xff]
        %v2088 = vld [vmem:[#allocation2 + $0xf8] sm:$0xff]
        %v2089 = vld [vmem:[#allocation2 + $0x100] sm:$0xff]
        %v2090 = vld [vmem:[#allocation2 + $0x108] sm:$0xff]
        %v2091 = vld [vmem:[#allocation2 + $0x110] sm:$0xff]
        %v2092 = vld [vmem:[#allocation2 + $0x118] sm:$0xff]
        %v2093 = vld [vmem:[#allocation2 + $0x120] sm:$0xff]
        %v2094 = vld [vmem:[#allocation2 + $0x128] sm:$0xff]
        %v2095 = vld [vmem:[#allocation2 + $0x130] sm:$0xff]
        %v2096 = vld [vmem:[#allocation2 + $0x138] sm:$0xff]
        %v2097 = vld [vmem:[#allocation2 + $0x140] sm:$0xff]
        %v2098 = vld [vmem:[#allocation2 + $0x148] sm:$0xff]
        %v2099 = vld [vmem:[#allocation2 + $0x150] sm:$0xff]
        %v2100 = vld [vmem:[#allocation2 + $0x158] sm:$0xff]
        %v2101 = vld [vmem:[#allocation2 + $0x160] sm:$0xff]
        %v2102 = vld [vmem:[#allocation2 + $0x168] sm:$0xff]
        %v2103 = vld [vmem:[#allocation2 + $0x170] sm:$0xff]
        %v2104 = vld [vmem:[#allocation2 + $0x178] sm:$0xff]
        %v2105 = vld [vmem:[#allocation2 + $0x180] sm:$0xff]
        %v2106 = vld [vmem:[#allocation2 + $0x188] sm:$0xff]
        %v2107 = vld [vmem:[#allocation2 + $0x190] sm:$0xff]
        %v2108 = vld [vmem:[#allocation2 + $0x198] sm:$0xff]
        %v2109 = vld [vmem:[#allocation2 + $0x1a0] sm:$0xff]
        %v2110 = vld [vmem:[#allocation2 + $0x1a8] sm:$0xff]
        %v2111 = vld [vmem:[%s7] sm:$0xff]
        %v2112 = vld [vmem:[%s7 + $0x8] sm:$0xff]
        %v2113 = vld [vmem:[%s7 + $0x10] sm:$0xff]
        %v2114 = vld [vmem:[%s7 + $0x18] sm:$0xff]
        %2116 = vset.pattern.permute.xlu0 0
        %2117 = vperm.xlu0 %2116, %v2111
        %v2118 = vpop.permute.xlu0 %2117
        %2121 = vset.pattern.permute.xlu0 0
        %2122 = vperm.xlu0 %2121, %v2112
        %v2123 = vpop.permute.xlu0 %2122
        %2126 = vset.pattern.permute.xlu0 0
        %2127 = vperm.xlu0 %2126, %v2113
        %v2128 = vpop.permute.xlu0 %2127
        %2131 = vset.pattern.permute.xlu0 0
        %2132 = vperm.xlu0 %2131, %v2114
        %v2133 = vpop.permute.xlu0 %2132
        %v2143 = vunpack.c.l.b16 %v2049
        %v2144 = vunpack.c.h.b16 %v2049
        %v2145 = vunpack.c.l.b16 %v2050
        %v2146 = vunpack.c.l.b16 %v2051
        %v2147 = vunpack.c.h.b16 %v2051
        %v2148 = vunpack.c.l.b16 %v2052
        %v2149 = vunpack.c.l.b16 %v2053
        %v2150 = vunpack.c.h.b16 %v2053
        %v2151 = vunpack.c.l.b16 %v2054
        %v2152 = vunpack.c.l.b16 %v2055
        %v2153 = vunpack.c.h.b16 %v2055
        %v2154 = vunpack.c.l.b16 %v2056
        %v2155 = vpack.c.b16 %v2146, %v2143
        %v2156 = vpack.c.b16 %v2147, %v2144
        %v2157 = vpack.c.b16 %v2148, %v2145
        %v2158 = vpack.c.b16 %v2152, %v2149
        %v2159 = vpack.c.b16 %v2153, %v2150
        %v2160 = vpack.c.b16 %v2154, %v2151
        %v2166 = vsel %vm1406, %v2157, 0
        %v2169 = vsel %vm1406, %v2160, 0
        %2171 = vmatprep.subr.bf16.mxu0 %v2058
        %2172 = vmatpush1.bf16.msra.mxu0 %v2057
        %2173 = vmatprep.subr.bf16.mxu0 %v2061
        %2174 = vmatpush1.bf16.msra.mxu0 %v2060
        %2175 = vmatprep.subr.bf16.mxu0 %v2064
        %2176 = vmatpush1.bf16.msra.mxu0 %v2063
        %2177 = vmatprep.subr.bf16.mxu0 %v2067
        %2178 = vmatpush1.bf16.msra.mxu0 %v2066
        %2179 = vmatprep.subr.bf16.mxu0 %v2070
        %2180 = vmatpush1.bf16.msra.mxu0 %v2069
        %2181 = vmatprep.subr.bf16.mxu0 %v2073
        %2182 = vmatpush1.bf16.msra.mxu0 %v2072
        %2183 = vmatprep.subr.bf16.mxu0 %v2076
        %2184 = vmatpush1.bf16.msra.mxu0 %v2075
        %2185 = vmatprep.subr.bf16.mxu0 %v2079
        %2186 = vmatpush1.bf16.msra.mxu0 %v2078
        %2187 = vmatprep.subr.bf16.mxu0 %v2082
        %2188 = vmatpush1.bf16.msra.mxu0 %v2081
        %2189 = vmatprep.subr.bf16.mxu0 %v2085
        %2190 = vmatpush1.bf16.msra.mxu0 %v2084
        %2191 = vmatprep.subr.bf16.mxu0 %v2088
        %2192 = vmatpush1.bf16.msra.mxu0 %v2087
        %2193 = vmatprep.subr.bf16.mxu0 %v2091
        %2194 = vmatpush1.bf16.msra.mxu0 %v2090
        %2195 = vmatprep.subr.bf16.mxu0 %v2094
        %2196 = vmatpush1.bf16.msra.mxu0 %v2093
        %2197 = vmatprep.subr.bf16.mxu0 %v2097
        %2198 = vmatpush1.bf16.msra.mxu0 %v2096
        %2199 = vmatprep.subr.bf16.mxu0 %v2100
        %2200 = vmatpush1.bf16.msra.mxu0 %v2099
        %2201 = vmatprep.subr.bf16.mxu0 %v2103
        %2202 = vmatpush1.bf16.msra.mxu0 %v2102
        %2203 = vmatprep.mubr.bf16.mxu0 %v2156
        %2204 = vmatmul.mubr.bf16.gmra.mrb[0].mxu0 %v2155
        %v2205 = vpop.f32.mrb[0].mxu0
        %v2206 = vadd.f32 %v2118, %v2205
        %v2207 = vpop.f32.mrb[0].mxu0
        %v2208 = vadd.f32 %v2118, %v2207
        %v2209 = vpop.f32.mrb[0].mxu0
        %v2210 = vadd.f32 %v2123, %v2209
        %v2211 = vpop.f32.mrb[0].mxu0
        %v2212 = vadd.f32 %v2123, %v2211
        %2213 = vmatprep.mubr.bf16.mxu0 %v2159
        %2214 = vmatmul.mubr.bf16.gmra.mrb[0].mxu0 %v2158
        %v2215 = vpop.f32.mrb[0].mxu0
        %v2216 = vadd.f32 %v2128, %v2215
        %v2217 = vpop.f32.mrb[0].mxu0
        %v2218 = vadd.f32 %v2128, %v2217
        %v2219 = vpop.f32.mrb[0].mxu0
        %v2220 = vadd.f32 %v2133, %v2219
        %v2221 = vpop.f32.mrb[0].mxu0
        %v2222 = vadd.f32 %v2133, %v2221
        %2223 = vdwg.mxu0
        %2224 = vmatprep.subr.bf16.mxu0 %v2106
        %2225 = vmatpush1.bf16.msra.mxu0 %v2105
        %2226 = vmatprep.subr.bf16.mxu0 %v2109
        %2227 = vmatpush1.bf16.msra.mxu0 %v2108
        %2228 = vmatprep.subr.bf16.mxu0 0
        %2229 = vmatpush1.bf16.msra.mxu0 0
        %2230 = vmatprep.subr.bf16.mxu0 0
        %2231 = vmatpush1.bf16.msra.mxu0 0
        %2232 = vmatprep.subr.bf16.mxu0 0
        %2233 = vmatpush1.bf16.msra.mxu0 0
        %2234 = vmatprep.subr.bf16.mxu0 0
        %2235 = vmatpush1.bf16.msra.mxu0 0
        %2236 = vmatprep.subr.bf16.mxu0 0
        %2237 = vmatpush1.bf16.msra.mxu0 0
        %2238 = vmatprep.subr.bf16.mxu0 0
        %2239 = vmatpush1.bf16.msra.mxu0 0
        %2240 = vmatprep.subr.bf16.mxu0 0
        %2241 = vmatpush1.bf16.msra.mxu0 0
        %2242 = vmatprep.subr.bf16.mxu0 0
        %2243 = vmatpush1.bf16.msra.mxu0 0
        %2244 = vmatprep.subr.bf16.mxu0 0
        %2245 = vmatpush1.bf16.msra.mxu0 0
        %2246 = vmatprep.subr.bf16.mxu0 0
        %2247 = vmatpush1.bf16.msra.mxu0 0
        %2248 = vmatprep.subr.bf16.mxu0 0
        %2249 = vmatpush1.bf16.msra.mxu0 0
        %2250 = vmatprep.subr.bf16.mxu0 0
        %2251 = vmatpush1.bf16.msra.mxu0 0
        %2252 = vmatprep.subr.bf16.mxu0 0
        %2253 = vmatpush1.bf16.msra.mxu0 0
        %2254 = vmatprep.subr.bf16.mxu0 0
        %2255 = vmatpush1.bf16.msra.mxu0 0
        %2256 = vmatprep.mubr.bf16.mxu0 0
        %2257 = vmatmul.mubr.bf16.gmra.mrb[0].mxu0 %v2166
        %v2258 = vpop.f32.mrb[0].mxu0
        %v2259 = vadd.f32 %v2206, %v2258
        %v2260 = vpop.f32.mrb[0].mxu0
        %v2261 = vadd.f32 %v2208, %v2260
        %v2262 = vpop.f32.mrb[0].mxu0
        %v2263 = vadd.f32 %v2210, %v2262
        %v2264 = vpop.f32.mrb[0].mxu0
        %v2265 = vadd.f32 %v2212, %v2264
        %2266 = vmatprep.mubr.bf16.mxu0 0
        %2267 = vmatmul.mubr.bf16.gmra.mrb[0].mxu0 %v2169
        %v2268 = vpop.f32.mrb[0].mxu0
        %v2269 = vadd.f32 %v2216, %v2268
        %v2270 = vpop.f32.mrb[0].mxu0
        %v2271 = vadd.f32 %v2218, %v2270
        %v2272 = vpop.f32.mrb[0].mxu0
        %v2273 = vadd.f32 %v2220, %v2272
        %v2274 = vpop.f32.mrb[0].mxu0
        %v2275 = vadd.f32 %v2222, %v2274
        %2276 = vdwg.mxu0
        %2277 = vmatprep.subr.bf16.mxu0 0
        %2278 = vmatpush1.bf16.msra.mxu0 %v2059
        %2279 = vmatprep.subr.bf16.mxu0 0
        %2280 = vmatpush1.bf16.msra.mxu0 %v2062
        %2281 = vmatprep.subr.bf16.mxu0 0
        %2282 = vmatpush1.bf16.msra.mxu0 %v2065
        %2283 = vmatprep.subr.bf16.mxu0 0
        %2284 = vmatpush1.bf16.msra.mxu0 %v2068
        %2285 = vmatprep.subr.bf16.mxu0 0
        %2286 = vmatpush1.bf16.msra.mxu0 %v2071
        %2287 = vmatprep.subr.bf16.mxu0 0
        %2288 = vmatpush1.bf16.msra.mxu0 %v2074
        %2289 = vmatprep.subr.bf16.mxu0 0
        %2290 = vmatpush1.bf16.msra.mxu0 %v2077
        %2291 = vmatprep.subr.bf16.mxu0 0
        %2292 = vmatpush1.bf16.msra.mxu0 %v2080
        %2293 = vmatprep.subr.bf16.mxu0 0
        %2294 = vmatpush1.bf16.msra.mxu0 %v2083
        %2295 = vmatprep.subr.bf16.mxu0 0
        %2296 = vmatpush1.bf16.msra.mxu0 %v2086
        %2297 = vmatprep.subr.bf16.mxu0 0
        %2298 = vmatpush1.bf16.msra.mxu0 %v2089
        %2299 = vmatprep.subr.bf16.mxu0 0
        %2300 = vmatpush1.bf16.msra.mxu0 %v2092
        %2301 = vmatprep.subr.bf16.mxu0 0
        %2302 = vmatpush1.bf16.msra.mxu0 %v2095
        %2303 = vmatprep.subr.bf16.mxu0 0
        %2304 = vmatpush1.bf16.msra.mxu0 %v2098
        %2305 = vmatprep.subr.bf16.mxu0 0
        %2306 = vmatpush1.bf16.msra.mxu0 %v2101
        %2307 = vmatprep.subr.bf16.mxu0 0
        %2308 = vmatpush1.bf16.msra.mxu0 %v2104
        %2309 = vmatprep.mubr.bf16.mxu0 %v2156
        %2310 = vmatmul.mubr.bf16.gmra.mrb[0].mxu0 %v2155
        %v2311 = vpop.f32.mrb[0].mxu0
        %v2312 = vadd.f32 %v2118, %v2311
        %v2313 = vpop.f32.mrb[0].mxu0
        %v2314 = vpop.f32.mrb[0].mxu0
        %v2315 = vadd.f32 %v2123, %v2314
        %v2316 = vpop.f32.mrb[0].mxu0
        %2317 = vmatprep.mubr.bf16.mxu0 %v2159
        %2318 = vmatmul.mubr.bf16.gmra.mrb[0].mxu0 %v2158
        %v2319 = vpop.f32.mrb[0].mxu0
        %v2320 = vadd.f32 %v2128, %v2319
        %v2321 = vpop.f32.mrb[0].mxu0
        %v2322 = vpop.f32.mrb[0].mxu0
        %v2323 = vadd.f32 %v2133, %v2322
        %v2324 = vpop.f32.mrb[0].mxu0
        %2325 = vdwg.mxu0
        %2326 = vmatprep.subr.bf16.mxu0 0
        %2327 = vmatpush1.bf16.msra.mxu0 %v2107
        %2328 = vmatprep.subr.bf16.mxu0 0
        %2329 = vmatpush1.bf16.msra.mxu0 %v2110
        %2330 = vmatprep.subr.bf16.mxu0 0
        %2331 = vmatpush1.bf16.msra.mxu0 0
        %2332 = vmatprep.subr.bf16.mxu0 0
        %2333 = vmatpush1.bf16.msra.mxu0 0
        %2334 = vmatprep.subr.bf16.mxu0 0
        %2335 = vmatpush1.bf16.msra.mxu0 0
        %2336 = vmatprep.subr.bf16.mxu0 0
        %2337 = vmatpush1.bf16.msra.mxu0 0
        %2338 = vmatprep.subr.bf16.mxu0 0
        %2339 = vmatpush1.bf16.msra.mxu0 0
        %2340 = vmatprep.subr.bf16.mxu0 0
        %2341 = vmatpush1.bf16.msra.mxu0 0
        %2342 = vmatprep.subr.bf16.mxu0 0
        %2343 = vmatpush1.bf16.msra.mxu0 0
        %2344 = vmatprep.subr.bf16.mxu0 0
        %2345 = vmatpush1.bf16.msra.mxu0 0
        %2346 = vmatprep.subr.bf16.mxu0 0
        %2347 = vmatpush1.bf16.msra.mxu0 0
        %2348 = vmatprep.subr.bf16.mxu0 0
        %2349 = vmatpush1.bf16.msra.mxu0 0
        %2350 = vmatprep.subr.bf16.mxu0 0
        %2351 = vmatpush1.bf16.msra.mxu0 0
        %2352 = vmatprep.subr.bf16.mxu0 0
        %2353 = vmatpush1.bf16.msra.mxu0 0
        %2354 = vmatprep.subr.bf16.mxu0 0
        %2355 = vmatpush1.bf16.msra.mxu0 0
        %2356 = vmatprep.subr.bf16.mxu0 0
        %2357 = vmatpush1.bf16.msra.mxu0 0
        %2358 = vmatprep.mubr.bf16.mxu0 0
        %2359 = vmatmul.mubr.bf16.gmra.mrb[0].mxu0 %v2166
        %v2360 = vpop.f32.mrb[0].mxu0
        %v2361 = vadd.f32 %v2312, %v2360
        %v2362 = vpop.f32.mrb[0].mxu0
        %v2363 = vpop.f32.mrb[0].mxu0
        %v2364 = vadd.f32 %v2315, %v2363
        %v2365 = vpop.f32.mrb[0].mxu0
        %2366 = vmatprep.mubr.bf16.mxu0 0
        %2367 = vmatmul.mubr.bf16.gmra.mrb[0].mxu0 %v2169
        %v2368 = vpop.f32.mrb[0].mxu0
        %v2369 = vadd.f32 %v2320, %v2368
        %v2370 = vpop.f32.mrb[0].mxu0
        %v2371 = vpop.f32.mrb[0].mxu0
        %v2372 = vadd.f32 %v2323, %v2371
        %v2373 = vpop.f32.mrb[0].mxu0
        %2374 = vdwg.mxu0
        %v2375 = vtanh.pop %v2259
        %v2376 = vtanh.pop %v2261
        %v2377 = vtanh.pop %v2361
        %v2378 = vtanh.pop %v2263
        %v2379 = vtanh.pop %v2265
        %v2380 = vtanh.pop %v2364
        %v2381 = vtanh.pop %v2269
        %v2382 = vtanh.pop %v2271
        %v2383 = vtanh.pop %v2369
        %v2384 = vtanh.pop %v2273
        %v2385 = vtanh.pop %v2275
        %v2386 = vtanh.pop %v2372
        %v2387 = vmul.f32 %v870, %v2375
        %v2388 = vmul.f32 %v874, %v2376
        %v2389 = vmul.f32 %v878, %v2377
        %v2390 = vmul.f32 %v870, %v2378
        %v2391 = vmul.f32 %v874, %v2379
        %v2392 = vmul.f32 %v878, %v2380
        %v2393 = vmul.f32 %v870, %v2381
        %v2394 = vmul.f32 %v874, %v2382
        %v2395 = vmul.f32 %v878, %v2383
        %v2396 = vmul.f32 %v870, %v2384
        %v2397 = vmul.f32 %v874, %v2385
        %v2398 = vmul.f32 %v878, %v2386
        %v2399 = vadd.f32 %v2387, %v1641
        %v2400 = vadd.f32 %v2388, %v1642
        %v2401 = vadd.f32 %v2389, %v1643
        %v2402 = vadd.f32 %v2390, %v1644
        %v2403 = vadd.f32 %v2391, %v1645
        %v2404 = vadd.f32 %v2392, %v1646
        %v2405 = vadd.f32 %v2393, %v1647
        %v2406 = vadd.f32 %v2394, %v1648
        %v2407 = vadd.f32 %v2395, %v1649
        %v2408 = vadd.f32 %v2396, %v1650
        %v2409 = vadd.f32 %v2397, %v1651
        %v2410 = vadd.f32 %v2398, %v1652
        %2411 = vrot.lane.b32.xlu0 %v2399, 19
        %v2412 = vpop.permute.xlu0 %2411
        %2413 = vrot.lane.b32.xlu0 %v2402, 19
        %v2414 = vpop.permute.xlu0 %2413
        %2415 = vrot.lane.b32.xlu0 %v2405, 19
        %v2416 = vpop.permute.xlu0 %2415
        %2417 = vrot.lane.b32.xlu0 %v2408, 19
        %v2418 = vpop.permute.xlu0 %2417
        %2419 = vrot.lane.b32.xlu0 %v2400, 19
        %v2420 = vpop.permute.xlu0 %2419
        %2421 = vrot.lane.b32.xlu0 %v2403, 19
        %v2422 = vpop.permute.xlu0 %2421
        %2423 = vrot.lane.b32.xlu0 %v2406, 19
        %v2424 = vpop.permute.xlu0 %2423
        %2425 = vrot.lane.b32.xlu0 %v2409, 19
        %v2426 = vpop.permute.xlu0 %2425
        %2427 = vrot.lane.b32.xlu0 %v2401, 19
        %v2428 = vpop.permute.xlu0 %2427
        %2429 = vrot.lane.b32.xlu0 %v2404, 19
        %v2430 = vpop.permute.xlu0 %2429
        %2431 = vrot.lane.b32.xlu0 %v2407, 19
        %v2432 = vpop.permute.xlu0 %2431
        %2433 = vrot.lane.b32.xlu0 %v2410, 19
        %v2434 = vpop.permute.xlu0 %2433
        %v2435 = vsel %vm478, %v2420, %v2428
        %v2436 = vsel %vm478, %v2422, %v2430
        %v2437 = vsel %vm478, %v2424, %v2432
        %v2438 = vsel %vm478, %v2426, %v2434
        %v2439 = vsel %vm478, %v2412, %v2420
        %v2440 = vsel %vm478, %v2414, %v2422
        %v2441 = vsel %vm478, %v2416, %v2424
        %v2442 = vsel %vm478, %v2418, %v2426
        %v2443 = vsel %vm478, %v2428, %v2412
        %v2444 = vsel %vm478, %v2430, %v2414
        %v2445 = vsel %vm478, %v2432, %v2416
        %v2446 = vsel %vm478, %v2434, %v2418
        %v2447 = vpack.c.bf16 %v2444, %v2443
        %v2448 = vpack.c.bf16 %v2440, %v2439
        %v2449 = vpack.c.bf16 %v2436, %v2435
        %v2450 = vpack.c.bf16 %v2446, %v2445
        %v2451 = vpack.c.bf16 %v2442, %v2441
        %v2452 = vpack.c.bf16 %v2438, %v2437
        %2453 = vst [vmem:[#allocation2] sm:$0xff] %v2447
        %2454 = vst [vmem:[#allocation2 + $0x8] sm:$0xff] %v2448
        %2455 = vst [vmem:[#allocation2 + $0x10] sm:$0xff] %v2449
        %2456 = vst [vmem:[#allocation2 + $0x18] sm:$0xff] %v2450
        %2457 = vst [vmem:[#allocation2 + $0x20] sm:$0xff] %v2451
        %2458 = vst [vmem:[#allocation2 + $0x28] sm:$0xff] %v2452
        %2459 = vrot.lane.b32.xlu0 %v2399, 18
        %v2460 = vpop.permute.xlu0 %2459
        %2461 = vrot.lane.b32.xlu0 %v2402, 18
        %v2462 = vpop.permute.xlu0 %2461
        %2463 = vrot.lane.b32.xlu0 %v2405, 18
        %v2464 = vpop.permute.xlu0 %2463
        %2465 = vrot.lane.b32.xlu0 %v2408, 18
        %v2466 = vpop.permute.xlu0 %2465
        %2467 = vrot.lane.b32.xlu0 %v2400, 18
        %v2468 = vpop.permute.xlu0 %2467
        %2469 = vrot.lane.b32.xlu0 %v2403, 18
        %v2470 = vpop.permute.xlu0 %2469
        %2471 = vrot.lane.b32.xlu0 %v2406, 18
        %v2472 = vpop.permute.xlu0 %2471
        %2473 = vrot.lane.b32.xlu0 %v2409, 18
        %v2474 = vpop.permute.xlu0 %2473
        %2475 = vrot.lane.b32.xlu0 %v2401, 18
        %v2476 = vpop.permute.xlu0 %2475
        %2477 = vrot.lane.b32.xlu0 %v2404, 18
        %v2478 = vpop.permute.xlu0 %2477
        %2479 = vrot.lane.b32.xlu0 %v2407, 18
        %v2480 = vpop.permute.xlu0 %2479
        %2481 = vrot.lane.b32.xlu0 %v2410, 18
        %v2482 = vpop.permute.xlu0 %2481
        %v2483 = vsel %vm503, %v2468, %v2476
        %v2484 = vsel %vm503, %v2470, %v2478
        %v2485 = vsel %vm503, %v2472, %v2480
        %v2486 = vsel %vm503, %v2474, %v2482
        %v2487 = vsel %vm503, %v2460, %v2468
        %v2488 = vsel %vm503, %v2462, %v2470
        %v2489 = vsel %vm503, %v2464, %v2472
        %v2490 = vsel %vm503, %v2466, %v2474
        %v2491 = vsel %vm503, %v2476, %v2460
        %v2492 = vsel %vm503, %v2478, %v2462
        %v2493 = vsel %vm503, %v2480, %v2464
        %v2494 = vsel %vm503, %v2482, %v2466
        %v2495 = vpack.c.bf16 %v2492, %v2491
        %v2496 = vpack.c.bf16 %v2488, %v2487
        %v2497 = vpack.c.bf16 %v2484, %v2483
        %v2498 = vpack.c.bf16 %v2494, %v2493
        %v2499 = vpack.c.bf16 %v2490, %v2489
        %v2500 = vpack.c.bf16 %v2486, %v2485
        %2501 = vst [vmem:[#allocation2 + $0x30] sm:$0xff] %v2495
        %2502 = vst [vmem:[#allocation2 + $0x38] sm:$0xff] %v2496
        %2503 = vst [vmem:[#allocation2 + $0x40] sm:$0xff] %v2497
        %2504 = vst [vmem:[#allocation2 + $0x48] sm:$0xff] %v2498
        %2505 = vst [vmem:[#allocation2 + $0x50] sm:$0xff] %v2499
        %2506 = vst [vmem:[#allocation2 + $0x58] sm:$0xff] %v2500
        %2507 = vrot.lane.b32.xlu0 %v2399, 17
        %v2508 = vpop.permute.xlu0 %2507
        %2509 = vrot.lane.b32.xlu0 %v2402, 17
        %v2510 = vpop.permute.xlu0 %2509
        %2511 = vrot.lane.b32.xlu0 %v2405, 17
        %v2512 = vpop.permute.xlu0 %2511
        %2513 = vrot.lane.b32.xlu0 %v2408, 17
        %v2514 = vpop.permute.xlu0 %2513
        %2515 = vrot.lane.b32.xlu0 %v2400, 17
        %v2516 = vpop.permute.xlu0 %2515
        %2517 = vrot.lane.b32.xlu0 %v2403, 17
        %v2518 = vpop.permute.xlu0 %2517
        %2519 = vrot.lane.b32.xlu0 %v2406, 17
        %v2520 = vpop.permute.xlu0 %2519
        %2521 = vrot.lane.b32.xlu0 %v2409, 17
        %v2522 = vpop.permute.xlu0 %2521
        %2523 = vrot.lane.b32.xlu0 %v2401, 17
        %v2524 = vpop.permute.xlu0 %2523
        %2525 = vrot.lane.b32.xlu0 %v2404, 17
        %v2526 = vpop.permute.xlu0 %2525
        %2527 = vrot.lane.b32.xlu0 %v2407, 17
        %v2528 = vpop.permute.xlu0 %2527
        %2529 = vrot.lane.b32.xlu0 %v2410, 17
        %v2530 = vpop.permute.xlu0 %2529
        %v2531 = vsel %vm528, %v2516, %v2524
        %v2532 = vsel %vm528, %v2518, %v2526
        %v2533 = vsel %vm528, %v2520, %v2528
        %v2534 = vsel %vm528, %v2522, %v2530
        %v2535 = vsel %vm528, %v2508, %v2516
        %v2536 = vsel %vm528, %v2510, %v2518
        %v2537 = vsel %vm528, %v2512, %v2520
        %v2538 = vsel %vm528, %v2514, %v2522
        %v2539 = vsel %vm528, %v2524, %v2508
        %v2540 = vsel %vm528, %v2526, %v2510
        %v2541 = vsel %vm528, %v2528, %v2512
        %v2542 = vsel %vm528, %v2530, %v2514
        %v2543 = vpack.c.bf16 %v2540, %v2539
        %v2544 = vpack.c.bf16 %v2536, %v2535
        %v2545 = vpack.c.bf16 %v2532, %v2531
        %v2546 = vpack.c.bf16 %v2542, %v2541
        %v2547 = vpack.c.bf16 %v2538, %v2537
        %v2548 = vpack.c.bf16 %v2534, %v2533
        %2549 = vst [vmem:[#allocation2 + $0x60] sm:$0xff] %v2543
        %2550 = vst [vmem:[#allocation2 + $0x68] sm:$0xff] %v2544
        %2551 = vst [vmem:[#allocation2 + $0x70] sm:$0xff] %v2545
        %2552 = vst [vmem:[#allocation2 + $0x78] sm:$0xff] %v2546
        %2553 = vst [vmem:[#allocation2 + $0x80] sm:$0xff] %v2547
        %2554 = vst [vmem:[#allocation2 + $0x88] sm:$0xff] %v2548
        %2555 = vrot.lane.b32.xlu0 %v2399, 1
        %v2556 = vpop.permute.xlu0 %2555
        %2557 = vrot.lane.b32.xlu0 %v2402, 1
        %v2558 = vpop.permute.xlu0 %2557
        %2559 = vrot.lane.b32.xlu0 %v2405, 1
        %v2560 = vpop.permute.xlu0 %2559
        %2561 = vrot.lane.b32.xlu0 %v2408, 1
        %v2562 = vpop.permute.xlu0 %2561
        %2563 = vrot.lane.b32.xlu0 %v2400, 1
        %v2564 = vpop.permute.xlu0 %2563
        %2565 = vrot.lane.b32.xlu0 %v2403, 1
        %v2566 = vpop.permute.xlu0 %2565
        %2567 = vrot.lane.b32.xlu0 %v2406, 1
        %v2568 = vpop.permute.xlu0 %2567
        %2569 = vrot.lane.b32.xlu0 %v2409, 1
        %v2570 = vpop.permute.xlu0 %2569
        %2571 = vrot.lane.b32.xlu0 %v2401, 1
        %v2572 = vpop.permute.xlu0 %2571
        %2573 = vrot.lane.b32.xlu0 %v2404, 1
        %v2574 = vpop.permute.xlu0 %2573
        %2575 = vrot.lane.b32.xlu0 %v2407, 1
        %v2576 = vpop.permute.xlu0 %2575
        %2577 = vrot.lane.b32.xlu0 %v2410, 1
        %v2578 = vpop.permute.xlu0 %2577
        %v2579 = vsel %vm553, %v2564, %v2572
        %v2580 = vsel %vm553, %v2566, %v2574
        %v2581 = vsel %vm553, %v2568, %v2576
        %v2582 = vsel %vm553, %v2570, %v2578
        %v2583 = vsel %vm553, %v2556, %v2564
        %v2584 = vsel %vm553, %v2558, %v2566
        %v2585 = vsel %vm553, %v2560, %v2568
        %v2586 = vsel %vm553, %v2562, %v2570
        %v2587 = vsel %vm553, %v2572, %v2556
        %v2588 = vsel %vm553, %v2574, %v2558
        %v2589 = vsel %vm553, %v2576, %v2560
        %v2590 = vsel %vm553, %v2578, %v2562
        %v2591 = vpack.c.bf16 %v2588, %v2587
        %v2592 = vpack.c.bf16 %v2584, %v2583
        %v2593 = vpack.c.bf16 %v2580, %v2579
        %v2594 = vpack.c.bf16 %v2590, %v2589
        %v2595 = vpack.c.bf16 %v2586, %v2585
        %v2596 = vpack.c.bf16 %v2582, %v2581
        %2597 = vst [vmem:[#allocation2 + $0x90] sm:$0xff] %v2591
        %2598 = vst [vmem:[#allocation2 + $0x98] sm:$0xff] %v2592
        %2599 = vst [vmem:[#allocation2 + $0xa0] sm:$0xff] %v2593
        %2600 = vst [vmem:[#allocation2 + $0xa8] sm:$0xff] %v2594
        %2601 = vst [vmem:[#allocation2 + $0xb0] sm:$0xff] %v2595
        %2602 = vst [vmem:[#allocation2 + $0xb8] sm:$0xff] %v2596
        %v2603 = vpack.c.bf16 %v2402, %v2399
        %v2604 = vpack.c.bf16 %v2403, %v2400
        %v2605 = vpack.c.bf16 %v2404, %v2401
        %v2606 = vpack.c.bf16 %v2408, %v2405
        %v2607 = vpack.c.bf16 %v2409, %v2406
        %v2608 = vpack.c.bf16 %v2410, %v2407
        %2609 = vst [vmem:[#allocation2 + $0xc0] sm:$0xff] %v2603
        %2610 = vst [vmem:[#allocation2 + $0xc8] sm:$0xff] %v2604
        %2611 = vst [vmem:[#allocation2 + $0xd0] sm:$0xff] %v2605
        %2612 = vst [vmem:[#allocation2 + $0xd8] sm:$0xff] %v2606
        %2613 = vst [vmem:[#allocation2 + $0xe0] sm:$0xff] %v2607
        %2614 = vst [vmem:[#allocation2 + $0xe8] sm:$0xff] %v2608
        %2615 = vrot.lane.b32.xlu0 %v2399, 127
        %v2616 = vpop.permute.xlu0 %2615
        %2617 = vrot.lane.b32.xlu0 %v2402, 127
        %v2618 = vpop.permute.xlu0 %2617
        %2619 = vrot.lane.b32.xlu0 %v2405, 127
        %v2620 = vpop.permute.xlu0 %2619
        %2621 = vrot.lane.b32.xlu0 %v2408, 127
        %v2622 = vpop.permute.xlu0 %2621
        %2623 = vrot.lane.b32.xlu0 %v2400, 127
        %v2624 = vpop.permute.xlu0 %2623
        %2625 = vrot.lane.b32.xlu0 %v2403, 127
        %v2626 = vpop.permute.xlu0 %2625
        %2627 = vrot.lane.b32.xlu0 %v2406, 127
        %v2628 = vpop.permute.xlu0 %2627
        %2629 = vrot.lane.b32.xlu0 %v2409, 127
        %v2630 = vpop.permute.xlu0 %2629
        %2631 = vrot.lane.b32.xlu0 %v2401, 127
        %v2632 = vpop.permute.xlu0 %2631
        %2633 = vrot.lane.b32.xlu0 %v2404, 127
        %v2634 = vpop.permute.xlu0 %2633
        %2635 = vrot.lane.b32.xlu0 %v2407, 127
        %v2636 = vpop.permute.xlu0 %2635
        %2637 = vrot.lane.b32.xlu0 %v2410, 127
        %v2638 = vpop.permute.xlu0 %2637
        %v2639 = vsel %vm584, %v2624, %v2632
        %v2640 = vsel %vm584, %v2626, %v2634
        %v2641 = vsel %vm584, %v2628, %v2636
        %v2642 = vsel %vm584, %v2630, %v2638
        %v2643 = vsel %vm584, %v2616, %v2624
        %v2644 = vsel %vm584, %v2618, %v2626
        %v2645 = vsel %vm584, %v2620, %v2628
        %v2646 = vsel %vm584, %v2622, %v2630
        %v2647 = vsel %vm584, %v2632, %v2616
        %v2648 = vsel %vm584, %v2634, %v2618
        %v2649 = vsel %vm584, %v2636, %v2620
        %v2650 = vsel %vm584, %v2638, %v2622
        %v2651 = vpack.c.bf16 %v2644, %v2643
        %v2652 = vpack.c.bf16 %v2640, %v2639
        %v2653 = vpack.c.bf16 %v2648, %v2647
        %v2654 = vpack.c.bf16 %v2646, %v2645
        %v2655 = vpack.c.bf16 %v2642, %v2641
        %v2656 = vpack.c.bf16 %v2650, %v2649
        %2657 = vst [vmem:[#allocation2 + $0xf0] sm:$0xff] %v2651
        %2658 = vst [vmem:[#allocation2 + $0xf8] sm:$0xff] %v2652
        %2659 = vst [vmem:[#allocation2 + $0x100] sm:$0xff] %v2653
        %2660 = vst [vmem:[#allocation2 + $0x108] sm:$0xff] %v2654
        %2661 = vst [vmem:[#allocation2 + $0x110] sm:$0xff] %v2655
        %2662 = vst [vmem:[#allocation2 + $0x118] sm:$0xff] %v2656
        %2663 = vrot.lane.b32.xlu0 %v2399, 111
        %v2664 = vpop.permute.xlu0 %2663
        %2665 = vrot.lane.b32.xlu0 %v2402, 111
        %v2666 = vpop.permute.xlu0 %2665
        %2667 = vrot.lane.b32.xlu0 %v2405, 111
        %v2668 = vpop.permute.xlu0 %2667
        %2669 = vrot.lane.b32.xlu0 %v2408, 111
        %v2670 = vpop.permute.xlu0 %2669
        %2671 = vrot.lane.b32.xlu0 %v2400, 111
        %v2672 = vpop.permute.xlu0 %2671
        %2673 = vrot.lane.b32.xlu0 %v2403, 111
        %v2674 = vpop.permute.xlu0 %2673
        %2675 = vrot.lane.b32.xlu0 %v2406, 111
        %v2676 = vpop.permute.xlu0 %2675
        %2677 = vrot.lane.b32.xlu0 %v2409, 111
        %v2678 = vpop.permute.xlu0 %2677
        %2679 = vrot.lane.b32.xlu0 %v2401, 111
        %v2680 = vpop.permute.xlu0 %2679
        %2681 = vrot.lane.b32.xlu0 %v2404, 111
        %v2682 = vpop.permute.xlu0 %2681
        %2683 = vrot.lane.b32.xlu0 %v2407, 111
        %v2684 = vpop.permute.xlu0 %2683
        %2685 = vrot.lane.b32.xlu0 %v2410, 111
        %v2686 = vpop.permute.xlu0 %2685
        %v2687 = vsel %vm609, %v2672, %v2680
        %v2688 = vsel %vm609, %v2674, %v2682
        %v2689 = vsel %vm609, %v2676, %v2684
        %v2690 = vsel %vm609, %v2678, %v2686
        %v2691 = vsel %vm609, %v2664, %v2672
        %v2692 = vsel %vm609, %v2666, %v2674
        %v2693 = vsel %vm609, %v2668, %v2676
        %v2694 = vsel %vm609, %v2670, %v2678
        %v2695 = vsel %vm609, %v2680, %v2664
        %v2696 = vsel %vm609, %v2682, %v2666
        %v2697 = vsel %vm609, %v2684, %v2668
        %v2698 = vsel %vm609, %v2686, %v2670
        %v2699 = vpack.c.bf16 %v2692, %v2691
        %v2700 = vpack.c.bf16 %v2688, %v2687
        %v2701 = vpack.c.bf16 %v2696, %v2695
        %v2702 = vpack.c.bf16 %v2694, %v2693
        %v2703 = vpack.c.bf16 %v2690, %v2689
        %v2704 = vpack.c.bf16 %v2698, %v2697
        %2705 = vst [vmem:[#allocation2 + $0x120] sm:$0xff] %v2699
        %2706 = vst [vmem:[#allocation2 + $0x128] sm:$0xff] %v2700
        %2707 = vst [vmem:[#allocation2 + $0x130] sm:$0xff] %v2701
        %2708 = vst [vmem:[#allocation2 + $0x138] sm:$0xff] %v2702
        %2709 = vst [vmem:[#allocation2 + $0x140] sm:$0xff] %v2703
        %2710 = vst [vmem:[#allocation2 + $0x148] sm:$0xff] %v2704
        %2711 = vrot.lane.b32.xlu0 %v2399, 110
        %v2712 = vpop.permute.xlu0 %2711
        %2713 = vrot.lane.b32.xlu0 %v2402, 110
        %v2714 = vpop.permute.xlu0 %2713
        %2715 = vrot.lane.b32.xlu0 %v2405, 110
        %v2716 = vpop.permute.xlu0 %2715
        %2717 = vrot.lane.b32.xlu0 %v2408, 110
        %v2718 = vpop.permute.xlu0 %2717
        %2719 = vrot.lane.b32.xlu0 %v2400, 110
        %v2720 = vpop.permute.xlu0 %2719
        %2721 = vrot.lane.b32.xlu0 %v2403, 110
        %v2722 = vpop.permute.xlu0 %2721
        %2723 = vrot.lane.b32.xlu0 %v2406, 110
        %v2724 = vpop.permute.xlu0 %2723
        %2725 = vrot.lane.b32.xlu0 %v2409, 110
        %v2726 = vpop.permute.xlu0 %2725
        %2727 = vrot.lane.b32.xlu0 %v2401, 110
        %v2728 = vpop.permute.xlu0 %2727
        %2729 = vrot.lane.b32.xlu0 %v2404, 110
        %v2730 = vpop.permute.xlu0 %2729
        %2731 = vrot.lane.b32.xlu0 %v2407, 110
        %v2732 = vpop.permute.xlu0 %2731
        %2733 = vrot.lane.b32.xlu0 %v2410, 110
        %v2734 = vpop.permute.xlu0 %2733
        %v2735 = vsel %vm634, %v2720, %v2728
        %v2736 = vsel %vm634, %v2722, %v2730
        %v2737 = vsel %vm634, %v2724, %v2732
        %v2738 = vsel %vm634, %v2726, %v2734
        %v2739 = vsel %vm634, %v2712, %v2720
        %v2740 = vsel %vm634, %v2714, %v2722
        %v2741 = vsel %vm634, %v2716, %v2724
        %v2742 = vsel %vm634, %v2718, %v2726
        %v2743 = vsel %vm634, %v2728, %v2712
        %v2744 = vsel %vm634, %v2730, %v2714
        %v2745 = vsel %vm634, %v2732, %v2716
        %v2746 = vsel %vm634, %v2734, %v2718
        %v2747 = vpack.c.bf16 %v2740, %v2739
        %v2748 = vpack.c.bf16 %v2736, %v2735
        %v2749 = vpack.c.bf16 %v2744, %v2743
        %v2750 = vpack.c.bf16 %v2742, %v2741
        %v2751 = vpack.c.bf16 %v2738, %v2737
        %v2752 = vpack.c.bf16 %v2746, %v2745
        %2753 = vst [vmem:[#allocation2 + $0x150] sm:$0xff] %v2747
        %2754 = vst [vmem:[#allocation2 + $0x158] sm:$0xff] %v2748
        %2755 = vst [vmem:[#allocation2 + $0x160] sm:$0xff] %v2749
        %2756 = vst [vmem:[#allocation2 + $0x168] sm:$0xff] %v2750
        %2757 = vst [vmem:[#allocation2 + $0x170] sm:$0xff] %v2751
        %2758 = vst [vmem:[#allocation2 + $0x178] sm:$0xff] %v2752
        %2759 = vrot.lane.b32.xlu0 %v2399, 109
        %v2760 = vpop.permute.xlu0 %2759
        %2761 = vrot.lane.b32.xlu0 %v2402, 109
        %v2762 = vpop.permute.xlu0 %2761
        %2763 = vrot.lane.b32.xlu0 %v2405, 109
        %v2764 = vpop.permute.xlu0 %2763
        %2765 = vrot.lane.b32.xlu0 %v2408, 109
        %v2766 = vpop.permute.xlu0 %2765
        %2767 = vrot.lane.b32.xlu0 %v2400, 109
        %v2768 = vpop.permute.xlu0 %2767
        %2769 = vrot.lane.b32.xlu0 %v2403, 109
        %v2770 = vpop.permute.xlu0 %2769
        %2771 = vrot.lane.b32.xlu0 %v2406, 109
        %v2772 = vpop.permute.xlu0 %2771
        %2773 = vrot.lane.b32.xlu0 %v2409, 109
        %v2774 = vpop.permute.xlu0 %2773
        %2775 = vrot.lane.b32.xlu0 %v2401, 109
        %v2776 = vpop.permute.xlu0 %2775
        %2777 = vrot.lane.b32.xlu0 %v2404, 109
        %v2778 = vpop.permute.xlu0 %2777
        %2779 = vrot.lane.b32.xlu0 %v2407, 109
        %v2780 = vpop.permute.xlu0 %2779
        %2781 = vrot.lane.b32.xlu0 %v2410, 109
        %v2782 = vpop.permute.xlu0 %2781
        %v2783 = vsel %vm659, %v2768, %v2776
        %v2784 = vsel %vm659, %v2770, %v2778
        %v2785 = vsel %vm659, %v2772, %v2780
        %v2786 = vsel %vm659, %v2774, %v2782
        %v2787 = vsel %vm659, %v2760, %v2768
        %v2788 = vsel %vm659, %v2762, %v2770
        %v2789 = vsel %vm659, %v2764, %v2772
        %v2790 = vsel %vm659, %v2766, %v2774
        %v2791 = vsel %vm659, %v2776, %v2760
        %v2792 = vsel %vm659, %v2778, %v2762
        %v2793 = vsel %vm659, %v2780, %v2764
        %v2794 = vsel %vm659, %v2782, %v2766
        %v2795 = vpack.c.bf16 %v2788, %v2787
        %v2796 = vpack.c.bf16 %v2784, %v2783
        %v2797 = vpack.c.bf16 %v2792, %v2791
        %v2798 = vpack.c.bf16 %v2790, %v2789
        %v2799 = vpack.c.bf16 %v2786, %v2785
        %v2800 = vpack.c.bf16 %v2794, %v2793
        %2801 = vst [vmem:[#allocation2 + $0x180] sm:$0xff] %v2795
        %2802 = vst [vmem:[#allocation2 + $0x188] sm:$0xff] %v2796
        %2803 = vst [vmem:[#allocation2 + $0x190] sm:$0xff] %v2797
        %2804 = vst [vmem:[#allocation2 + $0x198] sm:$0xff] %v2798
        %2805 = vst [vmem:[#allocation2 + $0x1a0] sm:$0xff] %v2799
        %2806 = vst [vmem:[#allocation2 + $0x1a8] sm:$0xff] %v2800
        %v2807 = vld [vmem:[#allocation8] sm:$0xff]
        %v2808 = vld [vmem:[#allocation8 + $0x8] sm:$0xf]
        %v2809 = vld [vmem:[#allocation8 + $0xc] sm:$0xff]
        %v2810 = vld [vmem:[#allocation8 + $0x14] sm:$0xf]
        %v2811 = vld [vmem:[#allocation8 + $0x18] sm:$0xff]
        %v2812 = vld [vmem:[#allocation8 + $0x20] sm:$0xf]
        %v2813 = vld [vmem:[#allocation8 + $0x24] sm:$0xff]
        %v2814 = vld [vmem:[#allocation8 + $0x2c] sm:$0xf]
        %v2815 = vld [vmem:[#allocation2] sm:$0xff]
        %v2816 = vld [vmem:[#allocation2 + $0x8] sm:$0xff]
        %v2817 = vld [vmem:[#allocation2 + $0x10] sm:$0xff]
        %v2818 = vld [vmem:[#allocation2 + $0x18] sm:$0xff]
        %v2819 = vld [vmem:[#allocation2 + $0x20] sm:$0xff]
        %v2820 = vld [vmem:[#allocation2 + $0x28] sm:$0xff]
        %v2821 = vld [vmem:[#allocation2 + $0x30] sm:$0xff]
        %v2822 = vld [vmem:[#allocation2 + $0x38] sm:$0xff]
        %v2823 = vld [vmem:[#allocation2 + $0x40] sm:$0xff]
        %v2824 = vld [vmem:[#allocation2 + $0x48] sm:$0xff]
        %v2825 = vld [vmem:[#allocation2 + $0x50] sm:$0xff]
        %v2826 = vld [vmem:[#allocation2 + $0x58] sm:$0xff]
        %v2827 = vld [vmem:[#allocation2 + $0x60] sm:$0xff]
        %v2828 = vld [vmem:[#allocation2 + $0x68] sm:$0xff]
        %v2829 = vld [vmem:[#allocation2 + $0x70] sm:$0xff]
        %v2830 = vld [vmem:[#allocation2 + $0x78] sm:$0xff]
        %v2831 = vld [vmem:[#allocation2 + $0x80] sm:$0xff]
        %v2832 = vld [vmem:[#allocation2 + $0x88] sm:$0xff]
        %v2833 = vld [vmem:[#allocation2 + $0x90] sm:$0xff]
        %v2834 = vld [vmem:[#allocation2 + $0x98] sm:$0xff]
        %v2835 = vld [vmem:[#allocation2 + $0xa0] sm:$0xff]
        %v2836 = vld [vmem:[#allocation2 + $0xa8] sm:$0xff]
        %v2837 = vld [vmem:[#allocation2 + $0xb0] sm:$0xff]
        %v2838 = vld [vmem:[#allocation2 + $0xb8] sm:$0xff]
        %v2839 = vld [vmem:[#allocation2 + $0xc0] sm:$0xff]
        %v2840 = vld [vmem:[#allocation2 + $0xc8] sm:$0xff]
        %v2841 = vld [vmem:[#allocation2 + $0xd0] sm:$0xff]
        %v2842 = vld [vmem:[#allocation2 + $0xd8] sm:$0xff]
        %v2843 = vld [vmem:[#allocation2 + $0xe0] sm:$0xff]
        %v2844 = vld [vmem:[#allocation2 + $0xe8] sm:$0xff]
        %v2845 = vld [vmem:[#allocation2 + $0xf0] sm:$0xff]
        %v2846 = vld [vmem:[#allocation2 + $0xf8] sm:$0xff]
        %v2847 = vld [vmem:[#allocation2 + $0x100] sm:$0xff]
        %v2848 = vld [vmem:[#allocation2 + $0x108] sm:$0xff]
        %v2849 = vld [vmem:[#allocation2 + $0x110] sm:$0xff]
        %v2850 = vld [vmem:[#allocation2 + $0x118] sm:$0xff]
        %v2851 = vld [vmem:[#allocation2 + $0x120] sm:$0xff]
        %v2852 = vld [vmem:[#allocation2 + $0x128] sm:$0xff]
        %v2853 = vld [vmem:[#allocation2 + $0x130] sm:$0xff]
        %v2854 = vld [vmem:[#allocation2 + $0x138] sm:$0xff]
        %v2855 = vld [vmem:[#allocation2 + $0x140] sm:$0xff]
        %v2856 = vld [vmem:[#allocation2 + $0x148] sm:$0xff]
        %v2857 = vld [vmem:[#allocation2 + $0x150] sm:$0xff]
        %v2858 = vld [vmem:[#allocation2 + $0x158] sm:$0xff]
        %v2859 = vld [vmem:[#allocation2 + $0x160] sm:$0xff]
        %v2860 = vld [vmem:[#allocation2 + $0x168] sm:$0xff]
        %v2861 = vld [vmem:[#allocation2 + $0x170] sm:$0xff]
        %v2862 = vld [vmem:[#allocation2 + $0x178] sm:$0xff]
        %v2863 = vld [vmem:[#allocation2 + $0x180] sm:$0xff]
        %v2864 = vld [vmem:[#allocation2 + $0x188] sm:$0xff]
        %v2865 = vld [vmem:[#allocation2 + $0x190] sm:$0xff]
        %v2866 = vld [vmem:[#allocation2 + $0x198] sm:$0xff]
        %v2867 = vld [vmem:[#allocation2 + $0x1a0] sm:$0xff]
        %v2868 = vld [vmem:[#allocation2 + $0x1a8] sm:$0xff]
        %v2869 = vld [vmem:[%s9] sm:$0xff]
        %v2870 = vld [vmem:[%s9 + $0x8] sm:$0xff]
        %v2871 = vld [vmem:[%s9 + $0x10] sm:$0xff]
        %v2872 = vld [vmem:[%s9 + $0x18] sm:$0xff]
        %2874 = vset.pattern.permute.xlu0 0
        %2875 = vperm.xlu0 %2874, %v2869
        %v2876 = vpop.permute.xlu0 %2875
        %2879 = vset.pattern.permute.xlu0 0
        %2880 = vperm.xlu0 %2879, %v2870
        %v2881 = vpop.permute.xlu0 %2880
        %2884 = vset.pattern.permute.xlu0 0
        %2885 = vperm.xlu0 %2884, %v2871
        %v2886 = vpop.permute.xlu0 %2885
        %2889 = vset.pattern.permute.xlu0 0
        %2890 = vperm.xlu0 %2889, %v2872
        %v2891 = vpop.permute.xlu0 %2890
        %v2901 = vunpack.c.l.b16 %v2807
        %v2902 = vunpack.c.h.b16 %v2807
        %v2903 = vunpack.c.l.b16 %v2808
        %v2904 = vunpack.c.l.b16 %v2809
        %v2905 = vunpack.c.h.b16 %v2809
        %v2906 = vunpack.c.l.b16 %v2810
        %v2907 = vunpack.c.l.b16 %v2811
        %v2908 = vunpack.c.h.b16 %v2811
        %v2909 = vunpack.c.l.b16 %v2812
        %v2910 = vunpack.c.l.b16 %v2813
        %v2911 = vunpack.c.h.b16 %v2813
        %v2912 = vunpack.c.l.b16 %v2814
        %v2913 = vpack.c.b16 %v2904, %v2901
        %v2914 = vpack.c.b16 %v2905, %v2902
        %v2915 = vpack.c.b16 %v2906, %v2903
        %v2916 = vpack.c.b16 %v2910, %v2907
        %v2917 = vpack.c.b16 %v2911, %v2908
        %v2918 = vpack.c.b16 %v2912, %v2909
        %v2924 = vsel %vm1406, %v2915, 0
        %v2927 = vsel %vm1406, %v2918, 0
        %2929 = vmatprep.subr.bf16.mxu0 %v2816
        %2930 = vmatpush1.bf16.msra.mxu0 %v2815
        %2931 = vmatprep.subr.bf16.mxu0 %v2819
        %2932 = vmatpush1.bf16.msra.mxu0 %v2818
        %2933 = vmatprep.subr.bf16.mxu0 %v2822
        %2934 = vmatpush1.bf16.msra.mxu0 %v2821
        %2935 = vmatprep.subr.bf16.mxu0 %v2825
        %2936 = vmatpush1.bf16.msra.mxu0 %v2824
        %2937 = vmatprep.subr.bf16.mxu0 %v2828
        %2938 = vmatpush1.bf16.msra.mxu0 %v2827
        %2939 = vmatprep.subr.bf16.mxu0 %v2831
        %2940 = vmatpush1.bf16.msra.mxu0 %v2830
        %2941 = vmatprep.subr.bf16.mxu0 %v2834
        %2942 = vmatpush1.bf16.msra.mxu0 %v2833
        %2943 = vmatprep.subr.bf16.mxu0 %v2837
        %2944 = vmatpush1.bf16.msra.mxu0 %v2836
        %2945 = vmatprep.subr.bf16.mxu0 %v2840
        %2946 = vmatpush1.bf16.msra.mxu0 %v2839
        %2947 = vmatprep.subr.bf16.mxu0 %v2843
        %2948 = vmatpush1.bf16.msra.mxu0 %v2842
        %2949 = vmatprep.subr.bf16.mxu0 %v2846
        %2950 = vmatpush1.bf16.msra.mxu0 %v2845
        %2951 = vmatprep.subr.bf16.mxu0 %v2849
        %2952 = vmatpush1.bf16.msra.mxu0 %v2848
        %2953 = vmatprep.subr.bf16.mxu0 %v2852
        %2954 = vmatpush1.bf16.msra.mxu0 %v2851
        %2955 = vmatprep.subr.bf16.mxu0 %v2855
        %2956 = vmatpush1.bf16.msra.mxu0 %v2854
        %2957 = vmatprep.subr.bf16.mxu0 %v2858
        %2958 = vmatpush1.bf16.msra.mxu0 %v2857
        %2959 = vmatprep.subr.bf16.mxu0 %v2861
        %2960 = vmatpush1.bf16.msra.mxu0 %v2860
        %2961 = vmatprep.mubr.bf16.mxu0 %v2914
        %2962 = vmatmul.mubr.bf16.gmra.mrb[0].mxu0 %v2913
        %v2963 = vpop.f32.mrb[0].mxu0
        %v2964 = vadd.f32 %v2876, %v2963
        %v2965 = vpop.f32.mrb[0].mxu0
        %v2966 = vadd.f32 %v2876, %v2965
        %v2967 = vpop.f32.mrb[0].mxu0
        %v2968 = vadd.f32 %v2881, %v2967
        %v2969 = vpop.f32.mrb[0].mxu0
        %v2970 = vadd.f32 %v2881, %v2969
        %2971 = vmatprep.mubr.bf16.mxu0 %v2917
        %2972 = vmatmul.mubr.bf16.gmra.mrb[0].mxu0 %v2916
        %v2973 = vpop.f32.mrb[0].mxu0
        %v2974 = vadd.f32 %v2886, %v2973
        %v2975 = vpop.f32.mrb[0].mxu0
        %v2976 = vadd.f32 %v2886, %v2975
        %v2977 = vpop.f32.mrb[0].mxu0
        %v2978 = vadd.f32 %v2891, %v2977
        %v2979 = vpop.f32.mrb[0].mxu0
        %v2980 = vadd.f32 %v2891, %v2979
        %2981 = vdwg.mxu0
        %2982 = vmatprep.subr.bf16.mxu0 %v2864
        %2983 = vmatpush1.bf16.msra.mxu0 %v2863
        %2984 = vmatprep.subr.bf16.mxu0 %v2867
        %2985 = vmatpush1.bf16.msra.mxu0 %v2866
        %2986 = vmatprep.subr.bf16.mxu0 0
        %2987 = vmatpush1.bf16.msra.mxu0 0
        %2988 = vmatprep.subr.bf16.mxu0 0
        %2989 = vmatpush1.bf16.msra.mxu0 0
        %2990 = vmatprep.subr.bf16.mxu0 0
        %2991 = vmatpush1.bf16.msra.mxu0 0
        %2992 = vmatprep.subr.bf16.mxu0 0
        %2993 = vmatpush1.bf16.msra.mxu0 0
        %2994 = vmatprep.subr.bf16.mxu0 0
        %2995 = vmatpush1.bf16.msra.mxu0 0
        %2996 = vmatprep.subr.bf16.mxu0 0
        %2997 = vmatpush1.bf16.msra.mxu0 0
        %2998 = vmatprep.subr.bf16.mxu0 0
        %2999 = vmatpush1.bf16.msra.mxu0 0
        %3000 = vmatprep.subr.bf16.mxu0 0
        %3001 = vmatpush1.bf16.msra.mxu0 0
        %3002 = vmatprep.subr.bf16.mxu0 0
        %3003 = vmatpush1.bf16.msra.mxu0 0
        %3004 = vmatprep.subr.bf16.mxu0 0
        %3005 = vmatpush1.bf16.msra.mxu0 0
        %3006 = vmatprep.subr.bf16.mxu0 0
        %3007 = vmatpush1.bf16.msra.mxu0 0
        %3008 = vmatprep.subr.bf16.mxu0 0
        %3009 = vmatpush1.bf16.msra.mxu0 0
        %3010 = vmatprep.subr.bf16.mxu0 0
        %3011 = vmatpush1.bf16.msra.mxu0 0
        %3012 = vmatprep.subr.bf16.mxu0 0
        %3013 = vmatpush1.bf16.msra.mxu0 0
        %3014 = vmatprep.mubr.bf16.mxu0 0
        %3015 = vmatmul.mubr.bf16.gmra.mrb[0].mxu0 %v2924
        %v3016 = vpop.f32.mrb[0].mxu0
        %v3017 = vadd.f32 %v2964, %v3016
        %v3018 = vpop.f32.mrb[0].mxu0
        %v3019 = vadd.f32 %v2966, %v3018
        %v3020 = vpop.f32.mrb[0].mxu0
        %v3021 = vadd.f32 %v2968, %v3020
        %v3022 = vpop.f32.mrb[0].mxu0
        %v3023 = vadd.f32 %v2970, %v3022
        %3024 = vmatprep.mubr.bf16.mxu0 0
        %3025 = vmatmul.mubr.bf16.gmra.mrb[0].mxu0 %v2927
        %v3026 = vpop.f32.mrb[0].mxu0
        %v3027 = vadd.f32 %v2974, %v3026
        %v3028 = vpop.f32.mrb[0].mxu0
        %v3029 = vadd.f32 %v2976, %v3028
        %v3030 = vpop.f32.mrb[0].mxu0
        %v3031 = vadd.f32 %v2978, %v3030
        %v3032 = vpop.f32.mrb[0].mxu0
        %v3033 = vadd.f32 %v2980, %v3032
        %3034 = vdwg.mxu0
        %3035 = vmatprep.subr.bf16.mxu0 0
        %3036 = vmatpush1.bf16.msra.mxu0 %v2817
        %3037 = vmatprep.subr.bf16.mxu0 0
        %3038 = vmatpush1.bf16.msra.mxu0 %v2820
        %3039 = vmatprep.subr.bf16.mxu0 0
        %3040 = vmatpush1.bf16.msra.mxu0 %v2823
        %3041 = vmatprep.subr.bf16.mxu0 0
        %3042 = vmatpush1.bf16.msra.mxu0 %v2826
        %3043 = vmatprep.subr.bf16.mxu0 0
        %3044 = vmatpush1.bf16.msra.mxu0 %v2829
        %3045 = vmatprep.subr.bf16.mxu0 0
        %3046 = vmatpush1.bf16.msra.mxu0 %v2832
        %3047 = vmatprep.subr.bf16.mxu0 0
        %3048 = vmatpush1.bf16.msra.mxu0 %v2835
        %3049 = vmatprep.subr.bf16.mxu0 0
        %3050 = vmatpush1.bf16.msra.mxu0 %v2838
        %3051 = vmatprep.subr.bf16.mxu0 0
        %3052 = vmatpush1.bf16.msra.mxu0 %v2841
        %3053 = vmatprep.subr.bf16.mxu0 0
        %3054 = vmatpush1.bf16.msra.mxu0 %v2844
        %3055 = vmatprep.subr.bf16.mxu0 0
        %3056 = vmatpush1.bf16.msra.mxu0 %v2847
        %3057 = vmatprep.subr.bf16.mxu0 0
        %3058 = vmatpush1.bf16.msra.mxu0 %v2850
        %3059 = vmatprep.subr.bf16.mxu0 0
        %3060 = vmatpush1.bf16.msra.mxu0 %v2853
        %3061 = vmatprep.subr.bf16.mxu0 0
        %3062 = vmatpush1.bf16.msra.mxu0 %v2856
        %3063 = vmatprep.subr.bf16.mxu0 0
        %3064 = vmatpush1.bf16.msra.mxu0 %v2859
        %3065 = vmatprep.subr.bf16.mxu0 0
        %3066 = vmatpush1.bf16.msra.mxu0 %v2862
        %3067 = vmatprep.mubr.bf16.mxu0 %v2914
        %3068 = vmatmul.mubr.bf16.gmra.mrb[0].mxu0 %v2913
        %v3069 = vpop.f32.mrb[0].mxu0
        %v3070 = vadd.f32 %v2876, %v3069
        %v3071 = vpop.f32.mrb[0].mxu0
        %v3072 = vpop.f32.mrb[0].mxu0
        %v3073 = vadd.f32 %v2881, %v3072
        %v3074 = vpop.f32.mrb[0].mxu0
        %3075 = vmatprep.mubr.bf16.mxu0 %v2917
        %3076 = vmatmul.mubr.bf16.gmra.mrb[0].mxu0 %v2916
        %v3077 = vpop.f32.mrb[0].mxu0
        %v3078 = vadd.f32 %v2886, %v3077
        %v3079 = vpop.f32.mrb[0].mxu0
        %v3080 = vpop.f32.mrb[0].mxu0
        %v3081 = vadd.f32 %v2891, %v3080
        %v3082 = vpop.f32.mrb[0].mxu0
        %3083 = vdwg.mxu0
        %3084 = vmatprep.subr.bf16.mxu0 0
        %3085 = vmatpush1.bf16.msra.mxu0 %v2865
        %3086 = vmatprep.subr.bf16.mxu0 0
        %3087 = vmatpush1.bf16.msra.mxu0 %v2868
        %3088 = vmatprep.subr.bf16.mxu0 0
        %3089 = vmatpush1.bf16.msra.mxu0 0
        %3090 = vmatprep.subr.bf16.mxu0 0
        %3091 = vmatpush1.bf16.msra.mxu0 0
        %3092 = vmatprep.subr.bf16.mxu0 0
        %3093 = vmatpush1.bf16.msra.mxu0 0
        %3094 = vmatprep.subr.bf16.mxu0 0
        %3095 = vmatpush1.bf16.msra.mxu0 0
        %3096 = vmatprep.subr.bf16.mxu0 0
        %3097 = vmatpush1.bf16.msra.mxu0 0
        %3098 = vmatprep.subr.bf16.mxu0 0
        %3099 = vmatpush1.bf16.msra.mxu0 0
        %3100 = vmatprep.subr.bf16.mxu0 0
        %3101 = vmatpush1.bf16.msra.mxu0 0
        %3102 = vmatprep.subr.bf16.mxu0 0
        %3103 = vmatpush1.bf16.msra.mxu0 0
        %3104 = vmatprep.subr.bf16.mxu0 0
        %3105 = vmatpush1.bf16.msra.mxu0 0
        %3106 = vmatprep.subr.bf16.mxu0 0
        %3107 = vmatpush1.bf16.msra.mxu0 0
        %3108 = vmatprep.subr.bf16.mxu0 0
        %3109 = vmatpush1.bf16.msra.mxu0 0
        %3110 = vmatprep.subr.bf16.mxu0 0
        %3111 = vmatpush1.bf16.msra.mxu0 0
        %3112 = vmatprep.subr.bf16.mxu0 0
        %3113 = vmatpush1.bf16.msra.mxu0 0
        %3114 = vmatprep.subr.bf16.mxu0 0
        %3115 = vmatpush1.bf16.msra.mxu0 0
        %3116 = vmatprep.mubr.bf16.mxu0 0
        %3117 = vmatmul.mubr.bf16.gmra.mrb[0].mxu0 %v2924
        %v3118 = vpop.f32.mrb[0].mxu0
        %v3119 = vadd.f32 %v3070, %v3118
        %v3120 = vpop.f32.mrb[0].mxu0
        %v3121 = vpop.f32.mrb[0].mxu0
        %v3122 = vadd.f32 %v3073, %v3121
        %v3123 = vpop.f32.mrb[0].mxu0
        %3124 = vmatprep.mubr.bf16.mxu0 0
        %3125 = vmatmul.mubr.bf16.gmra.mrb[0].mxu0 %v2927
        %v3126 = vpop.f32.mrb[0].mxu0
        %v3127 = vadd.f32 %v3078, %v3126
        %v3128 = vpop.f32.mrb[0].mxu0
        %v3129 = vpop.f32.mrb[0].mxu0
        %v3130 = vadd.f32 %v3081, %v3129
        %v3131 = vpop.f32.mrb[0].mxu0
        %3132 = vdwg.mxu0
        %v3133 = vtanh.pop %v3017
        %v3134 = vtanh.pop %v3019
        %v3135 = vtanh.pop %v3119
        %v3136 = vtanh.pop %v3021
        %v3137 = vtanh.pop %v3023
        %v3138 = vtanh.pop %v3122
        %v3139 = vtanh.pop %v3027
        %v3140 = vtanh.pop %v3029
        %v3141 = vtanh.pop %v3127
        %v3142 = vtanh.pop %v3031
        %v3143 = vtanh.pop %v3033
        %v3144 = vtanh.pop %v3130
        %v3145 = vmul.f32 %v870, %v3133
        %v3146 = vmul.f32 %v874, %v3134
        %v3147 = vmul.f32 %v878, %v3135
        %v3148 = vmul.f32 %v870, %v3136
        %v3149 = vmul.f32 %v874, %v3137
        %v3150 = vmul.f32 %v878, %v3138
        %v3151 = vmul.f32 %v870, %v3139
        %v3152 = vmul.f32 %v874, %v3140
        %v3153 = vmul.f32 %v878, %v3141
        %v3154 = vmul.f32 %v870, %v3142
        %v3155 = vmul.f32 %v874, %v3143
        %v3156 = vmul.f32 %v878, %v3144
        %v3157 = vadd.f32 %v3145, %v2399
        %v3158 = vadd.f32 %v3146, %v2400
        %v3159 = vadd.f32 %v3147, %v2401
        %v3160 = vadd.f32 %v3148, %v2402
        %v3161 = vadd.f32 %v3149, %v2403
        %v3162 = vadd.f32 %v3150, %v2404
        %v3163 = vadd.f32 %v3151, %v2405
        %v3164 = vadd.f32 %v3152, %v2406
        %v3165 = vadd.f32 %v3153, %v2407
        %v3166 = vadd.f32 %v3154, %v2408
        %v3167 = vadd.f32 %v3155, %v2409
        %v3168 = vadd.f32 %v3156, %v2410
        %3169 = vrot.lane.b32.xlu0 %v3157, 19
        %v3170 = vpop.permute.xlu0 %3169
        %3171 = vrot.lane.b32.xlu0 %v3160, 19
        %v3172 = vpop.permute.xlu0 %3171
        %3173 = vrot.lane.b32.xlu0 %v3163, 19
        %v3174 = vpop.permute.xlu0 %3173
        %3175 = vrot.lane.b32.xlu0 %v3166, 19
        %v3176 = vpop.permute.xlu0 %3175
        %3177 = vrot.lane.b32.xlu0 %v3158, 19
        %v3178 = vpop.permute.xlu0 %3177
        %3179 = vrot.lane.b32.xlu0 %v3161, 19
        %v3180 = vpop.permute.xlu0 %3179
        %3181 = vrot.lane.b32.xlu0 %v3164, 19
        %v3182 = vpop.permute.xlu0 %3181
        %3183 = vrot.lane.b32.xlu0 %v3167, 19
        %v3184 = vpop.permute.xlu0 %3183
        %3185 = vrot.lane.b32.xlu0 %v3159, 19
        %v3186 = vpop.permute.xlu0 %3185
        %3187 = vrot.lane.b32.xlu0 %v3162, 19
        %v3188 = vpop.permute.xlu0 %3187
        %3189 = vrot.lane.b32.xlu0 %v3165, 19
        %v3190 = vpop.permute.xlu0 %3189
        %3191 = vrot.lane.b32.xlu0 %v3168, 19
        %v3192 = vpop.permute.xlu0 %3191
        %v3193 = vsel %vm478, %v3178, %v3186
        %v3194 = vsel %vm478, %v3180, %v3188
        %v3195 = vsel %vm478, %v3182, %v3190
        %v3196 = vsel %vm478, %v3184, %v3192
        %v3197 = vsel %vm478, %v3170, %v3178
        %v3198 = vsel %vm478, %v3172, %v3180
        %v3199 = vsel %vm478, %v3174, %v3182
        %v3200 = vsel %vm478, %v3176, %v3184
        %v3201 = vsel %vm478, %v3186, %v3170
        %v3202 = vsel %vm478, %v3188, %v3172
        %v3203 = vsel %vm478, %v3190, %v3174
        %v3204 = vsel %vm478, %v3192, %v3176
        %v3205 = vpack.c.bf16 %v3202, %v3201
        %v3206 = vpack.c.bf16 %v3198, %v3197
        %v3207 = vpack.c.bf16 %v3194, %v3193
        %v3208 = vpack.c.bf16 %v3204, %v3203
        %v3209 = vpack.c.bf16 %v3200, %v3199
        %v3210 = vpack.c.bf16 %v3196, %v3195
        %3211 = vst [vmem:[#allocation2] sm:$0xff] %v3205
        %3212 = vst [vmem:[#allocation2 + $0x8] sm:$0xff] %v3206
        %3213 = vst [vmem:[#allocation2 + $0x10] sm:$0xff] %v3207
        %3214 = vst [vmem:[#allocation2 + $0x18] sm:$0xff] %v3208
        %3215 = vst [vmem:[#allocation2 + $0x20] sm:$0xff] %v3209
        %3216 = vst [vmem:[#allocation2 + $0x28] sm:$0xff] %v3210
        %3217 = vrot.lane.b32.xlu0 %v3157, 18
        %v3218 = vpop.permute.xlu0 %3217
        %3219 = vrot.lane.b32.xlu0 %v3160, 18
        %v3220 = vpop.permute.xlu0 %3219
        %3221 = vrot.lane.b32.xlu0 %v3163, 18
        %v3222 = vpop.permute.xlu0 %3221
        %3223 = vrot.lane.b32.xlu0 %v3166, 18
        %v3224 = vpop.permute.xlu0 %3223
        %3225 = vrot.lane.b32.xlu0 %v3158, 18
        %v3226 = vpop.permute.xlu0 %3225
        %3227 = vrot.lane.b32.xlu0 %v3161, 18
        %v3228 = vpop.permute.xlu0 %3227
        %3229 = vrot.lane.b32.xlu0 %v3164, 18
        %v3230 = vpop.permute.xlu0 %3229
        %3231 = vrot.lane.b32.xlu0 %v3167, 18
        %v3232 = vpop.permute.xlu0 %3231
        %3233 = vrot.lane.b32.xlu0 %v3159, 18
        %v3234 = vpop.permute.xlu0 %3233
        %3235 = vrot.lane.b32.xlu0 %v3162, 18
        %v3236 = vpop.permute.xlu0 %3235
        %3237 = vrot.lane.b32.xlu0 %v3165, 18
        %v3238 = vpop.permute.xlu0 %3237
        %3239 = vrot.lane.b32.xlu0 %v3168, 18
        %v3240 = vpop.permute.xlu0 %3239
        %v3241 = vsel %vm503, %v3226, %v3234
        %v3242 = vsel %vm503, %v3228, %v3236
        %v3243 = vsel %vm503, %v3230, %v3238
        %v3244 = vsel %vm503, %v3232, %v3240
        %v3245 = vsel %vm503, %v3218, %v3226
        %v3246 = vsel %vm503, %v3220, %v3228
        %v3247 = vsel %vm503, %v3222, %v3230
        %v3248 = vsel %vm503, %v3224, %v3232
        %v3249 = vsel %vm503, %v3234, %v3218
        %v3250 = vsel %vm503, %v3236, %v3220
        %v3251 = vsel %vm503, %v3238, %v3222
        %v3252 = vsel %vm503, %v3240, %v3224
        %v3253 = vpack.c.bf16 %v3250, %v3249
        %v3254 = vpack.c.bf16 %v3246, %v3245
        %v3255 = vpack.c.bf16 %v3242, %v3241
        %v3256 = vpack.c.bf16 %v3252, %v3251
        %v3257 = vpack.c.bf16 %v3248, %v3247
        %v3258 = vpack.c.bf16 %v3244, %v3243
        %3259 = vst [vmem:[#allocation2 + $0x30] sm:$0xff] %v3253
        %3260 = vst [vmem:[#allocation2 + $0x38] sm:$0xff] %v3254
        %3261 = vst [vmem:[#allocation2 + $0x40] sm:$0xff] %v3255
        %3262 = vst [vmem:[#allocation2 + $0x48] sm:$0xff] %v3256
        %3263 = vst [vmem:[#allocation2 + $0x50] sm:$0xff] %v3257
        %3264 = vst [vmem:[#allocation2 + $0x58] sm:$0xff] %v3258
        %3265 = vrot.lane.b32.xlu0 %v3157, 17
        %v3266 = vpop.permute.xlu0 %3265
        %3267 = vrot.lane.b32.xlu0 %v3160, 17
        %v3268 = vpop.permute.xlu0 %3267
        %3269 = vrot.lane.b32.xlu0 %v3163, 17
        %v3270 = vpop.permute.xlu0 %3269
        %3271 = vrot.lane.b32.xlu0 %v3166, 17
        %v3272 = vpop.permute.xlu0 %3271
        %3273 = vrot.lane.b32.xlu0 %v3158, 17
        %v3274 = vpop.permute.xlu0 %3273
        %3275 = vrot.lane.b32.xlu0 %v3161, 17
        %v3276 = vpop.permute.xlu0 %3275
        %3277 = vrot.lane.b32.xlu0 %v3164, 17
        %v3278 = vpop.permute.xlu0 %3277
        %3279 = vrot.lane.b32.xlu0 %v3167, 17
        %v3280 = vpop.permute.xlu0 %3279
        %3281 = vrot.lane.b32.xlu0 %v3159, 17
        %v3282 = vpop.permute.xlu0 %3281
        %3283 = vrot.lane.b32.xlu0 %v3162, 17
        %v3284 = vpop.permute.xlu0 %3283
        %3285 = vrot.lane.b32.xlu0 %v3165, 17
        %v3286 = vpop.permute.xlu0 %3285
        %3287 = vrot.lane.b32.xlu0 %v3168, 17
        %v3288 = vpop.permute.xlu0 %3287
        %v3289 = vsel %vm528, %v3274, %v3282
        %v3290 = vsel %vm528, %v3276, %v3284
        %v3291 = vsel %vm528, %v3278, %v3286
        %v3292 = vsel %vm528, %v3280, %v3288
        %v3293 = vsel %vm528, %v3266, %v3274
        %v3294 = vsel %vm528, %v3268, %v3276
        %v3295 = vsel %vm528, %v3270, %v3278
        %v3296 = vsel %vm528, %v3272, %v3280
        %v3297 = vsel %vm528, %v3282, %v3266
        %v3298 = vsel %vm528, %v3284, %v3268
        %v3299 = vsel %vm528, %v3286, %v3270
        %v3300 = vsel %vm528, %v3288, %v3272
        %v3301 = vpack.c.bf16 %v3298, %v3297
        %v3302 = vpack.c.bf16 %v3294, %v3293
        %v3303 = vpack.c.bf16 %v3290, %v3289
        %v3304 = vpack.c.bf16 %v3300, %v3299
        %v3305 = vpack.c.bf16 %v3296, %v3295
        %v3306 = vpack.c.bf16 %v3292, %v3291
        %3307 = vst [vmem:[#allocation2 + $0x60] sm:$0xff] %v3301
        %3308 = vst [vmem:[#allocation2 + $0x68] sm:$0xff] %v3302
        %3309 = vst [vmem:[#allocation2 + $0x70] sm:$0xff] %v3303
        %3310 = vst [vmem:[#allocation2 + $0x78] sm:$0xff] %v3304
        %3311 = vst [vmem:[#allocation2 + $0x80] sm:$0xff] %v3305
        %3312 = vst [vmem:[#allocation2 + $0x88] sm:$0xff] %v3306
        %3313 = vrot.lane.b32.xlu0 %v3157, 1
        %v3314 = vpop.permute.xlu0 %3313
        %3315 = vrot.lane.b32.xlu0 %v3160, 1
        %v3316 = vpop.permute.xlu0 %3315
        %3317 = vrot.lane.b32.xlu0 %v3163, 1
        %v3318 = vpop.permute.xlu0 %3317
        %3319 = vrot.lane.b32.xlu0 %v3166, 1
        %v3320 = vpop.permute.xlu0 %3319
        %3321 = vrot.lane.b32.xlu0 %v3158, 1
        %v3322 = vpop.permute.xlu0 %3321
        %3323 = vrot.lane.b32.xlu0 %v3161, 1
        %v3324 = vpop.permute.xlu0 %3323
        %3325 = vrot.lane.b32.xlu0 %v3164, 1
        %v3326 = vpop.permute.xlu0 %3325
        %3327 = vrot.lane.b32.xlu0 %v3167, 1
        %v3328 = vpop.permute.xlu0 %3327
        %3329 = vrot.lane.b32.xlu0 %v3159, 1
        %v3330 = vpop.permute.xlu0 %3329
        %3331 = vrot.lane.b32.xlu0 %v3162, 1
        %v3332 = vpop.permute.xlu0 %3331
        %3333 = vrot.lane.b32.xlu0 %v3165, 1
        %v3334 = vpop.permute.xlu0 %3333
        %3335 = vrot.lane.b32.xlu0 %v3168, 1
        %v3336 = vpop.permute.xlu0 %3335
        %v3337 = vsel %vm553, %v3322, %v3330
        %v3338 = vsel %vm553, %v3324, %v3332
        %v3339 = vsel %vm553, %v3326, %v3334
        %v3340 = vsel %vm553, %v3328, %v3336
        %v3341 = vsel %vm553, %v3314, %v3322
        %v3342 = vsel %vm553, %v3316, %v3324
        %v3343 = vsel %vm553, %v3318, %v3326
        %v3344 = vsel %vm553, %v3320, %v3328
        %v3345 = vsel %vm553, %v3330, %v3314
        %v3346 = vsel %vm553, %v3332, %v3316
        %v3347 = vsel %vm553, %v3334, %v3318
        %v3348 = vsel %vm553, %v3336, %v3320
        %v3349 = vpack.c.bf16 %v3346, %v3345
        %v3350 = vpack.c.bf16 %v3342, %v3341
        %v3351 = vpack.c.bf16 %v3338, %v3337
        %v3352 = vpack.c.bf16 %v3348, %v3347
        %v3353 = vpack.c.bf16 %v3344, %v3343
        %v3354 = vpack.c.bf16 %v3340, %v3339
        %3355 = vst [vmem:[#allocation2 + $0x90] sm:$0xff] %v3349
        %3356 = vst [vmem:[#allocation2 + $0x98] sm:$0xff] %v3350
        %3357 = vst [vmem:[#allocation2 + $0xa0] sm:$0xff] %v3351
        %3358 = vst [vmem:[#allocation2 + $0xa8] sm:$0xff] %v3352
        %3359 = vst [vmem:[#allocation2 + $0xb0] sm:$0xff] %v3353
        %3360 = vst [vmem:[#allocation2 + $0xb8] sm:$0xff] %v3354
        %v3361 = vpack.c.bf16 %v3160, %v3157
        %v3362 = vpack.c.bf16 %v3161, %v3158
        %v3363 = vpack.c.bf16 %v3162, %v3159
        %v3364 = vpack.c.bf16 %v3166, %v3163
        %v3365 = vpack.c.bf16 %v3167, %v3164
        %v3366 = vpack.c.bf16 %v3168, %v3165
        %3367 = vst [vmem:[#allocation2 + $0xc0] sm:$0xff] %v3361
        %3368 = vst [vmem:[#allocation2 + $0xc8] sm:$0xff] %v3362
        %3369 = vst [vmem:[#allocation2 + $0xd0] sm:$0xff] %v3363
        %3370 = vst [vmem:[#allocation2 + $0xd8] sm:$0xff] %v3364
        %3371 = vst [vmem:[#allocation2 + $0xe0] sm:$0xff] %v3365
        %3372 = vst [vmem:[#allocation2 + $0xe8] sm:$0xff] %v3366
        %3373 = vrot.lane.b32.xlu0 %v3157, 127
        %v3374 = vpop.permute.xlu0 %3373
        %3375 = vrot.lane.b32.xlu0 %v3160, 127
        %v3376 = vpop.permute.xlu0 %3375
        %3377 = vrot.lane.b32.xlu0 %v3163, 127
        %v3378 = vpop.permute.xlu0 %3377
        %3379 = vrot.lane.b32.xlu0 %v3166, 127
        %v3380 = vpop.permute.xlu0 %3379
        %3381 = vrot.lane.b32.xlu0 %v3158, 127
        %v3382 = vpop.permute.xlu0 %3381
        %3383 = vrot.lane.b32.xlu0 %v3161, 127
        %v3384 = vpop.permute.xlu0 %3383
        %3385 = vrot.lane.b32.xlu0 %v3164, 127
        %v3386 = vpop.permute.xlu0 %3385
        %3387 = vrot.lane.b32.xlu0 %v3167, 127
        %v3388 = vpop.permute.xlu0 %3387
        %3389 = vrot.lane.b32.xlu0 %v3159, 127
        %v3390 = vpop.permute.xlu0 %3389
        %3391 = vrot.lane.b32.xlu0 %v3162, 127
        %v3392 = vpop.permute.xlu0 %3391
        %3393 = vrot.lane.b32.xlu0 %v3165, 127
        %v3394 = vpop.permute.xlu0 %3393
        %3395 = vrot.lane.b32.xlu0 %v3168, 127
        %v3396 = vpop.permute.xlu0 %3395
        %v3397 = vsel %vm584, %v3382, %v3390
        %v3398 = vsel %vm584, %v3384, %v3392
        %v3399 = vsel %vm584, %v3386, %v3394
        %v3400 = vsel %vm584, %v3388, %v3396
        %v3401 = vsel %vm584, %v3374, %v3382
        %v3402 = vsel %vm584, %v3376, %v3384
        %v3403 = vsel %vm584, %v3378, %v3386
        %v3404 = vsel %vm584, %v3380, %v3388
        %v3405 = vsel %vm584, %v3390, %v3374
        %v3406 = vsel %vm584, %v3392, %v3376
        %v3407 = vsel %vm584, %v3394, %v3378
        %v3408 = vsel %vm584, %v3396, %v3380
        %v3409 = vpack.c.bf16 %v3402, %v3401
        %v3410 = vpack.c.bf16 %v3398, %v3397
        %v3411 = vpack.c.bf16 %v3406, %v3405
        %v3412 = vpack.c.bf16 %v3404, %v3403
        %v3413 = vpack.c.bf16 %v3400, %v3399
        %v3414 = vpack.c.bf16 %v3408, %v3407
        %3415 = vst [vmem:[#allocation2 + $0xf0] sm:$0xff] %v3409
        %3416 = vst [vmem:[#allocation2 + $0xf8] sm:$0xff] %v3410
        %3417 = vst [vmem:[#allocation2 + $0x100] sm:$0xff] %v3411
        %3418 = vst [vmem:[#allocation2 + $0x108] sm:$0xff] %v3412
        %3419 = vst [vmem:[#allocation2 + $0x110] sm:$0xff] %v3413
        %3420 = vst [vmem:[#allocation2 + $0x118] sm:$0xff] %v3414
        %3421 = vrot.lane.b32.xlu0 %v3157, 111
        %v3422 = vpop.permute.xlu0 %3421
        %3423 = vrot.lane.b32.xlu0 %v3160, 111
        %v3424 = vpop.permute.xlu0 %3423
        %3425 = vrot.lane.b32.xlu0 %v3163, 111
        %v3426 = vpop.permute.xlu0 %3425
        %3427 = vrot.lane.b32.xlu0 %v3166, 111
        %v3428 = vpop.permute.xlu0 %3427
        %3429 = vrot.lane.b32.xlu0 %v3158, 111
        %v3430 = vpop.permute.xlu0 %3429
        %3431 = vrot.lane.b32.xlu0 %v3161, 111
        %v3432 = vpop.permute.xlu0 %3431
        %3433 = vrot.lane.b32.xlu0 %v3164, 111
        %v3434 = vpop.permute.xlu0 %3433
        %3435 = vrot.lane.b32.xlu0 %v3167, 111
        %v3436 = vpop.permute.xlu0 %3435
        %3437 = vrot.lane.b32.xlu0 %v3159, 111
        %v3438 = vpop.permute.xlu0 %3437
        %3439 = vrot.lane.b32.xlu0 %v3162, 111
        %v3440 = vpop.permute.xlu0 %3439
        %3441 = vrot.lane.b32.xlu0 %v3165, 111
        %v3442 = vpop.permute.xlu0 %3441
        %3443 = vrot.lane.b32.xlu0 %v3168, 111
        %v3444 = vpop.permute.xlu0 %3443
        %v3445 = vsel %vm609, %v3430, %v3438
        %v3446 = vsel %vm609, %v3432, %v3440
        %v3447 = vsel %vm609, %v3434, %v3442
        %v3448 = vsel %vm609, %v3436, %v3444
        %v3449 = vsel %vm609, %v3422, %v3430
        %v3450 = vsel %vm609, %v3424, %v3432
        %v3451 = vsel %vm609, %v3426, %v3434
        %v3452 = vsel %vm609, %v3428, %v3436
        %v3453 = vsel %vm609, %v3438, %v3422
        %v3454 = vsel %vm609, %v3440, %v3424
        %v3455 = vsel %vm609, %v3442, %v3426
        %v3456 = vsel %vm609, %v3444, %v3428
        %v3457 = vpack.c.bf16 %v3450, %v3449
        %v3458 = vpack.c.bf16 %v3446, %v3445
        %v3459 = vpack.c.bf16 %v3454, %v3453
        %v3460 = vpack.c.bf16 %v3452, %v3451
        %v3461 = vpack.c.bf16 %v3448, %v3447
        %v3462 = vpack.c.bf16 %v3456, %v3455
        %3463 = vst [vmem:[#allocation2 + $0x120] sm:$0xff] %v3457
        %3464 = vst [vmem:[#allocation2 + $0x128] sm:$0xff] %v3458
        %3465 = vst [vmem:[#allocation2 + $0x130] sm:$0xff] %v3459
        %3466 = vst [vmem:[#allocation2 + $0x138] sm:$0xff] %v3460
        %3467 = vst [vmem:[#allocation2 + $0x140] sm:$0xff] %v3461
        %3468 = vst [vmem:[#allocation2 + $0x148] sm:$0xff] %v3462
        %3469 = vrot.lane.b32.xlu0 %v3157, 110
        %v3470 = vpop.permute.xlu0 %3469
        %3471 = vrot.lane.b32.xlu0 %v3160, 110
        %v3472 = vpop.permute.xlu0 %3471
        %3473 = vrot.lane.b32.xlu0 %v3163, 110
        %v3474 = vpop.permute.xlu0 %3473
        %3475 = vrot.lane.b32.xlu0 %v3166, 110
        %v3476 = vpop.permute.xlu0 %3475
        %3477 = vrot.lane.b32.xlu0 %v3158, 110
        %v3478 = vpop.permute.xlu0 %3477
        %3479 = vrot.lane.b32.xlu0 %v3161, 110
        %v3480 = vpop.permute.xlu0 %3479
        %3481 = vrot.lane.b32.xlu0 %v3164, 110
        %v3482 = vpop.permute.xlu0 %3481
        %3483 = vrot.lane.b32.xlu0 %v3167, 110
        %v3484 = vpop.permute.xlu0 %3483
        %3485 = vrot.lane.b32.xlu0 %v3159, 110
        %v3486 = vpop.permute.xlu0 %3485
        %3487 = vrot.lane.b32.xlu0 %v3162, 110
        %v3488 = vpop.permute.xlu0 %3487
        %3489 = vrot.lane.b32.xlu0 %v3165, 110
        %v3490 = vpop.permute.xlu0 %3489
        %3491 = vrot.lane.b32.xlu0 %v3168, 110
        %v3492 = vpop.permute.xlu0 %3491
        %v3493 = vsel %vm634, %v3478, %v3486
        %v3494 = vsel %vm634, %v3480, %v3488
        %v3495 = vsel %vm634, %v3482, %v3490
        %v3496 = vsel %vm634, %v3484, %v3492
        %v3497 = vsel %vm634, %v3470, %v3478
        %v3498 = vsel %vm634, %v3472, %v3480
        %v3499 = vsel %vm634, %v3474, %v3482
        %v3500 = vsel %vm634, %v3476, %v3484
        %v3501 = vsel %vm634, %v3486, %v3470
        %v3502 = vsel %vm634, %v3488, %v3472
        %v3503 = vsel %vm634, %v3490, %v3474
        %v3504 = vsel %vm634, %v3492, %v3476
        %v3505 = vpack.c.bf16 %v3498, %v3497
        %v3506 = vpack.c.bf16 %v3494, %v3493
        %v3507 = vpack.c.bf16 %v3502, %v3501
        %v3508 = vpack.c.bf16 %v3500, %v3499
        %v3509 = vpack.c.bf16 %v3496, %v3495
        %v3510 = vpack.c.bf16 %v3504, %v3503
        %3511 = vst [vmem:[#allocation2 + $0x150] sm:$0xff] %v3505
        %3512 = vst [vmem:[#allocation2 + $0x158] sm:$0xff] %v3506
        %3513 = vst [vmem:[#allocation2 + $0x160] sm:$0xff] %v3507
        %3514 = vst [vmem:[#allocation2 + $0x168] sm:$0xff] %v3508
        %3515 = vst [vmem:[#allocation2 + $0x170] sm:$0xff] %v3509
        %3516 = vst [vmem:[#allocation2 + $0x178] sm:$0xff] %v3510
        %3517 = vrot.lane.b32.xlu0 %v3157, 109
        %v3518 = vpop.permute.xlu0 %3517
        %3519 = vrot.lane.b32.xlu0 %v3160, 109
        %v3520 = vpop.permute.xlu0 %3519
        %3521 = vrot.lane.b32.xlu0 %v3163, 109
        %v3522 = vpop.permute.xlu0 %3521
        %3523 = vrot.lane.b32.xlu0 %v3166, 109
        %v3524 = vpop.permute.xlu0 %3523
        %3525 = vrot.lane.b32.xlu0 %v3158, 109
        %v3526 = vpop.permute.xlu0 %3525
        %3527 = vrot.lane.b32.xlu0 %v3161, 109
        %v3528 = vpop.permute.xlu0 %3527
        %3529 = vrot.lane.b32.xlu0 %v3164, 109
        %v3530 = vpop.permute.xlu0 %3529
        %3531 = vrot.lane.b32.xlu0 %v3167, 109
        %v3532 = vpop.permute.xlu0 %3531
        %3533 = vrot.lane.b32.xlu0 %v3159, 109
        %v3534 = vpop.permute.xlu0 %3533
        %3535 = vrot.lane.b32.xlu0 %v3162, 109
        %v3536 = vpop.permute.xlu0 %3535
        %3537 = vrot.lane.b32.xlu0 %v3165, 109
        %v3538 = vpop.permute.xlu0 %3537
        %3539 = vrot.lane.b32.xlu0 %v3168, 109
        %v3540 = vpop.permute.xlu0 %3539
        %v3541 = vsel %vm659, %v3526, %v3534
        %v3542 = vsel %vm659, %v3528, %v3536
        %v3543 = vsel %vm659, %v3530, %v3538
        %v3544 = vsel %vm659, %v3532, %v3540
        %v3545 = vsel %vm659, %v3518, %v3526
        %v3546 = vsel %vm659, %v3520, %v3528
        %v3547 = vsel %vm659, %v3522, %v3530
        %v3548 = vsel %vm659, %v3524, %v3532
        %v3549 = vsel %vm659, %v3534, %v3518
        %v3550 = vsel %vm659, %v3536, %v3520
        %v3551 = vsel %vm659, %v3538, %v3522
        %v3552 = vsel %vm659, %v3540, %v3524
        %v3553 = vpack.c.bf16 %v3546, %v3545
        %v3554 = vpack.c.bf16 %v3542, %v3541
        %v3555 = vpack.c.bf16 %v3550, %v3549
        %v3556 = vpack.c.bf16 %v3548, %v3547
        %v3557 = vpack.c.bf16 %v3544, %v3543
        %v3558 = vpack.c.bf16 %v3552, %v3551
        %3559 = vst [vmem:[#allocation2 + $0x180] sm:$0xff] %v3553
        %3560 = vst [vmem:[#allocation2 + $0x188] sm:$0xff] %v3554
        %3561 = vst [vmem:[#allocation2 + $0x190] sm:$0xff] %v3555
        %3562 = vst [vmem:[#allocation2 + $0x198] sm:$0xff] %v3556
        %3563 = vst [vmem:[#allocation2 + $0x1a0] sm:$0xff] %v3557
        %3564 = vst [vmem:[#allocation2 + $0x1a8] sm:$0xff] %v3558
        %v3565 = vld [vmem:[%s10] sm:$0x7]
        %v3566 = vld [vmem:[#allocation2] sm:$0xff]
        %v3567 = vld [vmem:[#allocation2 + $0x8] sm:$0xff]
        %v3568 = vld [vmem:[#allocation2 + $0x10] sm:$0xff]
        %v3569 = vld [vmem:[#allocation2 + $0x18] sm:$0xff]
        %v3570 = vld [vmem:[#allocation2 + $0x20] sm:$0xff]
        %v3571 = vld [vmem:[#allocation2 + $0x28] sm:$0xff]
        %v3572 = vld [vmem:[#allocation2 + $0x30] sm:$0xff]
        %v3573 = vld [vmem:[#allocation2 + $0x38] sm:$0xff]
        %v3574 = vld [vmem:[#allocation2 + $0x40] sm:$0xff]
        %v3575 = vld [vmem:[#allocation2 + $0x48] sm:$0xff]
        %v3576 = vld [vmem:[#allocation2 + $0x50] sm:$0xff]
        %v3577 = vld [vmem:[#allocation2 + $0x58] sm:$0xff]
        %v3578 = vld [vmem:[#allocation2 + $0x60] sm:$0xff]
        %v3579 = vld [vmem:[#allocation2 + $0x68] sm:$0xff]
        %v3580 = vld [vmem:[#allocation2 + $0x70] sm:$0xff]
        %v3581 = vld [vmem:[#allocation2 + $0x78] sm:$0xff]
        %v3582 = vld [vmem:[#allocation2 + $0x80] sm:$0xff]
        %v3583 = vld [vmem:[#allocation2 + $0x88] sm:$0xff]
        %v3584 = vld [vmem:[#allocation2 + $0x90] sm:$0xff]
        %v3585 = vld [vmem:[#allocation2 + $0x98] sm:$0xff]
        %v3586 = vld [vmem:[#allocation2 + $0xa0] sm:$0xff]
        %v3587 = vld [vmem:[#allocation2 + $0xa8] sm:$0xff]
        %v3588 = vld [vmem:[#allocation2 + $0xb0] sm:$0xff]
        %v3589 = vld [vmem:[#allocation2 + $0xb8] sm:$0xff]
        %v3590 = vld [vmem:[#allocation2 + $0xc0] sm:$0xff]
        %v3591 = vld [vmem:[#allocation2 + $0xc8] sm:$0xff]
        %v3592 = vld [vmem:[#allocation2 + $0xd0] sm:$0xff]
        %v3593 = vld [vmem:[#allocation2 + $0xd8] sm:$0xff]
        %v3594 = vld [vmem:[#allocation2 + $0xe0] sm:$0xff]
        %v3595 = vld [vmem:[#allocation2 + $0xe8] sm:$0xff]
        %v3596 = vld [vmem:[#allocation2 + $0xf0] sm:$0xff]
        %v3597 = vld [vmem:[#allocation2 + $0xf8] sm:$0xff]
        %v3598 = vld [vmem:[#allocation2 + $0x100] sm:$0xff]
        %v3599 = vld [vmem:[#allocation2 + $0x108] sm:$0xff]
        %v3600 = vld [vmem:[#allocation2 + $0x110] sm:$0xff]
        %v3601 = vld [vmem:[#allocation2 + $0x118] sm:$0xff]
        %v3602 = vld [vmem:[#allocation2 + $0x120] sm:$0xff]
        %v3603 = vld [vmem:[#allocation2 + $0x128] sm:$0xff]
        %v3604 = vld [vmem:[#allocation2 + $0x130] sm:$0xff]
        %v3605 = vld [vmem:[#allocation2 + $0x138] sm:$0xff]
        %v3606 = vld [vmem:[#allocation2 + $0x140] sm:$0xff]
        %v3607 = vld [vmem:[#allocation2 + $0x148] sm:$0xff]
        %v3608 = vld [vmem:[#allocation2 + $0x150] sm:$0xff]
        %v3609 = vld [vmem:[#allocation2 + $0x158] sm:$0xff]
        %v3610 = vld [vmem:[#allocation2 + $0x160] sm:$0xff]
        %v3611 = vld [vmem:[#allocation2 + $0x168] sm:$0xff]
        %v3612 = vld [vmem:[#allocation2 + $0x170] sm:$0xff]
        %v3613 = vld [vmem:[#allocation2 + $0x178] sm:$0xff]
        %v3614 = vld [vmem:[#allocation2 + $0x180] sm:$0xff]
        %v3615 = vld [vmem:[#allocation2 + $0x188] sm:$0xff]
        %v3616 = vld [vmem:[#allocation2 + $0x190] sm:$0xff]
        %v3617 = vld [vmem:[#allocation2 + $0x198] sm:$0xff]
        %v3618 = vld [vmem:[#allocation2 + $0x1a0] sm:$0xff]
        %v3619 = vld [vmem:[#allocation2 + $0x1a8] sm:$0xff]
        %v3620 = vld [vmem:[%s11] sm:$0x3]
        %3622 = vset.pattern.permute.xlu0 0
        %3623 = vperm.xlu0 %3622, %v3620
        %v3624 = vpop.permute.xlu0 %3623
        %v3628 = vunpack.c.l.s4 1966171168
        %v3629 = vunpack.c.0.s8 %v3628
        %v3630 = vlaneseq
        %v3631 = vshrl.u32 %v3630, 7
        %v3632 = vsub.s32 %v3629, %v3631
        %v3633 = vrot.slane %v3565, %v3632
        %v3634 = vcombine.high %v3633, %v3633
        %v3636 = vunpack.c.l.s4 1966171168
        %v3637 = vunpack.c.0.s8 %v3636
        %v3638 = vlaneseq
        %v3639 = vshrl.u32 %v3638, 7
        %v3640 = vsub.s32 %v3637, %v3639
        %v3641 = vrot.slane %v3633, %v3640
        %v3643 = vunpack.c.l.s4 1966171168
        %v3644 = vunpack.c.0.s8 %v3643
        %v3645 = vlaneseq
        %v3646 = vshrl.u32 %v3645, 7
        %v3647 = vsub.s32 %v3644, %v3646
        %v3648 = vrot.slane %v3634, %v3647
        %v3649 = vcombine.high %v3641, %v3641
        %v3653 = vsel %vm1406, %v3649, 0
        %3655 = vmatprep.subr.bf16.mxu0 %v3567
        %3656 = vmatpush1.bf16.msra.mxu0 %v3566
        %3657 = vmatprep.subr.bf16.mxu0 %v3570
        %3658 = vmatpush1.bf16.msra.mxu0 %v3569
        %3659 = vmatprep.subr.bf16.mxu0 %v3573
        %3660 = vmatpush1.bf16.msra.mxu0 %v3572
        %3661 = vmatprep.subr.bf16.mxu0 %v3576
        %3662 = vmatpush1.bf16.msra.mxu0 %v3575
        %3663 = vmatprep.subr.bf16.mxu0 %v3579
        %3664 = vmatpush1.bf16.msra.mxu0 %v3578
        %3665 = vmatprep.subr.bf16.mxu0 %v3582
        %3666 = vmatpush1.bf16.msra.mxu0 %v3581
        %3667 = vmatprep.subr.bf16.mxu0 %v3585
        %3668 = vmatpush1.bf16.msra.mxu0 %v3584
        %3669 = vmatprep.subr.bf16.mxu0 %v3588
        %3670 = vmatpush1.bf16.msra.mxu0 %v3587
        %3671 = vmatprep.subr.bf16.mxu0 %v3591
        %3672 = vmatpush1.bf16.msra.mxu0 %v3590
        %3673 = vmatprep.subr.bf16.mxu0 %v3594
        %3674 = vmatpush1.bf16.msra.mxu0 %v3593
        %3675 = vmatprep.subr.bf16.mxu0 %v3597
        %3676 = vmatpush1.bf16.msra.mxu0 %v3596
        %3677 = vmatprep.subr.bf16.mxu0 %v3600
        %3678 = vmatpush1.bf16.msra.mxu0 %v3599
        %3679 = vmatprep.subr.bf16.mxu0 %v3603
        %3680 = vmatpush1.bf16.msra.mxu0 %v3602
        %3681 = vmatprep.subr.bf16.mxu0 %v3606
        %3682 = vmatpush1.bf16.msra.mxu0 %v3605
        %3683 = vmatprep.subr.bf16.mxu0 %v3609
        %3684 = vmatpush1.bf16.msra.mxu0 %v3608
        %3685 = vmatprep.subr.bf16.mxu0 %v3612
        %3686 = vmatpush1.bf16.msra.mxu0 %v3611
        %3687 = vmatprep.mubr.bf16.mxu0 %v3648
        %3688 = vmatmul.mubr.bf16.gmra.mrb[0].mxu0 %v3641
        %v3689 = vpop.f32.mrb[0].mxu0
        %v3690 = vadd.f32 %v3624, %v3689
        %v3691 = vpop.f32.mrb[0].mxu0
        %v3692 = vadd.f32 %v3624, %v3691
        %v3693 = vpop.f32.mrb[0].mxu0
        %v3694 = vpop.f32.mrb[0].mxu0
        %3695 = vdwg.mxu0
        %3696 = vmatprep.subr.bf16.mxu0 %v3615
        %3697 = vmatpush1.bf16.msra.mxu0 %v3614
        %3698 = vmatprep.subr.bf16.mxu0 %v3618
        %3699 = vmatpush1.bf16.msra.mxu0 %v3617
        %3700 = vmatprep.subr.bf16.mxu0 0
        %3701 = vmatpush1.bf16.msra.mxu0 0
        %3702 = vmatprep.subr.bf16.mxu0 0
        %3703 = vmatpush1.bf16.msra.mxu0 0
        %3704 = vmatprep.subr.bf16.mxu0 0
        %3705 = vmatpush1.bf16.msra.mxu0 0
        %3706 = vmatprep.subr.bf16.mxu0 0
        %3707 = vmatpush1.bf16.msra.mxu0 0
        %3708 = vmatprep.subr.bf16.mxu0 0
        %3709 = vmatpush1.bf16.msra.mxu0 0
        %3710 = vmatprep.subr.bf16.mxu0 0
        %3711 = vmatpush1.bf16.msra.mxu0 0
        %3712 = vmatprep.subr.bf16.mxu0 0
        %3713 = vmatpush1.bf16.msra.mxu0 0
        %3714 = vmatprep.subr.bf16.mxu0 0
        %3715 = vmatpush1.bf16.msra.mxu0 0
        %3716 = vmatprep.subr.bf16.mxu0 0
        %3717 = vmatpush1.bf16.msra.mxu0 0
        %3718 = vmatprep.subr.bf16.mxu0 0
        %3719 = vmatpush1.bf16.msra.mxu0 0
        %3720 = vmatprep.subr.bf16.mxu0 0
        %3721 = vmatpush1.bf16.msra.mxu0 0
        %3722 = vmatprep.subr.bf16.mxu0 0
        %3723 = vmatpush1.bf16.msra.mxu0 0
        %3724 = vmatprep.subr.bf16.mxu0 0
        %3725 = vmatpush1.bf16.msra.mxu0 0
        %3726 = vmatprep.subr.bf16.mxu0 0
        %3727 = vmatpush1.bf16.msra.mxu0 0
        %3728 = vmatprep.mubr.bf16.mxu0 0
        %3729 = vmatmul.mubr.bf16.gmra.mrb[0].mxu0 %v3653
        %v3730 = vpop.f32.mrb[0].mxu0
        %v3731 = vadd.f32 %v3690, %v3730
        %v3732 = vpop.f32.mrb[0].mxu0
        %v3733 = vadd.f32 %v3692, %v3732
        %v3734 = vpop.f32.mrb[0].mxu0
        %v3735 = vpop.f32.mrb[0].mxu0
        %3736 = vdwg.mxu0
        %3737 = vmatprep.subr.bf16.mxu0 0
        %3738 = vmatpush1.bf16.msra.mxu0 %v3568
        %3739 = vmatprep.subr.bf16.mxu0 0
        %3740 = vmatpush1.bf16.msra.mxu0 %v3571
        %3741 = vmatprep.subr.bf16.mxu0 0
        %3742 = vmatpush1.bf16.msra.mxu0 %v3574
        %3743 = vmatprep.subr.bf16.mxu0 0
        %3744 = vmatpush1.bf16.msra.mxu0 %v3577
        %3745 = vmatprep.subr.bf16.mxu0 0
        %3746 = vmatpush1.bf16.msra.mxu0 %v3580
        %3747 = vmatprep.subr.bf16.mxu0 0
        %3748 = vmatpush1.bf16.msra.mxu0 %v3583
        %3749 = vmatprep.subr.bf16.mxu0 0
        %3750 = vmatpush1.bf16.msra.mxu0 %v3586
        %3751 = vmatprep.subr.bf16.mxu0 0
        %3752 = vmatpush1.bf16.msra.mxu0 %v3589
        %3753 = vmatprep.subr.bf16.mxu0 0
        %3754 = vmatpush1.bf16.msra.mxu0 %v3592
        %3755 = vmatprep.subr.bf16.mxu0 0
        %3756 = vmatpush1.bf16.msra.mxu0 %v3595
        %3757 = vmatprep.subr.bf16.mxu0 0
        %3758 = vmatpush1.bf16.msra.mxu0 %v3598
        %3759 = vmatprep.subr.bf16.mxu0 0
        %3760 = vmatpush1.bf16.msra.mxu0 %v3601
        %3761 = vmatprep.subr.bf16.mxu0 0
        %3762 = vmatpush1.bf16.msra.mxu0 %v3604
        %3763 = vmatprep.subr.bf16.mxu0 0
        %3764 = vmatpush1.bf16.msra.mxu0 %v3607
        %3765 = vmatprep.subr.bf16.mxu0 0
        %3766 = vmatpush1.bf16.msra.mxu0 %v3610
        %3767 = vmatprep.subr.bf16.mxu0 0
        %3768 = vmatpush1.bf16.msra.mxu0 %v3613
        %3769 = vmatprep.mubr.bf16.mxu0 %v3648
        %3770 = vmatmul.mubr.bf16.gmra.mrb[0].mxu0 %v3641
        %v3771 = vpop.f32.mrb[0].mxu0
        %v3772 = vadd.f32 %v3624, %v3771
        %v3773 = vpop.f32.mrb[0].mxu0
        %v3774 = vpop.f32.mrb[0].mxu0
        %v3775 = vpop.f32.mrb[0].mxu0
        %3776 = vdwg.mxu0
        %3777 = vmatprep.subr.bf16.mxu0 0
        %3778 = vmatpush1.bf16.msra.mxu0 %v3616
        %3779 = vmatprep.subr.bf16.mxu0 0
        %3780 = vmatpush1.bf16.msra.mxu0 %v3619
        %3781 = vmatprep.subr.bf16.mxu0 0
        %3782 = vmatpush1.bf16.msra.mxu0 0
        %3783 = vmatprep.subr.bf16.mxu0 0
        %3784 = vmatpush1.bf16.msra.mxu0 0
        %3785 = vmatprep.subr.bf16.mxu0 0
        %3786 = vmatpush1.bf16.msra.mxu0 0
        %3787 = vmatprep.subr.bf16.mxu0 0
        %3788 = vmatpush1.bf16.msra.mxu0 0
        %3789 = vmatprep.subr.bf16.mxu0 0
        %3790 = vmatpush1.bf16.msra.mxu0 0
        %3791 = vmatprep.subr.bf16.mxu0 0
        %3792 = vmatpush1.bf16.msra.mxu0 0
        %3793 = vmatprep.subr.bf16.mxu0 0
        %3794 = vmatpush1.bf16.msra.mxu0 0
        %3795 = vmatprep.subr.bf16.mxu0 0
        %3796 = vmatpush1.bf16.msra.mxu0 0
        %3797 = vmatprep.subr.bf16.mxu0 0
        %3798 = vmatpush1.bf16.msra.mxu0 0
        %3799 = vmatprep.subr.bf16.mxu0 0
        %3800 = vmatpush1.bf16.msra.mxu0 0
        %3801 = vmatprep.subr.bf16.mxu0 0
        %3802 = vmatpush1.bf16.msra.mxu0 0
        %3803 = vmatprep.subr.bf16.mxu0 0
        %3804 = vmatpush1.bf16.msra.mxu0 0
        %3805 = vmatprep.subr.bf16.mxu0 0
        %3806 = vmatpush1.bf16.msra.mxu0 0
        %3807 = vmatprep.subr.bf16.mxu0 0
        %3808 = vmatpush1.bf16.msra.mxu0 0
        %3809 = vmatprep.mubr.bf16.mxu0 0
        %3810 = vmatmul.mubr.bf16.gmra.mrb[0].mxu0 %v3653
        %v3811 = vpop.f32.mrb[0].mxu0
        %v3812 = vadd.f32 %v3772, %v3811
        %v3813 = vpop.f32.mrb[0].mxu0
        %v3814 = vpop.f32.mrb[0].mxu0
        %v3815 = vpop.f32.mrb[0].mxu0
        %3816 = vdwg.mxu0
        %v3820 = vcombine.low %v3731, %v3733
        %v3822 = vunpack.c.l.s4 1983009808
        %v3823 = vunpack.c.0.s8 %v3822
        %v3824 = vlaneseq
        %v3825 = vshrl.u32 %v3824, 7
        %v3826 = vsub.s32 %v3823, %v3825
        %v3827 = vrot.slane %v3820, %v3826
        %v3829 = vunpack.c.l.s4 1983009808
        %v3830 = vunpack.c.0.s8 %v3829
        %v3831 = vlaneseq
        %v3832 = vshrl.u32 %v3831, 7
        %v3833 = vsub.s32 %v3830, %v3832
        %v3834 = vrot.slane %v3812, %v3833
        %v3835 = vcombine.low %v3827, %v3834
        %3837 = vst [vmem:[%s450] sm:$0x3f] %v3835
        %s3838 = sand.u32 %s293, 1
        %s3839 = scalar_lea.sflag [#allocation5], %s3838
        %s3840 = sand.u32 %s293, 1
        %s3841 = smul.addr %s3840, 6
        %s3842 = scalar_lea.vmem [#allocation9], %s3841
        // Predicated region
        $region81: #{tpu_custom_call.1} parent=67 // pred_check
          %p3843 = pneg %p303
        $region82: #{tpu_custom_call.1} parent=67 // pred_check_branch
          %3845 = sbr.rel (%p3843) target = $region84
        $region83: #{tpu_custom_call.1} parent=67 // pred_region
          %s3847 = ssub.s32 96, 96
          %3848 = vsyncadd %s3839, %s3847
          %s3849 = smul.addr %s28, 3
          %s3850 = smul.addr %s3849, 32
          %s3851 = scalar_lea.hbm %s12, %s3850
          %s3853 = sshll.u32 %s3842, 4
          %s3854 = int_to_ptr.vmem [resolvable:$true] %s3853
          %3856 = dma.vmem_to_hbm [thread:$0]  %s3854, 96, %s3851, %s3839
        $region84: #{tpu_custom_call.1} parent=67 // pred_fallthru
          _
      $region68: #{tpu_custom_call.1} parent=5 // pred_fallthru
        _
      %p3857 = scmp.le.s32.totalorder 2, %s23
      // Predicated region
      $region85: #{tpu_custom_call.1} parent=5 // pred_check
        %p3858 = pneg %p3857
      $region86: #{tpu_custom_call.1} parent=5 // pred_check_branch
        %3860 = sbr.rel (%p3858) target = $region88
      $region87: #{tpu_custom_call.1} parent=5 // pred_region
        %s3861 = ssub.s32 %s23, 2
        // Predicated region
        $region89: #{tpu_custom_call.1} parent=87 // pred_check
          %p3862 = pneg %p309
        $region90: #{tpu_custom_call.1} parent=87 // pred_check_branch
          %3864 = sbr.rel (%p3862) target = $region92
        $region91: #{tpu_custom_call.1} parent=87 // pred_region
          %s3865 = sand.u32 %s294, 1
          %s3866 = scalar_lea.sflag [#allocation5], %s3865
          %s3867 = sand.u32 %s294, 1
          %s3868 = smul.addr %s3867, 6
          %s3869 = scalar_lea.vmem [#allocation9], %s3868
          %3870 = dma.done %s3866, 96
        $region92: #{tpu_custom_call.1} parent=87 // pred_fallthru
          _
      $region88: #{tpu_custom_call.1} parent=5 // pred_fallthru
        _
    $region6: #{tpu_custom_call.1} parent=1 // loop_footer
      %s27 = sadd.s32 1, %s23
    $region7: #{tpu_custom_call.1} parent=1 // loop_footer_branch
      %22 = sbr.rel target = $region3
    $region8: #{tpu_custom_call.1} parent=1 // loop_exit
      _
    %3871 = vsyncpa [#allocation4], 1
    %s3872 = scalar_lea.sflag [#allocation4], 1
    %3873 = vsyncpa %s3872, 1
    %3874 = vsyncpa [#allocation7], 1
    %3875 = vsyncpa [#allocation5], 1
    %s3876 = scalar_lea.sflag [#allocation5], 1
    %3877 = vsyncpa %s3876, 1

</llo_original>
